<compile_context>
chip_gen: v7x
topology: tpu7x:2x2x1
jax: 0.10.0
libtpu: 0.0.40
codegen_flags: <defaults>
</compile_context>

<pallas_src>
import math
import functools

import jax
import jax.numpy as jnp
from jax.experimental import pallas as pl
from jax.experimental.pallas import tpu as pltpu


_NEG_INF = -1e30      # large finite negative (robust to fully-masked rows)
_LN_EPS = 1e-6


# ----------------------------- in-kernel helpers -----------------------------

def _mm(a, b, cdt):
    """a @ b with operands cast to `cdt` and f32 accumulation on the MXU."""
    return jnp.dot(a.astype(cdt), b.astype(cdt), preferred_element_type=jnp.float32)


def _mm_t(a, b, cdt):
    """a @ b.T (contract last dims of both) with f32 accumulation."""
    return jax.lax.dot_general(
        a.astype(cdt), b.astype(cdt),
        dimension_numbers=(((1,), (1,)), ((), ())),
        preferred_element_type=jnp.float32)


def _layer_norm_f32(x, g, b, eps):
    mean = jnp.mean(x, axis=-1, keepdims=True)
    var = jnp.mean(jnp.square(x - mean), axis=-1, keepdims=True)
    return (x - mean) * jax.lax.rsqrt(var + eps) * g + b


def _softmax_masked(s, mask):
    s = jnp.where(mask, _NEG_INF, s)
    mx = jnp.max(s, axis=-1, keepdims=True)
    p = jnp.exp(s - mx)
    denom = jnp.sum(p, axis=-1, keepdims=True)
    return p * pl.reciprocal(denom, approx=True)   # EUP slot, otherwise idle


# ----------------------------- spec helpers -----------------------------

def _const_spec(shape):
    n = len(shape)
    return pl.BlockSpec(shape, lambda *_: (0,) * n)


def _row_tile(m, target=256):
    """Largest multiple-of-8 divisor of m that is <= min(target, m // 2) so the
    row grid has >= 2 parallel steps (megacore); falls back to full extent."""
    cap = min(target, m // 2) if m >= 16 else m
    best = None
    t = 8
    while t <= cap:
        if m % t == 0:
            best = t
        t += 8
    return best if best is not None else m


def _compiler_params():
    return pltpu.CompilerParams(
        dimension_semantics=("parallel",),
        vmem_limit_bytes=64 * 1024 * 1024)


# ----------------------------- fused kernels -----------------------------

def _self_attn_sublayer_kernel(y_ref, g_ref, b_ref,
                               wq_ref, bq_ref, wk_ref, bk_ref, wv_ref, bv_ref,
                               wo_ref, bo_ref, mask_ref, o_ref,
                               *, num_heads, eps, cdt):
    """One grid step = one batch element: y + W_o·Attn(LN(y), LN(y), LN(y))."""
    y = y_ref[0].astype(jnp.float32)                       # (T, D)
    xn = _layer_norm_f32(y, g_ref[...].astype(jnp.float32),
                         b_ref[...].astype(jnp.float32), eps)
    mask = mask_ref[0] != 0                                # (T, T) bool
    dk = wq_ref.shape[-1]
    scale = 1.0 / math.sqrt(dk)
    acc = jnp.zeros(y.shape, jnp.float32)
    for h in range(num_heads):                             # static unroll over heads
        q = _mm(xn, wq_ref[h], cdt) + bq_ref[h]            # (T, dk)
        k = _mm(xn, wk_ref[h], cdt) + bk_ref[h]
        v = _mm(xn, wv_ref[h], cdt) + bv_ref[h]
        p = _softmax_masked(_mm_t(q, k, cdt) * scale, mask)
        head = _mm(p, v, cdt)                              # (T, dk)
        acc = acc + _mm(head, wo_ref[h], cdt)              # per-head slice of out-proj
    o_ref[0] = (y + acc + bo_ref[...].astype(jnp.float32)).astype(o_ref.dtype)


def _cross_attn_sublayer_kernel(y_ref, mem_ref, g_ref, b_ref,
                                wq_ref, bq_ref, wk_ref, bk_ref, wv_ref, bv_ref,
                                wo_ref, bo_ref, mask_ref, o_ref,
                                *, num_heads, eps, cdt):
    """One grid step = one batch element: y + W_o·Attn(LN(y), mem, mem)."""
    y = y_ref[0].astype(jnp.float32)                       # (T, D)
    mem = mem_ref[0].astype(jnp.float32)                   # (S, D)
    xn = _layer_norm_f32(y, g_ref[...].astype(jnp.float32),
                         b_ref[...].astype(jnp.float32), eps)
    mask = mask_ref[0] != 0                                # (T, S) bool
    dk = wq_ref.shape[-1]
    scale = 1.0 / math.sqrt(dk)
    acc = jnp.zeros(y.shape, jnp.float32)
    for h in range(num_heads):
        q = _mm(xn, wq_ref[h], cdt) + bq_ref[h]            # (T, dk)
        k = _mm(mem, wk_ref[h], cdt) + bk_ref[h]           # (S, dk)
        v = _mm(mem, wv_ref[h], cdt) + bv_ref[h]
        p = _softmax_masked(_mm_t(q, k, cdt) * scale, mask)
        head = _mm(p, v, cdt)
        acc = acc + _mm(head, wo_ref[h], cdt)
    o_ref[0] = (y + acc + bo_ref[...].astype(jnp.float32)).astype(o_ref.dtype)


def _ffn_sublayer_kernel(y_ref, g_ref, b_ref, w1_ref, b1_ref, w2_ref, b2_ref,
                         o_ref, *, eps, cdt):
    """One grid step = one tile of rows: y + W2·relu(W1·LN(y) + b1) + b2."""
    y = y_ref[...].astype(jnp.float32)                     # (tm, D)
    xn = _layer_norm_f32(y, g_ref[...].astype(jnp.float32),
                         b_ref[...].astype(jnp.float32), eps)
    h = jnp.maximum(_mm(xn, w1_ref[...], cdt) + b1_ref[...], 0.0)
    out = y + _mm(h, w2_ref[...], cdt) + b2_ref[...]
    o_ref[...] = out.astype(o_ref.dtype)


def _generator_kernel(y_ref, g_ref, b_ref, w_ref, bv_ref, o_ref,
                      *, eps, inv_temp, cdt):
    """One grid step = one tile of rows: log_softmax((LN(y)·W + b) / T)."""
    y = y_ref[...].astype(jnp.float32)                     # (tm, D)
    xn = _layer_norm_f32(y, g_ref[...].astype(jnp.float32),
                         b_ref[...].astype(jnp.float32), eps)
    logits = (_mm(xn, w_ref[...], cdt) + bv_ref[...]) * inv_temp
    mx = jnp.max(logits, axis=-1, keepdims=True)
    shifted = logits - mx
    lse = jnp.log(jnp.sum(jnp.exp(shifted), axis=-1, keepdims=True))
    o_ref[...] = (shifted - lse).astype(o_ref.dtype)


# ----------------------------- sublayer wrappers -----------------------------

def mha_sublayer(y, kv, mask, ln, p, num_heads, *, eps=_LN_EPS, cdt=jnp.float32):
    """Fused sublayer: y + W_o·Attn(LN(y)[, kv]).  kv=None -> self-attention."""
    B, T, D = y.shape
    H = num_heads
    dk = D // H

    def head_w(w):            # (D, D) -> (H, D, dk): per-head column blocks
        return w.reshape(D, H, dk).transpose(1, 0, 2)

    wq, wk, wv = head_w(p["wq"]), head_w(p["wk"]), head_w(p["wv"])
    bq = p["bq"].reshape(H, 1, dk)
    bk = p["bk"].reshape(H, 1, dk)
    bv = p["bv"].reshape(H, 1, dk)
    wo = p["wo"].reshape(H, dk, D)          # per-head row blocks of the out-proj
    bo = p["bo"].reshape(1, D)
    gamma = ln["g"].reshape(1, D)
    beta = ln["b"].reshape(1, D)

    Tk = T if kv is None else kv.shape[1]
    y_spec = pl.BlockSpec((1, T, D), lambda b: (b, 0, 0))
    mask_spec = pl.BlockSpec((1, T, Tk), lambda b: (b, 0, 0))
    weight_specs = [
        _const_spec((1, D)), _const_spec((1, D)),            # gamma, beta
        _const_spec((H, D, dk)), _const_spec((H, 1, dk)),    # wq, bq
        _const_spec((H, D, dk)), _const_spec((H, 1, dk)),    # wk, bk
        _const_spec((H, D, dk)), _const_spec((H, 1, dk)),    # wv, bv
        _const_spec((H, dk, D)), _const_spec((1, D)),        # wo, bo
    ]

    if kv is None:
        kernel = functools.partial(_self_attn_sublayer_kernel,
                                   num_heads=H, eps=eps, cdt=cdt)
        in_specs = [y_spec] + weight_specs + [mask_spec]
        args = (y, gamma, beta, wq, bq, wk, bk, wv, bv, wo, bo, mask)
    else:
        kv_spec = pl.BlockSpec((1, Tk, D), lambda b: (b, 0, 0))
        kernel = functools.partial(_cross_attn_sublayer_kernel,
                                   num_heads=H, eps=eps, cdt=cdt)
        in_specs = [y_spec, kv_spec] + weight_specs + [mask_spec]
        args = (y, kv, gamma, beta, wq, bq, wk, bk, wv, bv, wo, bo, mask)

    return pl.pallas_call(
        kernel,
        out_shape=jax.ShapeDtypeStruct((B, T, D), y.dtype),
        grid=(B,),
        in_specs=in_specs,
        out_specs=pl.BlockSpec((1, T, D), lambda b: (b, 0, 0)),
        compiler_params=_compiler_params(),
    )(*args)


def ffn_sublayer(y, ln, p, *, eps=_LN_EPS, cdt=jnp.float32):
    B, T, D = y.shape
    M = B * T
    F = p["w1"].shape[1]
    y2 = y.reshape(M, D)
    tm = _row_tile(M)
    kernel = functools.partial(_ffn_sublayer_kernel, eps=eps, cdt=cdt)
    out = pl.pallas_call(
        kernel,
        out_shape=jax.ShapeDtypeStruct((M, D), y.dtype),
        grid=(M // tm,),
        in_specs=[
            pl.BlockSpec((tm, D), lambda i: (i, 0)),
            _const_spec((1, D)), _const_spec((1, D)),
            _const_spec((D, F)), _const_spec((1, F)),
            _const_spec((F, D)), _const_spec((1, D)),
        ],
        out_specs=pl.BlockSpec((tm, D), lambda i: (i, 0)),
        compiler_params=_compiler_params(),
    )(y2, ln["g"].reshape(1, D), ln["b"].reshape(1, D),
      p["w1"], p["b1"].reshape(1, F), p["w2"], p["b2"].reshape(1, D))
    return out.reshape(B, T, D)


def generator_logsoftmax(y, norm, gen, temperature, *, eps=_LN_EPS, cdt=jnp.float32):
    B, T, D = y.shape
    M = B * T
    V = gen["w"].shape[1]
    y2 = y.reshape(M, D)
    tm = _row_tile(M)
    kernel = functools.partial(_generator_kernel, eps=eps,
                               inv_temp=1.0 / float(temperature), cdt=cdt)
    out = pl.pallas_call(
        kernel,
        out_shape=jax.ShapeDtypeStruct((M, V), y.dtype),
        grid=(M // tm,),
        in_specs=[
            pl.BlockSpec((tm, D), lambda i: (i, 0)),
            _const_spec((1, D)), _const_spec((1, D)),
            _const_spec((D, V)), _const_spec((1, V)),
        ],
        out_specs=pl.BlockSpec((tm, V), lambda i: (i, 0)),
        compiler_params=_compiler_params(),
    )(y2, norm["g"].reshape(1, D), norm["b"].reshape(1, D),
      gen["w"], gen["b"].reshape(1, V))
    return out.reshape(B, T, V)


# ----------------------------- decoder forward -----------------------------

def decoder_forward(params, x, memory, src_mask, tgt_mask, temperature,
                    *, compute_dtype=jnp.float32):
    H = params["head_num"]
    B, T, D = x.shape
    S = memory.shape[1]
    assert T == tgt_mask.shape[-1]
    # Compact masks: (B, Tq, Tk) int32 — no per-head / f32 broadcast materialized.
    tgt_m = jnp.broadcast_to(tgt_mask[:, 0], (B, T, T)).astype(jnp.int32)
    src_m = jnp.broadcast_to(src_mask[:, 0], (B, T, S)).astype(jnp.int32)
    y = x
    for lp in params["layers"]:
        y = mha_sublayer(y, None, tgt_m, lp["ln"][0], lp["self"], H, cdt=compute_dtype)
        y = mha_sublayer(y, memory, src_m, lp["ln"][1], lp["src"], H, cdt=compute_dtype)
        y = ffn_sublayer(y, lp["ln"][2], lp["ffn"], cdt=compute_dtype)
    return generator_logsoftmax(y, params["norm"], params["gen"], temperature,
                                cdt=compute_dtype)


# ----------------------------- parameter init -----------------------------

def _xavier_uniform(key, fan_in, fan_out):
    limit = math.sqrt(6.0 / (fan_in + fan_out))
    return jax.random.uniform(key, (fan_in, fan_out), jnp.float32, -limit, limit)


def init_params(key, num_layers, model_dim, vocab_size, head_num):
    D = model_dim
    keys = iter(jax.random.split(key, num_layers * 10 + 1))

    def lin(fan_in, fan_out):
        return _xavier_uniform(next(keys), fan_in, fan_out), jnp.zeros((fan_out,), jnp.float32)

    def attn_params():
        wq, bq = lin(D, D); wk, bk = lin(D, D); wv, bv = lin(D, D); wo, bo = lin(D, D)
        return {"wq": wq, "bq": bq, "wk": wk, "bk": bk,
                "wv": wv, "bv": bv, "wo": wo, "bo": bo}

    layers = []
    for _ in range(num_layers):
        w1, b1 = lin(D, 4 * D)
        w2, b2 = lin(4 * D, D)
        layers.append({
            "self": attn_params(),
            "src": attn_params(),
            "ffn": {"w1": w1, "b1": b1, "w2": w2, "b2": b2},
            "ln": [{"g": jnp.ones((D,), jnp.float32), "b": jnp.zeros((D,), jnp.float32)}
                   for _ in range(3)],
        })
    gw, gb = lin(D, vocab_size)
    return {
        "layers": layers,
        "norm": {"g": jnp.ones((D,), jnp.float32), "b": jnp.zeros((D,), jnp.float32)},
        "gen": {"w": gw, "b": gb},
        "head_num": head_num,
    }


# ----------------------------- pure-JAX reference -----------------------------

def _ref_layernorm(x, g, b, eps=_LN_EPS):
    m = jnp.mean(x, -1, keepdims=True)
    v = jnp.mean((x - m) ** 2, -1, keepdims=True)
    return (x - m) * jax.lax.rsqrt(v + eps) * g + b


def _ref_mha(x_q, x_kv, mask, p, H):
    B, Tq, D = x_q.shape
    Tk = x_kv.shape[1]
    dk = D // H

    def proj(x, w, b, T):
        return (x @ w + b).reshape(B, T, H, dk).transpose(0, 2, 1, 3)

    q = proj(x_q, p["wq"], p["bq"], Tq)
    k = proj(x_kv, p["wk"], p["bk"], Tk)
    v = proj(x_kv, p["wv"], p["bv"], Tk)
    s = jnp.einsum('bhqd,bhkd->bhqk', q, k) / math.sqrt(dk)
    s = jnp.where(mask, -jnp.inf, s)
    w = jax.nn.softmax(s, -1)
    a = jnp.einsum('bhqk,bhkd->bhqd', w, v).transpose(0, 2, 1, 3).reshape(B, Tq, D)
    return a @ p["wo"] + p["bo"]


def decoder_forward_ref(params, x, memory, src_mask, tgt_mask, temperature):
    H = params["head_num"]
    y = x
    for lp in params["layers"]:
        xn = _ref_layernorm(y, lp["ln"][0]["g"], lp["ln"][0]["b"])
        y = y + _ref_mha(xn, xn, tgt_mask, lp["self"], H)
        xn = _ref_layernorm(y, lp["ln"][1]["g"], lp["ln"][1]["b"])
        y = y + _ref_mha(xn, memory, src_mask, lp["src"], H)
        xn = _ref_layernorm(y, lp["ln"][2]["g"], lp["ln"][2]["b"])
        h = jnp.maximum(xn @ lp["ffn"]["w1"] + lp["ffn"]["b1"], 0.0)
        y = y + h @ lp["ffn"]["w2"] + lp["ffn"]["b2"]
    yn = _ref_layernorm(y, params["norm"]["g"], params["norm"]["b"])
    logits = (yn @ params["gen"]["w"] + params["gen"]["b"]) / temperature
    return jax.nn.log_softmax(logits, -1)


# ----------------------------- main -----------------------------

if __name__ == "__main__":
    num_layers = 2
    model_dim = 32
    head_num = 4
    vocab_size = 50
    B, T, S = 2, 8, 10
    temperature = 2.0

    key = jax.random.PRNGKey(0)
    kp, kx, km = jax.random.split(key, 3)
    params = init_params(kp, num_layers, model_dim, vocab_size, head_num)

    x = jax.random.normal(kx, (B, T, model_dim), jnp.float32)
    memory = jax.random.normal(km, (B, S, model_dim), jnp.float32)

    # tgt_mask: causal mask, True = masked (future positions).
    causal = jnp.triu(jnp.ones((T, T), jnp.bool_), k=1)
    tgt_mask = jnp.broadcast_to(causal, (B, 1, T, T))
    # src_mask: True = padding position in memory (mask last 2 tokens of batch 1).
    src_pad = jnp.stack([jnp.zeros((S,), jnp.bool_),
                         jnp.arange(S) >= S - 2])
    src_mask = src_pad[:, None, None, :]                    # (B, 1, 1, S)

    out = decoder_forward(params, x, memory, src_mask, tgt_mask, temperature)
    out = jax.block_until_ready(out)

    ref = decoder_forward_ref(params, x, memory, src_mask, tgt_mask, temperature)
    assert out.shape == (B, T, vocab_size)
    assert bool(jnp.all(jnp.isfinite(out)))
    assert bool(jnp.allclose(out, ref, atol=1e-3, rtol=1e-3)), "mismatch vs reference"

    print("KERNEL_OK")
</pallas_src>

<mosaic_0001>
module attributes {stable_mosaic.version = 11 : i64} {
  func.func @_self_attn_sublayer_kernel(%arg0: i32, %arg1: memref<1x8x32xf32, #tpu.memory_space<vmem>>, %arg2: memref<1x32xf32, #tpu.memory_space<vmem>>, %arg3: memref<1x32xf32, #tpu.memory_space<vmem>>, %arg4: memref<4x32x8xf32, #tpu.memory_space<vmem>>, %arg5: memref<4x1x8xf32, #tpu.memory_space<vmem>>, %arg6: memref<4x32x8xf32, #tpu.memory_space<vmem>>, %arg7: memref<4x1x8xf32, #tpu.memory_space<vmem>>, %arg8: memref<4x32x8xf32, #tpu.memory_space<vmem>>, %arg9: memref<4x1x8xf32, #tpu.memory_space<vmem>>, %arg10: memref<4x8x32xf32, #tpu.memory_space<vmem>>, %arg11: memref<1x32xf32, #tpu.memory_space<vmem>>, %arg12: memref<1x8x8xi32, #tpu.memory_space<vmem>>, %arg13: memref<1x8x32xf32, #tpu.memory_space<vmem>>) attributes {dimension_semantics = [#tpu.dimension_semantics<parallel>], iteration_bounds = array<i64: 2>, scalar_prefetch = 0 : i64, scratch_operands = 0 : i64, tpu.core_type = #tpu.core_type<tc>, window_params = [{transform_indices = @transform_0, window_bounds = array<i64: 1, 8, 32>}, {pipeline_mode = #tpu.pipeline_mode<synchronous>, transform_indices = @transform_1, window_bounds = array<i64: 1, 32>}, {pipeline_mode = #tpu.pipeline_mode<synchronous>, transform_indices = @transform_2, window_bounds = array<i64: 1, 32>}, {pipeline_mode = #tpu.pipeline_mode<synchronous>, transform_indices = @transform_3, window_bounds = array<i64: 4, 32, 8>}, {pipeline_mode = #tpu.pipeline_mode<synchronous>, transform_indices = @transform_4, window_bounds = array<i64: 4, 1, 8>}, {pipeline_mode = #tpu.pipeline_mode<synchronous>, transform_indices = @transform_5, window_bounds = array<i64: 4, 32, 8>}, {pipeline_mode = #tpu.pipeline_mode<synchronous>, transform_indices = @transform_6, window_bounds = array<i64: 4, 1, 8>}, {pipeline_mode = #tpu.pipeline_mode<synchronous>, transform_indices = @transform_7, window_bounds = array<i64: 4, 32, 8>}, {pipeline_mode = #tpu.pipeline_mode<synchronous>, transform_indices = @transform_8, window_bounds = array<i64: 4, 1, 8>}, {pipeline_mode = #tpu.pipeline_mode<synchronous>, transform_indices = @transform_9, window_bounds = array<i64: 4, 8, 32>}, {pipeline_mode = #tpu.pipeline_mode<synchronous>, transform_indices = @transform_10, window_bounds = array<i64: 1, 32>}, {transform_indices = @transform_11, window_bounds = array<i64: 1, 8, 8>}, {transform_indices = @transform_12, window_bounds = array<i64: 1, 8, 32>}]} {
    %c0 = arith.constant 0 : index
    %c0_0 = arith.constant 0 : index
    %c0_1 = arith.constant 0 : index
    %0 = vector.load %arg1[%c0, %c0_0, %c0_1] : memref<1x8x32xf32, #tpu.memory_space<vmem>>, vector<1x8x32xf32>
    %1 = vector.shape_cast %0 : vector<1x8x32xf32> to vector<8x32xf32>
    %c0_2 = arith.constant 0 : index
    %c0_3 = arith.constant 0 : index
    %2 = vector.load %arg2[%c0_2, %c0_3] : memref<1x32xf32, #tpu.memory_space<vmem>>, vector<1x32xf32>
    %c0_4 = arith.constant 0 : index
    %c0_5 = arith.constant 0 : index
    %3 = vector.load %arg3[%c0_4, %c0_5] : memref<1x32xf32, #tpu.memory_space<vmem>>, vector<1x32xf32>
    %cst = arith.constant dense<0.000000e+00> : vector<8xf32>
    %4 = vector.multi_reduction <add>, %1, %cst [1] : vector<8x32xf32> to vector<8xf32>
    %5 = vector.shape_cast %4 : vector<8xf32> to vector<8x1xf32>
    %cst_6 = arith.constant 3.200000e+01 : f32
    %6 = vector.broadcast %cst_6 : f32 to vector<8x1xf32>
    %7 = arith.divf %5, %6 : vector<8x1xf32>
    %8 = vector.broadcast %7 : vector<8x1xf32> to vector<8x32xf32>
    %9 = arith.subf %1, %8 : vector<8x32xf32>
    %10 = arith.mulf %9, %9 : vector<8x32xf32>
    %cst_7 = arith.constant dense<0.000000e+00> : vector<8xf32>
    %11 = vector.multi_reduction <add>, %10, %cst_7 [1] : vector<8x32xf32> to vector<8xf32>
    %12 = vector.shape_cast %11 : vector<8xf32> to vector<8x1xf32>
    %cst_8 = arith.constant 3.200000e+01 : f32
    %13 = vector.broadcast %cst_8 : f32 to vector<8x1xf32>
    %14 = arith.divf %12, %13 : vector<8x1xf32>
    %15 = vector.broadcast %7 : vector<8x1xf32> to vector<8x32xf32>
    %16 = arith.subf %1, %15 : vector<8x32xf32>
    %cst_9 = arith.constant 9.99999997E-7 : f32
    %17 = vector.broadcast %cst_9 : f32 to vector<8x1xf32>
    %18 = arith.addf %14, %17 : vector<8x1xf32>
    %19 = math.rsqrt %18 : vector<8x1xf32>
    %20 = vector.broadcast %19 : vector<8x1xf32> to vector<8x32xf32>
    %21 = arith.mulf %16, %20 : vector<8x32xf32>
    %22 = vector.broadcast %2 : vector<1x32xf32> to vector<8x32xf32>
    %23 = arith.mulf %21, %22 : vector<8x32xf32>
    %24 = vector.broadcast %3 : vector<1x32xf32> to vector<8x32xf32>
    %25 = arith.addf %23, %24 : vector<8x32xf32>
    %c0_10 = arith.constant 0 : index
    %c0_11 = arith.constant 0 : index
    %c0_12 = arith.constant 0 : index
    %26 = vector.load %arg12[%c0_10, %c0_11, %c0_12] : memref<1x8x8xi32, #tpu.memory_space<vmem>>, vector<1x8x8xi32>
    %27 = vector.shape_cast %26 : vector<1x8x8xi32> to vector<8x8xi32>
    %c0_i32 = arith.constant 0 : i32
    %28 = vector.broadcast %c0_i32 : i32 to vector<8x8xi32>
    %29 = arith.cmpi ne, %27, %28 : vector<8x8xi32>
    %cst_13 = arith.constant 0.000000e+00 : f32
    %30 = vector.broadcast %cst_13 : f32 to vector<8x32xf32>
    %c0_14 = arith.constant 0 : index
    %c0_15 = arith.constant 0 : index
    %c0_16 = arith.constant 0 : index
    %31 = vector.load %arg4[%c0_14, %c0_15, %c0_16] : memref<4x32x8xf32, #tpu.memory_space<vmem>>, vector<1x32x8xf32>
    %32 = vector.shape_cast %31 : vector<1x32x8xf32> to vector<32x8xf32>
    %cst_17 = arith.constant dense<0.000000e+00> : vector<8x8xf32>
    %33 = tpu.matmul %25, %32, %cst_17 {dimension_numbers = #tpu.dot_dimension_numbers<[1], [0], [0], [1], [0, 0, 1, 1], [], []>} : vector<8x32xf32>, vector<32x8xf32>, vector<8x8xf32> -> vector<8x8xf32>
    %c0_18 = arith.constant 0 : index
    %c0_19 = arith.constant 0 : index
    %c0_20 = arith.constant 0 : index
    %34 = vector.load %arg5[%c0_18, %c0_19, %c0_20] : memref<4x1x8xf32, #tpu.memory_space<vmem>>, vector<1x1x8xf32>
    %35 = vector.shape_cast %34 : vector<1x1x8xf32> to vector<1x8xf32>
    %36 = vector.broadcast %35 : vector<1x8xf32> to vector<8x8xf32>
    %37 = arith.addf %33, %36 : vector<8x8xf32>
    %c0_21 = arith.constant 0 : index
    %c0_22 = arith.constant 0 : index
    %c0_23 = arith.constant 0 : index
    %38 = vector.load %arg6[%c0_21, %c0_22, %c0_23] : memref<4x32x8xf32, #tpu.memory_space<vmem>>, vector<1x32x8xf32>
    %39 = vector.shape_cast %38 : vector<1x32x8xf32> to vector<32x8xf32>
    %cst_24 = arith.constant dense<0.000000e+00> : vector<8x8xf32>
    %40 = tpu.matmul %25, %39, %cst_24 {dimension_numbers = #tpu.dot_dimension_numbers<[1], [0], [0], [1], [0, 0, 1, 1], [], []>} : vector<8x32xf32>, vector<32x8xf32>, vector<8x8xf32> -> vector<8x8xf32>
    %c0_25 = arith.constant 0 : index
    %c0_26 = arith.constant 0 : index
    %c0_27 = arith.constant 0 : index
    %41 = vector.load %arg7[%c0_25, %c0_26, %c0_27] : memref<4x1x8xf32, #tpu.memory_space<vmem>>, vector<1x1x8xf32>
    %42 = vector.shape_cast %41 : vector<1x1x8xf32> to vector<1x8xf32>
    %43 = vector.broadcast %42 : vector<1x8xf32> to vector<8x8xf32>
    %44 = arith.addf %40, %43 : vector<8x8xf32>
    %c0_28 = arith.constant 0 : index
    %c0_29 = arith.constant 0 : index
    %c0_30 = arith.constant 0 : index
    %45 = vector.load %arg8[%c0_28, %c0_29, %c0_30] : memref<4x32x8xf32, #tpu.memory_space<vmem>>, vector<1x32x8xf32>
    %46 = vector.shape_cast %45 : vector<1x32x8xf32> to vector<32x8xf32>
    %cst_31 = arith.constant dense<0.000000e+00> : vector<8x8xf32>
    %47 = tpu.matmul %25, %46, %cst_31 {dimension_numbers = #tpu.dot_dimension_numbers<[1], [0], [0], [1], [0, 0, 1, 1], [], []>} : vector<8x32xf32>, vector<32x8xf32>, vector<8x8xf32> -> vector<8x8xf32>
    %c0_32 = arith.constant 0 : index
    %c0_33 = arith.constant 0 : index
    %c0_34 = arith.constant 0 : index
    %48 = vector.load %arg9[%c0_32, %c0_33, %c0_34] : memref<4x1x8xf32, #tpu.memory_space<vmem>>, vector<1x1x8xf32>
    %49 = vector.shape_cast %48 : vector<1x1x8xf32> to vector<1x8xf32>
    %50 = vector.broadcast %49 : vector<1x8xf32> to vector<8x8xf32>
    %51 = arith.addf %47, %50 : vector<8x8xf32>
    %cst_35 = arith.constant dense<0.000000e+00> : vector<8x8xf32>
    %52 = tpu.matmul %37, %44, %cst_35 {dimension_numbers = #tpu.dot_dimension_numbers<[1], [1], [0], [0], [0, 0, 1, 0], [], []>} : vector<8x8xf32>, vector<8x8xf32>, vector<8x8xf32> -> vector<8x8xf32>
    %cst_36 = arith.constant 0.353553385 : f32
    %53 = vector.broadcast %cst_36 : f32 to vector<8x8xf32>
    %54 = arith.mulf %52, %53 : vector<8x8xf32>
    %cst_37 = arith.constant -1.000000e+30 : f32
    %55 = vector.broadcast %cst_37 : f32 to vector<8x8xf32>
    %56 = arith.select %29, %55, %54 : vector<8x8xi1>, vector<8x8xf32>
    %cst_38 = arith.constant dense<0xFF800000> : vector<8xf32>
    %57 = vector.multi_reduction <maximumf>, %56, %cst_38 [1] : vector<8x8xf32> to vector<8xf32>
    %58 = vector.shape_cast %57 : vector<8xf32> to vector<8x1xf32>
    %59 = vector.broadcast %58 : vector<8x1xf32> to vector<8x8xf32>
    %60 = arith.subf %56, %59 : vector<8x8xf32>
    %61 = math.exp %60 : vector<8x8xf32>
    %cst_39 = arith.constant dense<0.000000e+00> : vector<8xf32>
    %62 = vector.multi_reduction <add>, %61, %cst_39 [1] : vector<8x8xf32> to vector<8xf32>
    %63 = vector.shape_cast %62 : vector<8xf32> to vector<8x1xf32>
    %64 = tpu.reciprocal %63 {approx = true} : vector<8x1xf32> -> vector<8x1xf32>
    %65 = vector.broadcast %64 : vector<8x1xf32> to vector<8x8xf32>
    %66 = arith.mulf %61, %65 : vector<8x8xf32>
    %cst_40 = arith.constant dense<0.000000e+00> : vector<8x8xf32>
    %67 = tpu.matmul %66, %51, %cst_40 {dimension_numbers = #tpu.dot_dimension_numbers<[1], [0], [0], [1], [0, 0, 1, 1], [], []>} : vector<8x8xf32>, vector<8x8xf32>, vector<8x8xf32> -> vector<8x8xf32>
    %c0_41 = arith.constant 0 : index
    %c0_42 = arith.constant 0 : index
    %c0_43 = arith.constant 0 : index
    %68 = vector.load %arg10[%c0_41, %c0_42, %c0_43] : memref<4x8x32xf32, #tpu.memory_space<vmem>>, vector<1x8x32xf32>
    %69 = vector.shape_cast %68 : vector<1x8x32xf32> to vector<8x32xf32>
    %cst_44 = arith.constant dense<0.000000e+00> : vector<8x32xf32>
    %70 = tpu.matmul %67, %69, %cst_44 {dimension_numbers = #tpu.dot_dimension_numbers<[1], [0], [0], [1], [0, 0, 1, 1], [], []>} : vector<8x8xf32>, vector<8x32xf32>, vector<8x32xf32> -> vector<8x32xf32>
    %71 = arith.addf %30, %70 : vector<8x32xf32>
    %c1 = arith.constant 1 : index
    %c0_45 = arith.constant 0 : index
    %c0_46 = arith.constant 0 : index
    %72 = vector.load %arg4[%c1, %c0_45, %c0_46] : memref<4x32x8xf32, #tpu.memory_space<vmem>>, vector<1x32x8xf32>
    %73 = vector.shape_cast %72 : vector<1x32x8xf32> to vector<32x8xf32>
    %cst_47 = arith.constant dense<0.000000e+00> : vector<8x8xf32>
    %74 = tpu.matmul %25, %73, %cst_47 {dimension_numbers = #tpu.dot_dimension_numbers<[1], [0], [0], [1], [0, 0, 1, 1], [], []>} : vector<8x32xf32>, vector<32x8xf32>, vector<8x8xf32> -> vector<8x8xf32>
    %c1_48 = arith.constant 1 : index
    %c0_49 = arith.constant 0 : index
    %c0_50 = arith.constant 0 : index
    %75 = vector.load %arg5[%c1_48, %c0_49, %c0_50] : memref<4x1x8xf32, #tpu.memory_space<vmem>>, vector<1x1x8xf32>
    %76 = vector.shape_cast %75 : vector<1x1x8xf32> to vector<1x8xf32>
    %77 = vector.broadcast %76 : vector<1x8xf32> to vector<8x8xf32>
    %78 = arith.addf %74, %77 : vector<8x8xf32>
    %c1_51 = arith.constant 1 : index
    %c0_52 = arith.constant 0 : index
    %c0_53 = arith.constant 0 : index
    %79 = vector.load %arg6[%c1_51, %c0_52, %c0_53] : memref<4x32x8xf32, #tpu.memory_space<vmem>>, vector<1x32x8xf32>
    %80 = vector.shape_cast %79 : vector<1x32x8xf32> to vector<32x8xf32>
    %cst_54 = arith.constant dense<0.000000e+00> : vector<8x8xf32>
    %81 = tpu.matmul %25, %80, %cst_54 {dimension_numbers = #tpu.dot_dimension_numbers<[1], [0], [0], [1], [0, 0, 1, 1], [], []>} : vector<8x32xf32>, vector<32x8xf32>, vector<8x8xf32> -> vector<8x8xf32>
    %c1_55 = arith.constant 1 : index
    %c0_56 = arith.constant 0 : index
    %c0_57 = arith.constant 0 : index
    %82 = vector.load %arg7[%c1_55, %c0_56, %c0_57] : memref<4x1x8xf32, #tpu.memory_space<vmem>>, vector<1x1x8xf32>
    %83 = vector.shape_cast %82 : vector<1x1x8xf32> to vector<1x8xf32>
    %84 = vector.broadcast %83 : vector<1x8xf32> to vector<8x8xf32>
    %85 = arith.addf %81, %84 : vector<8x8xf32>
    %c1_58 = arith.constant 1 : index
    %c0_59 = arith.constant 0 : index
    %c0_60 = arith.constant 0 : index
    %86 = vector.load %arg8[%c1_58, %c0_59, %c0_60] : memref<4x32x8xf32, #tpu.memory_space<vmem>>, vector<1x32x8xf32>
    %87 = vector.shape_cast %86 : vector<1x32x8xf32> to vector<32x8xf32>
    %cst_61 = arith.constant dense<0.000000e+00> : vector<8x8xf32>
    %88 = tpu.matmul %25, %87, %cst_61 {dimension_numbers = #tpu.dot_dimension_numbers<[1], [0], [0], [1], [0, 0, 1, 1], [], []>} : vector<8x32xf32>, vector<32x8xf32>, vector<8x8xf32> -> vector<8x8xf32>
    %c1_62 = arith.constant 1 : index
    %c0_63 = arith.constant 0 : index
    %c0_64 = arith.constant 0 : index
    %89 = vector.load %arg9[%c1_62, %c0_63, %c0_64] : memref<4x1x8xf32, #tpu.memory_space<vmem>>, vector<1x1x8xf32>
    %90 = vector.shape_cast %89 : vector<1x1x8xf32> to vector<1x8xf32>
    %91 = vector.broadcast %90 : vector<1x8xf32> to vector<8x8xf32>
    %92 = arith.addf %88, %91 : vector<8x8xf32>
    %cst_65 = arith.constant dense<0.000000e+00> : vector<8x8xf32>
    %93 = tpu.matmul %78, %85, %cst_65 {dimension_numbers = #tpu.dot_dimension_numbers<[1], [1], [0], [0], [0, 0, 1, 0], [], []>} : vector<8x8xf32>, vector<8x8xf32>, vector<8x8xf32> -> vector<8x8xf32>
    %cst_66 = arith.constant 0.353553385 : f32
    %94 = vector.broadcast %cst_66 : f32 to vector<8x8xf32>
    %95 = arith.mulf %93, %94 : vector<8x8xf32>
    %cst_67 = arith.constant -1.000000e+30 : f32
    %96 = vector.broadcast %cst_67 : f32 to vector<8x8xf32>
    %97 = arith.select %29, %96, %95 : vector<8x8xi1>, vector<8x8xf32>
    %cst_68 = arith.constant dense<0xFF800000> : vector<8xf32>
    %98 = vector.multi_reduction <maximumf>, %97, %cst_68 [1] : vector<8x8xf32> to vector<8xf32>
    %99 = vector.shape_cast %98 : vector<8xf32> to vector<8x1xf32>
    %100 = vector.broadcast %99 : vector<8x1xf32> to vector<8x8xf32>
    %101 = arith.subf %97, %100 : vector<8x8xf32>
    %102 = math.exp %101 : vector<8x8xf32>
    %cst_69 = arith.constant dense<0.000000e+00> : vector<8xf32>
    %103 = vector.multi_reduction <add>, %102, %cst_69 [1] : vector<8x8xf32> to vector<8xf32>
    %104 = vector.shape_cast %103 : vector<8xf32> to vector<8x1xf32>
    %105 = tpu.reciprocal %104 {approx = true} : vector<8x1xf32> -> vector<8x1xf32>
    %106 = vector.broadcast %105 : vector<8x1xf32> to vector<8x8xf32>
    %107 = arith.mulf %102, %106 : vector<8x8xf32>
    %cst_70 = arith.constant dense<0.000000e+00> : vector<8x8xf32>
    %108 = tpu.matmul %107, %92, %cst_70 {dimension_numbers = #tpu.dot_dimension_numbers<[1], [0], [0], [1], [0, 0, 1, 1], [], []>} : vector<8x8xf32>, vector<8x8xf32>, vector<8x8xf32> -> vector<8x8xf32>
    %c1_71 = arith.constant 1 : index
    %c0_72 = arith.constant 0 : index
    %c0_73 = arith.constant 0 : index
    %109 = vector.load %arg10[%c1_71, %c0_72, %c0_73] : memref<4x8x32xf32, #tpu.memory_space<vmem>>, vector<1x8x32xf32>
    %110 = vector.shape_cast %109 : vector<1x8x32xf32> to vector<8x32xf32>
    %cst_74 = arith.constant dense<0.000000e+00> : vector<8x32xf32>
    %111 = tpu.matmul %108, %110, %cst_74 {dimension_numbers = #tpu.dot_dimension_numbers<[1], [0], [0], [1], [0, 0, 1, 1], [], []>} : vector<8x8xf32>, vector<8x32xf32>, vector<8x32xf32> -> vector<8x32xf32>
    %112 = arith.addf %71, %111 : vector<8x32xf32>
    %c2 = arith.constant 2 : index
    %c0_75 = arith.constant 0 : index
    %c0_76 = arith.constant 0 : index
    %113 = vector.load %arg4[%c2, %c0_75, %c0_76] : memref<4x32x8xf32, #tpu.memory_space<vmem>>, vector<1x32x8xf32>
    %114 = vector.shape_cast %113 : vector<1x32x8xf32> to vector<32x8xf32>
    %cst_77 = arith.constant dense<0.000000e+00> : vector<8x8xf32>
    %115 = tpu.matmul %25, %114, %cst_77 {dimension_numbers = #tpu.dot_dimension_numbers<[1], [0], [0], [1], [0, 0, 1, 1], [], []>} : vector<8x32xf32>, vector<32x8xf32>, vector<8x8xf32> -> vector<8x8xf32>
    %c2_78 = arith.constant 2 : index
    %c0_79 = arith.constant 0 : index
    %c0_80 = arith.constant 0 : index
    %116 = vector.load %arg5[%c2_78, %c0_79, %c0_80] : memref<4x1x8xf32, #tpu.memory_space<vmem>>, vector<1x1x8xf32>
    %117 = vector.shape_cast %116 : vector<1x1x8xf32> to vector<1x8xf32>
    %118 = vector.broadcast %117 : vector<1x8xf32> to vector<8x8xf32>
    %119 = arith.addf %115, %118 : vector<8x8xf32>
    %c2_81 = arith.constant 2 : index
    %c0_82 = arith.constant 0 : index
    %c0_83 = arith.constant 0 : index
    %120 = vector.load %arg6[%c2_81, %c0_82, %c0_83] : memref<4x32x8xf32, #tpu.memory_space<vmem>>, vector<1x32x8xf32>
    %121 = vector.shape_cast %120 : vector<1x32x8xf32> to vector<32x8xf32>
    %cst_84 = arith.constant dense<0.000000e+00> : vector<8x8xf32>
    %122 = tpu.matmul %25, %121, %cst_84 {dimension_numbers = #tpu.dot_dimension_numbers<[1], [0], [0], [1], [0, 0, 1, 1], [], []>} : vector<8x32xf32>, vector<32x8xf32>, vector<8x8xf32> -> vector<8x8xf32>
    %c2_85 = arith.constant 2 : index
    %c0_86 = arith.constant 0 : index
    %c0_87 = arith.constant 0 : index
    %123 = vector.load %arg7[%c2_85, %c0_86, %c0_87] : memref<4x1x8xf32, #tpu.memory_space<vmem>>, vector<1x1x8xf32>
    %124 = vector.shape_cast %123 : vector<1x1x8xf32> to vector<1x8xf32>
    %125 = vector.broadcast %124 : vector<1x8xf32> to vector<8x8xf32>
    %126 = arith.addf %122, %125 : vector<8x8xf32>
    %c2_88 = arith.constant 2 : index
    %c0_89 = arith.constant 0 : index
    %c0_90 = arith.constant 0 : index
    %127 = vector.load %arg8[%c2_88, %c0_89, %c0_90] : memref<4x32x8xf32, #tpu.memory_space<vmem>>, vector<1x32x8xf32>
    %128 = vector.shape_cast %127 : vector<1x32x8xf32> to vector<32x8xf32>
    %cst_91 = arith.constant dense<0.000000e+00> : vector<8x8xf32>
    %129 = tpu.matmul %25, %128, %cst_91 {dimension_numbers = #tpu.dot_dimension_numbers<[1], [0], [0], [1], [0, 0, 1, 1], [], []>} : vector<8x32xf32>, vector<32x8xf32>, vector<8x8xf32> -> vector<8x8xf32>
    %c2_92 = arith.constant 2 : index
    %c0_93 = arith.constant 0 : index
    %c0_94 = arith.constant 0 : index
    %130 = vector.load %arg9[%c2_92, %c0_93, %c0_94] : memref<4x1x8xf32, #tpu.memory_space<vmem>>, vector<1x1x8xf32>
    %131 = vector.shape_cast %130 : vector<1x1x8xf32> to vector<1x8xf32>
    %132 = vector.broadcast %131 : vector<1x8xf32> to vector<8x8xf32>
    %133 = arith.addf %129, %132 : vector<8x8xf32>
    %cst_95 = arith.constant dense<0.000000e+00> : vector<8x8xf32>
    %134 = tpu.matmul %119, %126, %cst_95 {dimension_numbers = #tpu.dot_dimension_numbers<[1], [1], [0], [0], [0, 0, 1, 0], [], []>} : vector<8x8xf32>, vector<8x8xf32>, vector<8x8xf32> -> vector<8x8xf32>
    %cst_96 = arith.constant 0.353553385 : f32
    %135 = vector.broadcast %cst_96 : f32 to vector<8x8xf32>
    %136 = arith.mulf %134, %135 : vector<8x8xf32>
    %cst_97 = arith.constant -1.000000e+30 : f32
    %137 = vector.broadcast %cst_97 : f32 to vector<8x8xf32>
    %138 = arith.select %29, %137, %136 : vector<8x8xi1>, vector<8x8xf32>
    %cst_98 = arith.constant dense<0xFF800000> : vector<8xf32>
    %139 = vector.multi_reduction <maximumf>, %138, %cst_98 [1] : vector<8x8xf32> to vector<8xf32>
    %140 = vector.shape_cast %139 : vector<8xf32> to vector<8x1xf32>
    %141 = vector.broadcast %140 : vector<8x1xf32> to vector<8x8xf32>
    %142 = arith.subf %138, %141 : vector<8x8xf32>
    %143 = math.exp %142 : vector<8x8xf32>
    %cst_99 = arith.constant dense<0.000000e+00> : vector<8xf32>
    %144 = vector.multi_reduction <add>, %143, %cst_99 [1] : vector<8x8xf32> to vector<8xf32>
    %145 = vector.shape_cast %144 : vector<8xf32> to vector<8x1xf32>
    %146 = tpu.reciprocal %145 {approx = true} : vector<8x1xf32> -> vector<8x1xf32>
    %147 = vector.broadcast %146 : vector<8x1xf32> to vector<8x8xf32>
    %148 = arith.mulf %143, %147 : vector<8x8xf32>
    %cst_100 = arith.constant dense<0.000000e+00> : vector<8x8xf32>
    %149 = tpu.matmul %148, %133, %cst_100 {dimension_numbers = #tpu.dot_dimension_numbers<[1], [0], [0], [1], [0, 0, 1, 1], [], []>} : vector<8x8xf32>, vector<8x8xf32>, vector<8x8xf32> -> vector<8x8xf32>
    %c2_101 = arith.constant 2 : index
    %c0_102 = arith.constant 0 : index
    %c0_103 = arith.constant 0 : index
    %150 = vector.load %arg10[%c2_101, %c0_102, %c0_103] : memref<4x8x32xf32, #tpu.memory_space<vmem>>, vector<1x8x32xf32>
    %151 = vector.shape_cast %150 : vector<1x8x32xf32> to vector<8x32xf32>
    %cst_104 = arith.constant dense<0.000000e+00> : vector<8x32xf32>
    %152 = tpu.matmul %149, %151, %cst_104 {dimension_numbers = #tpu.dot_dimension_numbers<[1], [0], [0], [1], [0, 0, 1, 1], [], []>} : vector<8x8xf32>, vector<8x32xf32>, vector<8x32xf32> -> vector<8x32xf32>
    %153 = arith.addf %112, %152 : vector<8x32xf32>
    %c3 = arith.constant 3 : index
    %c0_105 = arith.constant 0 : index
    %c0_106 = arith.constant 0 : index
    %154 = vector.load %arg4[%c3, %c0_105, %c0_106] : memref<4x32x8xf32, #tpu.memory_space<vmem>>, vector<1x32x8xf32>
    %155 = vector.shape_cast %154 : vector<1x32x8xf32> to vector<32x8xf32>
    %cst_107 = arith.constant dense<0.000000e+00> : vector<8x8xf32>
    %156 = tpu.matmul %25, %155, %cst_107 {dimension_numbers = #tpu.dot_dimension_numbers<[1], [0], [0], [1], [0, 0, 1, 1], [], []>} : vector<8x32xf32>, vector<32x8xf32>, vector<8x8xf32> -> vector<8x8xf32>
    %c3_108 = arith.constant 3 : index
    %c0_109 = arith.constant 0 : index
    %c0_110 = arith.constant 0 : index
    %157 = vector.load %arg5[%c3_108, %c0_109, %c0_110] : memref<4x1x8xf32, #tpu.memory_space<vmem>>, vector<1x1x8xf32>
    %158 = vector.shape_cast %157 : vector<1x1x8xf32> to vector<1x8xf32>
    %159 = vector.broadcast %158 : vector<1x8xf32> to vector<8x8xf32>
    %160 = arith.addf %156, %159 : vector<8x8xf32>
    %c3_111 = arith.constant 3 : index
    %c0_112 = arith.constant 0 : index
    %c0_113 = arith.constant 0 : index
    %161 = vector.load %arg6[%c3_111, %c0_112, %c0_113] : memref<4x32x8xf32, #tpu.memory_space<vmem>>, vector<1x32x8xf32>
    %162 = vector.shape_cast %161 : vector<1x32x8xf32> to vector<32x8xf32>
    %cst_114 = arith.constant dense<0.000000e+00> : vector<8x8xf32>
    %163 = tpu.matmul %25, %162, %cst_114 {dimension_numbers = #tpu.dot_dimension_numbers<[1], [0], [0], [1], [0, 0, 1, 1], [], []>} : vector<8x32xf32>, vector<32x8xf32>, vector<8x8xf32> -> vector<8x8xf32>
    %c3_115 = arith.constant 3 : index
    %c0_116 = arith.constant 0 : index
    %c0_117 = arith.constant 0 : index
    %164 = vector.load %arg7[%c3_115, %c0_116, %c0_117] : memref<4x1x8xf32, #tpu.memory_space<vmem>>, vector<1x1x8xf32>
    %165 = vector.shape_cast %164 : vector<1x1x8xf32> to vector<1x8xf32>
    %166 = vector.broadcast %165 : vector<1x8xf32> to vector<8x8xf32>
    %167 = arith.addf %163, %166 : vector<8x8xf32>
    %c3_118 = arith.constant 3 : index
    %c0_119 = arith.constant 0 : index
    %c0_120 = arith.constant 0 : index
    %168 = vector.load %arg8[%c3_118, %c0_119, %c0_120] : memref<4x32x8xf32, #tpu.memory_space<vmem>>, vector<1x32x8xf32>
    %169 = vector.shape_cast %168 : vector<1x32x8xf32> to vector<32x8xf32>
    %cst_121 = arith.constant dense<0.000000e+00> : vector<8x8xf32>
    %170 = tpu.matmul %25, %169, %cst_121 {dimension_numbers = #tpu.dot_dimension_numbers<[1], [0], [0], [1], [0, 0, 1, 1], [], []>} : vector<8x32xf32>, vector<32x8xf32>, vector<8x8xf32> -> vector<8x8xf32>
    %c3_122 = arith.constant 3 : index
    %c0_123 = arith.constant 0 : index
    %c0_124 = arith.constant 0 : index
    %171 = vector.load %arg9[%c3_122, %c0_123, %c0_124] : memref<4x1x8xf32, #tpu.memory_space<vmem>>, vector<1x1x8xf32>
    %172 = vector.shape_cast %171 : vector<1x1x8xf32> to vector<1x8xf32>
    %173 = vector.broadcast %172 : vector<1x8xf32> to vector<8x8xf32>
    %174 = arith.addf %170, %173 : vector<8x8xf32>
    %cst_125 = arith.constant dense<0.000000e+00> : vector<8x8xf32>
    %175 = tpu.matmul %160, %167, %cst_125 {dimension_numbers = #tpu.dot_dimension_numbers<[1], [1], [0], [0], [0, 0, 1, 0], [], []>} : vector<8x8xf32>, vector<8x8xf32>, vector<8x8xf32> -> vector<8x8xf32>
    %cst_126 = arith.constant 0.353553385 : f32
    %176 = vector.broadcast %cst_126 : f32 to vector<8x8xf32>
    %177 = arith.mulf %175, %176 : vector<8x8xf32>
    %cst_127 = arith.constant -1.000000e+30 : f32
    %178 = vector.broadcast %cst_127 : f32 to vector<8x8xf32>
    %179 = arith.select %29, %178, %177 : vector<8x8xi1>, vector<8x8xf32>
    %cst_128 = arith.constant dense<0xFF800000> : vector<8xf32>
    %180 = vector.multi_reduction <maximumf>, %179, %cst_128 [1] : vector<8x8xf32> to vector<8xf32>
    %181 = vector.shape_cast %180 : vector<8xf32> to vector<8x1xf32>
    %182 = vector.broadcast %181 : vector<8x1xf32> to vector<8x8xf32>
    %183 = arith.subf %179, %182 : vector<8x8xf32>
    %184 = math.exp %183 : vector<8x8xf32>
    %cst_129 = arith.constant dense<0.000000e+00> : vector<8xf32>
    %185 = vector.multi_reduction <add>, %184, %cst_129 [1] : vector<8x8xf32> to vector<8xf32>
    %186 = vector.shape_cast %185 : vector<8xf32> to vector<8x1xf32>
    %187 = tpu.reciprocal %186 {approx = true} : vector<8x1xf32> -> vector<8x1xf32>
    %188 = vector.broadcast %187 : vector<8x1xf32> to vector<8x8xf32>
    %189 = arith.mulf %184, %188 : vector<8x8xf32>
    %cst_130 = arith.constant dense<0.000000e+00> : vector<8x8xf32>
    %190 = tpu.matmul %189, %174, %cst_130 {dimension_numbers = #tpu.dot_dimension_numbers<[1], [0], [0], [1], [0, 0, 1, 1], [], []>} : vector<8x8xf32>, vector<8x8xf32>, vector<8x8xf32> -> vector<8x8xf32>
    %c3_131 = arith.constant 3 : index
    %c0_132 = arith.constant 0 : index
    %c0_133 = arith.constant 0 : index
    %191 = vector.load %arg10[%c3_131, %c0_132, %c0_133] : memref<4x8x32xf32, #tpu.memory_space<vmem>>, vector<1x8x32xf32>
    %192 = vector.shape_cast %191 : vector<1x8x32xf32> to vector<8x32xf32>
    %cst_134 = arith.constant dense<0.000000e+00> : vector<8x32xf32>
    %193 = tpu.matmul %190, %192, %cst_134 {dimension_numbers = #tpu.dot_dimension_numbers<[1], [0], [0], [1], [0, 0, 1, 1], [], []>} : vector<8x8xf32>, vector<8x32xf32>, vector<8x32xf32> -> vector<8x32xf32>
    %194 = arith.addf %153, %193 : vector<8x32xf32>
    %195 = arith.addf %1, %194 : vector<8x32xf32>
    %c0_135 = arith.constant 0 : index
    %c0_136 = arith.constant 0 : index
    %196 = vector.load %arg11[%c0_135, %c0_136] : memref<1x32xf32, #tpu.memory_space<vmem>>, vector<1x32xf32>
    %197 = vector.broadcast %196 : vector<1x32xf32> to vector<8x32xf32>
    %198 = arith.addf %195, %197 : vector<8x32xf32>
    %c0_137 = arith.constant 0 : index
    %c0_138 = arith.constant 0 : index
    %c0_139 = arith.constant 0 : index
    %199 = vector.load %arg13[%c0_137, %c0_138, %c0_139] : memref<1x8x32xf32, #tpu.memory_space<vmem>>, vector<1x8x32xf32>
    %200 = vector.shape_cast %199 : vector<1x8x32xf32> to vector<8x32xf32>
    %201 = vector.shape_cast %198 : vector<8x32xf32> to vector<1x8x32xf32>
    tpu.vector_store %arg13[%c0_137, %c0_138, %c0_139], %201 {strides = array<i32>} : memref<1x8x32xf32, #tpu.memory_space<vmem>>, vector<1x8x32xf32>,
    return
  }
  func.func @transform_0(%arg0: i32) -> (i32, i32, i32) {
    %c0_i32 = arith.constant 0 : i32
    %c0_i32_0 = arith.constant 0 : i32
    %c0_i32_1 = arith.constant 0 : i32
    return %arg0, %c0_i32, %c0_i32_0 : i32, i32, i32
  }
  func.func @transform_1(%arg0: i32) -> (i32, i32) {
    %c0_i32 = arith.constant 0 : i32
    %c0_i32_0 = arith.constant 0 : i32
    %c0_i32_1 = arith.constant 0 : i32
    return %c0_i32, %c0_i32_0 : i32, i32
  }
  func.func @transform_2(%arg0: i32) -> (i32, i32) {
    %c0_i32 = arith.constant 0 : i32
    %c0_i32_0 = arith.constant 0 : i32
    %c0_i32_1 = arith.constant 0 : i32
    return %c0_i32, %c0_i32_0 : i32, i32
  }
  func.func @transform_3(%arg0: i32) -> (i32, i32, i32) {
    %c0_i32 = arith.constant 0 : i32
    %c0_i32_0 = arith.constant 0 : i32
    %c0_i32_1 = arith.constant 0 : i32
    %c0_i32_2 = arith.constant 0 : i32
    return %c0_i32, %c0_i32_0, %c0_i32_1 : i32, i32, i32
  }
  func.func @transform_4(%arg0: i32) -> (i32, i32, i32) {
    %c0_i32 = arith.constant 0 : i32
    %c0_i32_0 = arith.constant 0 : i32
    %c0_i32_1 = arith.constant 0 : i32
    %c0_i32_2 = arith.constant 0 : i32
    return %c0_i32, %c0_i32_0, %c0_i32_1 : i32, i32, i32
  }
  func.func @transform_5(%arg0: i32) -> (i32, i32, i32) {
    %c0_i32 = arith.constant 0 : i32
    %c0_i32_0 = arith.constant 0 : i32
    %c0_i32_1 = arith.constant 0 : i32
    %c0_i32_2 = arith.constant 0 : i32
    return %c0_i32, %c0_i32_0, %c0_i32_1 : i32, i32, i32
  }
  func.func @transform_6(%arg0: i32) -> (i32, i32, i32) {
    %c0_i32 = arith.constant 0 : i32
    %c0_i32_0 = arith.constant 0 : i32
    %c0_i32_1 = arith.constant 0 : i32
    %c0_i32_2 = arith.constant 0 : i32
    return %c0_i32, %c0_i32_0, %c0_i32_1 : i32, i32, i32
  }
  func.func @transform_7(%arg0: i32) -> (i32, i32, i32) {
    %c0_i32 = arith.constant 0 : i32
    %c0_i32_0 = arith.constant 0 : i32
    %c0_i32_1 = arith.constant 0 : i32
    %c0_i32_2 = arith.constant 0 : i32
    return %c0_i32, %c0_i32_0, %c0_i32_1 : i32, i32, i32
  }
  func.func @transform_8(%arg0: i32) -> (i32, i32, i32) {
    %c0_i32 = arith.constant 0 : i32
    %c0_i32_0 = arith.constant 0 : i32
    %c0_i32_1 = arith.constant 0 : i32
    %c0_i32_2 = arith.constant 0 : i32
    return %c0_i32, %c0_i32_0, %c0_i32_1 : i32, i32, i32
  }
  func.func @transform_9(%arg0: i32) -> (i32, i32, i32) {
    %c0_i32 = arith.constant 0 : i32
    %c0_i32_0 = arith.constant 0 : i32
    %c0_i32_1 = arith.constant 0 : i32
    %c0_i32_2 = arith.constant 0 : i32
    return %c0_i32, %c0_i32_0, %c0_i32_1 : i32, i32, i32
  }
  func.func @transform_10(%arg0: i32) -> (i32, i32) {
    %c0_i32 = arith.constant 0 : i32
    %c0_i32_0 = arith.constant 0 : i32
    %c0_i32_1 = arith.constant 0 : i32
    return %c0_i32, %c0_i32_0 : i32, i32
  }
  func.func @transform_11(%arg0: i32) -> (i32, i32, i32) {
    %c0_i32 = arith.constant 0 : i32
    %c0_i32_0 = arith.constant 0 : i32
    %c0_i32_1 = arith.constant 0 : i32
    return %arg0, %c0_i32, %c0_i32_0 : i32, i32, i32
  }
  func.func @transform_12(%arg0: i32) -> (i32, i32, i32) {
    %c0_i32 = arith.constant 0 : i32
    %c0_i32_0 = arith.constant 0 : i32
    %c0_i32_1 = arith.constant 0 : i32
    return %arg0, %c0_i32, %c0_i32_0 : i32, i32, i32
  }
}

</mosaic_0001>

<llo_original>
// kernel: tpu_custom_call.1
$region0: #{tpu_custom_call.1}
  #allocation0 [shape = 'u32[]', space=smem, size = 0x4, offset = 0x4, fixed_abs, tag = 'smem constant byte address 0x4 - core index']
  #allocation1 [shape = 'u32[144,128]{1,0:T(1,128)}', space=vmem, size = 0x12000, scoped, tag = 'internal scratch']
  %s0 = inlined_call_operand.hbm [shape: f32[2,8,32], index: 0, kind: input, shape index: {}]
  %s1 = inlined_call_operand.hbm [shape: f32[1,32], index: 1, kind: input, shape index: {}]
  %s2 = inlined_call_operand.hbm [shape: f32[1,32], index: 2, kind: input, shape index: {}]
  %s3 = inlined_call_operand.hbm [shape: f32[4,32,8], index: 3, kind: input, shape index: {}]
  %s4 = inlined_call_operand.hbm [shape: f32[4,1,8], index: 4, kind: input, shape index: {}]
  %s5 = inlined_call_operand.hbm [shape: f32[4,32,8], index: 5, kind: input, shape index: {}]
  %s6 = inlined_call_operand.hbm [shape: f32[4,1,8], index: 6, kind: input, shape index: {}]
  %s7 = inlined_call_operand.hbm [shape: f32[4,32,8], index: 7, kind: input, shape index: {}]
  %s8 = inlined_call_operand.hbm [shape: f32[4,1,8], index: 8, kind: input, shape index: {}]
  %s9 = inlined_call_operand.hbm [shape: f32[4,8,32], index: 9, kind: input, shape index: {}]
  %s10 = inlined_call_operand.hbm [shape: f32[1,32], index: 10, kind: input, shape index: {}]
  %s11 = inlined_call_operand.hbm [shape: s32[2,8,8], index: 11, kind: input, shape index: {}]
  %s12 = inlined_call_operand.hbm [shape: f32[2,8,32], index: 12, kind: output, shape index: {}]
  %s13 = sld [smem:[#allocation0]]
  $region129: #{tpu_custom_call.1} parent=0
    _
  %s15 = ssub.s32 1, %s13
  %s16 = scalar_select 0, %s15, %s13
  $region1: #{tpu_custom_call.1} parent=0
    #allocation2 [shape = 'u8[8192]{0}', space=vmem, size = 0x2000, scoped, tag = 'input window, operand 0']
    #allocation3 [shape = 's32[2]{0}', space=sflag, size = 0x8, scoped, tag = 'scoped memory for tpu_custom_call.1']
    #allocation4 [shape = 's32[2]{0}', space=sflag, size = 0x8, scoped, tag = 'scoped memory for tpu_custom_call.1']
    #allocation5 [shape = 'u8[512]{0}', space=vmem, size = 0x400, scoped, tag = 'input window, operand 1, single buffered']
    #allocation6 [shape = 's32[1]{0}', space=sflag, size = 0x4, scoped, tag = 'scoped memory for tpu_custom_call.1']
    #allocation7 [shape = 'u8[512]{0}', space=vmem, size = 0x400, scoped, tag = 'input window, operand 2, single buffered']
    #allocation8 [shape = 'u8[65536]{0}', space=vmem, size = 0x10000, scoped, tag = 'input window, operand 3, single buffered']
    #allocation9 [shape = 's32[1]{0}', space=sflag, size = 0x4, scoped, tag = 'scoped memory for tpu_custom_call.1']
    #allocation10 [shape = 'u8[2048]{0}', space=vmem, size = 0x800, scoped, tag = 'input window, operand 4, single buffered']
    #allocation11 [shape = 'u8[65536]{0}', space=vmem, size = 0x10000, scoped, tag = 'input window, operand 5, single buffered']
    #allocation12 [shape = 's32[1]{0}', space=sflag, size = 0x4, scoped, tag = 'scoped memory for tpu_custom_call.1']
    #allocation13 [shape = 'u8[2048]{0}', space=vmem, size = 0x800, scoped, tag = 'input window, operand 6, single buffered']
    #allocation14 [shape = 'u8[65536]{0}', space=vmem, size = 0x10000, scoped, tag = 'input window, operand 7, single buffered']
    #allocation15 [shape = 's32[1]{0}', space=sflag, size = 0x4, scoped, tag = 'scoped memory for tpu_custom_call.1']
    #allocation16 [shape = 'u8[2048]{0}', space=vmem, size = 0x800, scoped, tag = 'input window, operand 8, single buffered']
    #allocation17 [shape = 'u8[16384]{0}', space=vmem, size = 0x4000, scoped, tag = 'input window, operand 9, single buffered']
    #allocation18 [shape = 's32[1]{0}', space=sflag, size = 0x4, scoped, tag = 'scoped memory for tpu_custom_call.1']
    #allocation19 [shape = 'u8[512]{0}', space=vmem, size = 0x400, scoped, tag = 'input window, operand 10, single buffered']
    #allocation20 [shape = 'u8[8192]{0}', space=vmem, size = 0x2000, scoped, tag = 'input window, operand 11']
    #allocation21 [shape = 's32[2]{0}', space=sflag, size = 0x8, scoped, tag = 'scoped memory for tpu_custom_call.1']
    #allocation22 [shape = 'u8[8192]{0}', space=vmem, size = 0x2000, scoped, tag = 'output window, operand 0']
    %17 = vsyncpa [#allocation3], 0
    %s18 = scalar_lea.sflag [#allocation3], 1
    %19 = vsyncpa %s18, 0
    %20 = vsyncpa [#allocation6], 0
    %21 = vsyncpa [#allocation9], 0
    %22 = vsyncpa [#allocation12], 0
    %23 = vsyncpa [#allocation15], 0
    %24 = vsyncpa [#allocation18], 0
    %25 = vsyncpa [#allocation21], 0
    %s26 = scalar_lea.sflag [#allocation21], 1
    %27 = vsyncpa %s26, 0
    %28 = vsyncpa [#allocation4], 0
    %s29 = scalar_lea.sflag [#allocation4], 1
    %30 = vsyncpa %s29, 0
    loop: start=0, step=1, limit=4
    $region2: #{tpu_custom_call.1} parent=1 // loop_pre_header
      _
    $region3: #{tpu_custom_call.1} parent=1 // loop_header
      %s32 = sphi 0, %s36
      %p33 = scmp.ge.s32.totalorder %s32, 4
      %s42 = sphi 0, %s44
      %s45 = sphi 0, %s42
      %s46 = sphi 0, %s45
      %s62 = sphi 0, %s46
      %s66 = sphi 0, %s66
      %s68 = sphi 0, %s66
      %s69 = sphi 0, %s68
      %s83 = sphi 0, %s69
      %s87 = sphi 0, %s87
      %s89 = sphi 0, %s87
      %s90 = sphi 0, %s89
      %s104 = sphi 0, %s90
      %s108 = sphi 0, %s108
      %s110 = sphi 0, %s108
      %s111 = sphi 0, %s110
      %s125 = sphi 0, %s111
      %s129 = sphi 0, %s129
      %s131 = sphi 0, %s129
      %s132 = sphi 0, %s131
      %s146 = sphi 0, %s132
      %s150 = sphi 0, %s150
      %s152 = sphi 0, %s150
      %s153 = sphi 0, %s152
      %s167 = sphi 0, %s153
      %s171 = sphi 0, %s171
      %s173 = sphi 0, %s171
      %s174 = sphi 0, %s173
      %s188 = sphi 0, %s174
      %s192 = sphi 0, %s192
      %s194 = sphi 0, %s192
      %s195 = sphi 0, %s194
      %s209 = sphi 0, %s195
      %s213 = sphi 0, %s213
      %s215 = sphi 0, %s213
      %s216 = sphi 0, %s215
      %s230 = sphi 0, %s216
      %s234 = sphi 0, %s234
      %s236 = sphi 0, %s234
      %s237 = sphi 0, %s236
      %s251 = sphi 0, %s237
      %s255 = sphi 0, %s255
      %s257 = sphi 0, %s255
      %s258 = sphi 0, %s257
      %s272 = sphi 0, %s258
      %s278 = sphi 0, %s280
      %s281 = sphi 0, %s278
      %s282 = sphi 0, %s281
      %s298 = sphi 0, %s282
      %s304 = sphi 0, %s306
      %s307 = sphi 0, %s304
      %s308 = sphi 0, %s307
      %s324 = sphi 0, %s308
    $region4: #{tpu_custom_call.1} parent=1 // loop_header_branch
      %35 = sbr.rel (%p33) target = $region8
    $region5: #{tpu_custom_call.1} parent=1 // loop_body
      %s37 = ssub.s32 %s32, 1
      %s38 = ssub.s32 %s32, 2
      %s39 = sadd.s32 %s32, 1
      %s40 = ssub.s32 %s32, %s39
      %p41 = scmp.eq.s32.totalorder %s40, 0
      %s43 = sadd.s32 %s42, 1
      %s44 = scalar_select %p41, %s42, %s43
      %p47 = pneg %p41
      %p48 = scmp.eq.s32.totalorder %s32, 1
      %p49 = por %p47, %p48
      %p50 = scmp.ne.s32.totalorder %s42, %s45
      %p51 = scmp.eq.s32.totalorder %s32, 0
      %p52 = por %p50, %p51
      %p53 = scmp.ne.s32.totalorder %s42, %s45
      %p54 = scmp.eq.s32.totalorder %s37, 1
      %p55 = por %p53, %p54
      %p56 = scmp.ne.s32.totalorder %s45, %s46
      %p57 = scmp.eq.s32.totalorder %s37, 0
      %p58 = por %p56, %p57
      %p59 = scmp.ne.s32.totalorder %s45, %s46
      %p60 = scmp.eq.s32.totalorder %s38, 1
      %p61 = por %p59, %p60
      %p63 = scmp.ne.s32.totalorder %s46, %s62
      %p64 = scmp.eq.s32.totalorder %s38, 0
      %p65 = por %p63, %p64
      %s67 = sadd.s32 %s66, 1
      %p70 = scmp.eq.s32.totalorder %s32, 1
      %p71 = scmp.ne.s32.totalorder %s66, %s68
      %p72 = scmp.eq.s32.totalorder %s32, 0
      %p73 = por %p71, %p72
      %p74 = scmp.ne.s32.totalorder %s66, %s68
      %p75 = scmp.eq.s32.totalorder %s37, 1
      %p76 = por %p74, %p75
      %p77 = scmp.ne.s32.totalorder %s68, %s69
      %p78 = scmp.eq.s32.totalorder %s37, 0
      %p79 = por %p77, %p78
      %p80 = scmp.ne.s32.totalorder %s68, %s69
      %p81 = scmp.eq.s32.totalorder %s38, 1
      %p82 = por %p80, %p81
      %p84 = scmp.ne.s32.totalorder %s69, %s83
      %p85 = scmp.eq.s32.totalorder %s38, 0
      %p86 = por %p84, %p85
      %s88 = sadd.s32 %s87, 1
      %p91 = scmp.eq.s32.totalorder %s32, 1
      %p92 = scmp.ne.s32.totalorder %s87, %s89
      %p93 = scmp.eq.s32.totalorder %s32, 0
      %p94 = por %p92, %p93
      %p95 = scmp.ne.s32.totalorder %s87, %s89
      %p96 = scmp.eq.s32.totalorder %s37, 1
      %p97 = por %p95, %p96
      %p98 = scmp.ne.s32.totalorder %s89, %s90
      %p99 = scmp.eq.s32.totalorder %s37, 0
      %p100 = por %p98, %p99
      %p101 = scmp.ne.s32.totalorder %s89, %s90
      %p102 = scmp.eq.s32.totalorder %s38, 1
      %p103 = por %p101, %p102
      %p105 = scmp.ne.s32.totalorder %s90, %s104
      %p106 = scmp.eq.s32.totalorder %s38, 0
      %p107 = por %p105, %p106
      %s109 = sadd.s32 %s108, 1
      %p112 = scmp.eq.s32.totalorder %s32, 1
      %p113 = scmp.ne.s32.totalorder %s108, %s110
      %p114 = scmp.eq.s32.totalorder %s32, 0
      %p115 = por %p113, %p114
      %p116 = scmp.ne.s32.totalorder %s108, %s110
      %p117 = scmp.eq.s32.totalorder %s37, 1
      %p118 = por %p116, %p117
      %p119 = scmp.ne.s32.totalorder %s110, %s111
      %p120 = scmp.eq.s32.totalorder %s37, 0
      %p121 = por %p119, %p120
      %p122 = scmp.ne.s32.totalorder %s110, %s111
      %p123 = scmp.eq.s32.totalorder %s38, 1
      %p124 = por %p122, %p123
      %p126 = scmp.ne.s32.totalorder %s111, %s125
      %p127 = scmp.eq.s32.totalorder %s38, 0
      %p128 = por %p126, %p127
      %s130 = sadd.s32 %s129, 1
      %p133 = scmp.eq.s32.totalorder %s32, 1
      %p134 = scmp.ne.s32.totalorder %s129, %s131
      %p135 = scmp.eq.s32.totalorder %s32, 0
      %p136 = por %p134, %p135
      %p137 = scmp.ne.s32.totalorder %s129, %s131
      %p138 = scmp.eq.s32.totalorder %s37, 1
      %p139 = por %p137, %p138
      %p140 = scmp.ne.s32.totalorder %s131, %s132
      %p141 = scmp.eq.s32.totalorder %s37, 0
      %p142 = por %p140, %p141
      %p143 = scmp.ne.s32.totalorder %s131, %s132
      %p144 = scmp.eq.s32.totalorder %s38, 1
      %p145 = por %p143, %p144
      %p147 = scmp.ne.s32.totalorder %s132, %s146
      %p148 = scmp.eq.s32.totalorder %s38, 0
      %p149 = por %p147, %p148
      %s151 = sadd.s32 %s150, 1
      %p154 = scmp.eq.s32.totalorder %s32, 1
      %p155 = scmp.ne.s32.totalorder %s150, %s152
      %p156 = scmp.eq.s32.totalorder %s32, 0
      %p157 = por %p155, %p156
      %p158 = scmp.ne.s32.totalorder %s150, %s152
      %p159 = scmp.eq.s32.totalorder %s37, 1
      %p160 = por %p158, %p159
      %p161 = scmp.ne.s32.totalorder %s152, %s153
      %p162 = scmp.eq.s32.totalorder %s37, 0
      %p163 = por %p161, %p162
      %p164 = scmp.ne.s32.totalorder %s152, %s153
      %p165 = scmp.eq.s32.totalorder %s38, 1
      %p166 = por %p164, %p165
      %p168 = scmp.ne.s32.totalorder %s153, %s167
      %p169 = scmp.eq.s32.totalorder %s38, 0
      %p170 = por %p168, %p169
      %s172 = sadd.s32 %s171, 1
      %p175 = scmp.eq.s32.totalorder %s32, 1
      %p176 = scmp.ne.s32.totalorder %s171, %s173
      %p177 = scmp.eq.s32.totalorder %s32, 0
      %p178 = por %p176, %p177
      %p179 = scmp.ne.s32.totalorder %s171, %s173
      %p180 = scmp.eq.s32.totalorder %s37, 1
      %p181 = por %p179, %p180
      %p182 = scmp.ne.s32.totalorder %s173, %s174
      %p183 = scmp.eq.s32.totalorder %s37, 0
      %p184 = por %p182, %p183
      %p185 = scmp.ne.s32.totalorder %s173, %s174
      %p186 = scmp.eq.s32.totalorder %s38, 1
      %p187 = por %p185, %p186
      %p189 = scmp.ne.s32.totalorder %s174, %s188
      %p190 = scmp.eq.s32.totalorder %s38, 0
      %p191 = por %p189, %p190
      %s193 = sadd.s32 %s192, 1
      %p196 = scmp.eq.s32.totalorder %s32, 1
      %p197 = scmp.ne.s32.totalorder %s192, %s194
      %p198 = scmp.eq.s32.totalorder %s32, 0
      %p199 = por %p197, %p198
      %p200 = scmp.ne.s32.totalorder %s192, %s194
      %p201 = scmp.eq.s32.totalorder %s37, 1
      %p202 = por %p200, %p201
      %p203 = scmp.ne.s32.totalorder %s194, %s195
      %p204 = scmp.eq.s32.totalorder %s37, 0
      %p205 = por %p203, %p204
      %p206 = scmp.ne.s32.totalorder %s194, %s195
      %p207 = scmp.eq.s32.totalorder %s38, 1
      %p208 = por %p206, %p207
      %p210 = scmp.ne.s32.totalorder %s195, %s209
      %p211 = scmp.eq.s32.totalorder %s38, 0
      %p212 = por %p210, %p211
      %s214 = sadd.s32 %s213, 1
      %p217 = scmp.eq.s32.totalorder %s32, 1
      %p218 = scmp.ne.s32.totalorder %s213, %s215
      %p219 = scmp.eq.s32.totalorder %s32, 0
      %p220 = por %p218, %p219
      %p221 = scmp.ne.s32.totalorder %s213, %s215
      %p222 = scmp.eq.s32.totalorder %s37, 1
      %p223 = por %p221, %p222
      %p224 = scmp.ne.s32.totalorder %s215, %s216
      %p225 = scmp.eq.s32.totalorder %s37, 0
      %p226 = por %p224, %p225
      %p227 = scmp.ne.s32.totalorder %s215, %s216
      %p228 = scmp.eq.s32.totalorder %s38, 1
      %p229 = por %p227, %p228
      %p231 = scmp.ne.s32.totalorder %s216, %s230
      %p232 = scmp.eq.s32.totalorder %s38, 0
      %p233 = por %p231, %p232
      %s235 = sadd.s32 %s234, 1
      %p238 = scmp.eq.s32.totalorder %s32, 1
      %p239 = scmp.ne.s32.totalorder %s234, %s236
      %p240 = scmp.eq.s32.totalorder %s32, 0
      %p241 = por %p239, %p240
      %p242 = scmp.ne.s32.totalorder %s234, %s236
      %p243 = scmp.eq.s32.totalorder %s37, 1
      %p244 = por %p242, %p243
      %p245 = scmp.ne.s32.totalorder %s236, %s237
      %p246 = scmp.eq.s32.totalorder %s37, 0
      %p247 = por %p245, %p246
      %p248 = scmp.ne.s32.totalorder %s236, %s237
      %p249 = scmp.eq.s32.totalorder %s38, 1
      %p250 = por %p248, %p249
      %p252 = scmp.ne.s32.totalorder %s237, %s251
      %p253 = scmp.eq.s32.totalorder %s38, 0
      %p254 = por %p252, %p253
      %s256 = sadd.s32 %s255, 1
      %p259 = scmp.eq.s32.totalorder %s32, 1
      %p260 = scmp.ne.s32.totalorder %s255, %s257
      %p261 = scmp.eq.s32.totalorder %s32, 0
      %p262 = por %p260, %p261
      %p263 = scmp.ne.s32.totalorder %s255, %s257
      %p264 = scmp.eq.s32.totalorder %s37, 1
      %p265 = por %p263, %p264
      %p266 = scmp.ne.s32.totalorder %s257, %s258
      %p267 = scmp.eq.s32.totalorder %s37, 0
      %p268 = por %p266, %p267
      %p269 = scmp.ne.s32.totalorder %s257, %s258
      %p270 = scmp.eq.s32.totalorder %s38, 1
      %p271 = por %p269, %p270
      %p273 = scmp.ne.s32.totalorder %s258, %s272
      %p274 = scmp.eq.s32.totalorder %s38, 0
      %p275 = por %p273, %p274
      %s276 = ssub.s32 %s32, %s39
      %p277 = scmp.eq.s32.totalorder %s276, 0
      %s279 = sadd.s32 %s278, 1
      %s280 = scalar_select %p277, %s278, %s279
      %p283 = pneg %p277
      %p284 = scmp.eq.s32.totalorder %s32, 1
      %p285 = por %p283, %p284
      %p286 = scmp.ne.s32.totalorder %s278, %s281
      %p287 = scmp.eq.s32.totalorder %s32, 0
      %p288 = por %p286, %p287
      %p289 = scmp.ne.s32.totalorder %s278, %s281
      %p290 = scmp.eq.s32.totalorder %s37, 1
      %p291 = por %p289, %p290
      %p292 = scmp.ne.s32.totalorder %s281, %s282
      %p293 = scmp.eq.s32.totalorder %s37, 0
      %p294 = por %p292, %p293
      %p295 = scmp.ne.s32.totalorder %s281, %s282
      %p296 = scmp.eq.s32.totalorder %s38, 1
      %p297 = por %p295, %p296
      %p299 = scmp.ne.s32.totalorder %s282, %s298
      %p300 = scmp.eq.s32.totalorder %s38, 0
      %p301 = por %p299, %p300
      %s302 = ssub.s32 %s32, %s39
      %p303 = scmp.eq.s32.totalorder %s302, 0
      %s305 = sadd.s32 %s304, 1
      %s306 = scalar_select %p303, %s304, %s305
      %p309 = pneg %p303
      %p310 = scmp.eq.s32.totalorder %s32, 1
      %p311 = por %p309, %p310
      %p312 = scmp.ne.s32.totalorder %s304, %s307
      %p313 = scmp.eq.s32.totalorder %s32, 0
      %p314 = por %p312, %p313
      %p315 = scmp.ne.s32.totalorder %s304, %s307
      %p316 = scmp.eq.s32.totalorder %s37, 1
      %p317 = por %p315, %p316
      %p318 = scmp.ne.s32.totalorder %s307, %s308
      %p319 = scmp.eq.s32.totalorder %s37, 0
      %p320 = por %p318, %p319
      %p321 = scmp.ne.s32.totalorder %s307, %s308
      %p322 = scmp.eq.s32.totalorder %s38, 1
      %p323 = por %p321, %p322
      %p325 = scmp.ne.s32.totalorder %s308, %s324
      %p326 = scmp.eq.s32.totalorder %s38, 0
      %p327 = por %p325, %p326
      %p328 = scmp.le.s32.totalorder 1, %s32
      %p329 = scmp.lt.s32.totalorder %s32, 3
      %p330 = pnand %p328, %p329
      %p331 = pneg %p330
      // Predicated region
      $region9: #{tpu_custom_call.1} parent=5 // pred_check
        _
      $region10: #{tpu_custom_call.1} parent=5 // pred_check_branch
        %333 = sbr.rel (%p330) target = $region12
      $region11: #{tpu_custom_call.1} parent=5 // pred_region
        %s334 = ssub.s32 %s32, 1
        // Predicated region
        $region13: #{tpu_custom_call.1} parent=11 // pred_check
          %p335 = pneg %p79
        $region14: #{tpu_custom_call.1} parent=11 // pred_check_branch
          %337 = sbr.rel (%p335) target = $region16
        $region15: #{tpu_custom_call.1} parent=11 // pred_region
          %s339 = ssub.s32 16, 16
          %340 = vsyncadd [#allocation6], %s339
          %s342 = sshll.u32 [#allocation5], 4
          %s343 = int_to_ptr.vmem [resolvable:$true] %s342
          %345 = dma.hbm_to_vmem [thread:$0]  %s1, 16, %s343, [#allocation6]
        $region16: #{tpu_custom_call.1} parent=11 // pred_fallthru
          _
        // Predicated region
        $region17: #{tpu_custom_call.1} parent=11 // pred_check
          %p346 = pneg %p100
        $region18: #{tpu_custom_call.1} parent=11 // pred_check_branch
          %348 = sbr.rel (%p346) target = $region20
        $region19: #{tpu_custom_call.1} parent=11 // pred_region
          %s350 = ssub.s32 16, 16
          %351 = vsyncadd [#allocation6], %s350
          %s353 = sshll.u32 [#allocation7], 4
          %s354 = int_to_ptr.vmem [resolvable:$true] %s353
          %356 = dma.hbm_to_vmem [thread:$0]  %s2, 16, %s354, [#allocation6]
        $region20: #{tpu_custom_call.1} parent=11 // pred_fallthru
          _
        // Predicated region
        $region21: #{tpu_custom_call.1} parent=11 // pred_check
          %p357 = pneg %p121
        $region22: #{tpu_custom_call.1} parent=11 // pred_check_branch
          %359 = sbr.rel (%p357) target = $region24
        $region23: #{tpu_custom_call.1} parent=11 // pred_region
          %s361 = ssub.s32 2048, 2048
          %362 = vsyncadd [#allocation9], %s361
          %s363 = sshll.u32 [#allocation8], 4
          %s364 = int_to_ptr.vmem [resolvable:$true] %s363
          %369 = dma.hbm_to_vmem [thread:$0]  %s3, 2048, %s364, [#allocation9], 128, 128, 8
        $region24: #{tpu_custom_call.1} parent=11 // pred_fallthru
          _
        // Predicated region
        $region25: #{tpu_custom_call.1} parent=11 // pred_check
          %p370 = pneg %p142
        $region26: #{tpu_custom_call.1} parent=11 // pred_check_branch
          %372 = sbr.rel (%p370) target = $region28
        $region27: #{tpu_custom_call.1} parent=11 // pred_region
          %s374 = ssub.s32 64, 64
          %375 = vsyncadd [#allocation9], %s374
          %s376 = sshll.u32 [#allocation10], 4
          %s377 = int_to_ptr.vmem [resolvable:$true] %s376
          %382 = dma.hbm_to_vmem [thread:$0]  %s4, 64, %s377, [#allocation9], 16, 16, 1
        $region28: #{tpu_custom_call.1} parent=11 // pred_fallthru
          _
        // Predicated region
        $region29: #{tpu_custom_call.1} parent=11 // pred_check
          %p383 = pneg %p163
        $region30: #{tpu_custom_call.1} parent=11 // pred_check_branch
          %385 = sbr.rel (%p383) target = $region32
        $region31: #{tpu_custom_call.1} parent=11 // pred_region
          %s387 = ssub.s32 2048, 2048
          %388 = vsyncadd [#allocation12], %s387
          %s389 = sshll.u32 [#allocation11], 4
          %s390 = int_to_ptr.vmem [resolvable:$true] %s389
          %395 = dma.hbm_to_vmem [thread:$0]  %s5, 2048, %s390, [#allocation12], 128, 128, 8
        $region32: #{tpu_custom_call.1} parent=11 // pred_fallthru
          _
        // Predicated region
        $region33: #{tpu_custom_call.1} parent=11 // pred_check
          %p396 = pneg %p184
        $region34: #{tpu_custom_call.1} parent=11 // pred_check_branch
          %398 = sbr.rel (%p396) target = $region36
        $region35: #{tpu_custom_call.1} parent=11 // pred_region
          %s400 = ssub.s32 64, 64
          %401 = vsyncadd [#allocation12], %s400
          %s402 = sshll.u32 [#allocation13], 4
          %s403 = int_to_ptr.vmem [resolvable:$true] %s402
          %408 = dma.hbm_to_vmem [thread:$0]  %s6, 64, %s403, [#allocation12], 16, 16, 1
        $region36: #{tpu_custom_call.1} parent=11 // pred_fallthru
          _
        // Predicated region
        $region37: #{tpu_custom_call.1} parent=11 // pred_check
          %p409 = pneg %p205
        $region38: #{tpu_custom_call.1} parent=11 // pred_check_branch
          %411 = sbr.rel (%p409) target = $region40
        $region39: #{tpu_custom_call.1} parent=11 // pred_region
          %s413 = ssub.s32 2048, 2048
          %414 = vsyncadd [#allocation15], %s413
          %s415 = sshll.u32 [#allocation14], 4
          %s416 = int_to_ptr.vmem [resolvable:$true] %s415
          %421 = dma.hbm_to_vmem [thread:$0]  %s7, 2048, %s416, [#allocation15], 128, 128, 8
        $region40: #{tpu_custom_call.1} parent=11 // pred_fallthru
          _
        // Predicated region
        $region41: #{tpu_custom_call.1} parent=11 // pred_check
          %p422 = pneg %p226
        $region42: #{tpu_custom_call.1} parent=11 // pred_check_branch
          %424 = sbr.rel (%p422) target = $region44
        $region43: #{tpu_custom_call.1} parent=11 // pred_region
          %s426 = ssub.s32 64, 64
          %427 = vsyncadd [#allocation15], %s426
          %s428 = sshll.u32 [#allocation16], 4
          %s429 = int_to_ptr.vmem [resolvable:$true] %s428
          %434 = dma.hbm_to_vmem [thread:$0]  %s8, 64, %s429, [#allocation15], 16, 16, 1
        $region44: #{tpu_custom_call.1} parent=11 // pred_fallthru
          _
        // Predicated region
        $region45: #{tpu_custom_call.1} parent=11 // pred_check
          %p435 = pneg %p247
        $region46: #{tpu_custom_call.1} parent=11 // pred_check_branch
          %437 = sbr.rel (%p435) target = $region48
        $region47: #{tpu_custom_call.1} parent=11 // pred_region
          %s439 = ssub.s32 512, 512
          %440 = vsyncadd [#allocation18], %s439
          %s441 = sshll.u32 [#allocation17], 4
          %s442 = int_to_ptr.vmem [resolvable:$true] %s441
          %447 = dma.hbm_to_vmem [thread:$0]  %s9, 512, %s442, [#allocation18], 128, 128, 8
        $region48: #{tpu_custom_call.1} parent=11 // pred_fallthru
          _
        // Predicated region
        $region49: #{tpu_custom_call.1} parent=11 // pred_check
          %p448 = pneg %p268
        $region50: #{tpu_custom_call.1} parent=11 // pred_check_branch
          %450 = sbr.rel (%p448) target = $region52
        $region51: #{tpu_custom_call.1} parent=11 // pred_region
          %s452 = ssub.s32 16, 16
          %453 = vsyncadd [#allocation18], %s452
          %s455 = sshll.u32 [#allocation19], 4
          %s456 = int_to_ptr.vmem [resolvable:$true] %s455
          %458 = dma.hbm_to_vmem [thread:$0]  %s10, 16, %s456, [#allocation18]
        $region52: #{tpu_custom_call.1} parent=11 // pred_fallthru
          _
      $region12: #{tpu_custom_call.1} parent=5 // pred_fallthru
        _
      %p459 = scmp.lt.s32.totalorder %s32, 2
      // Predicated region
      $region53: #{tpu_custom_call.1} parent=5 // pred_check
        %p460 = pneg %p459
      $region54: #{tpu_custom_call.1} parent=5 // pred_check_branch
        %462 = sbr.rel (%p460) target = $region56
      $region55: #{tpu_custom_call.1} parent=5 // pred_region
        // Predicated region
        $region57: #{tpu_custom_call.1} parent=55 // pred_check
          %p463 = pneg %p52
        $region58: #{tpu_custom_call.1} parent=55 // pred_check_branch
          %465 = sbr.rel (%p463) target = $region60
        $region59: #{tpu_custom_call.1} parent=55 // pred_region
          %s466 = sand.u32 %s42, 1
          %s467 = scalar_lea.sflag [#allocation3], %s466
          %s468 = sand.u32 %s42, 1
          %s469 = smul.addr %s468, 8
          %s470 = scalar_lea.vmem [#allocation2], %s469
          %s472 = ssub.s32 128, 128
          %473 = vsyncadd %s467, %s472
          %s474 = smul.addr %s32, 128
          %s475 = scalar_lea.hbm %s0, %s474
          %s477 = sshll.u32 %s470, 4
          %s478 = int_to_ptr.vmem [resolvable:$true] %s477
          %480 = dma.hbm_to_vmem [thread:$0]  %s475, 128, %s478, %s467
        $region60: #{tpu_custom_call.1} parent=55 // pred_fallthru
          _
        // Predicated region
        $region61: #{tpu_custom_call.1} parent=55 // pred_check
          %p481 = pneg %p288
        $region62: #{tpu_custom_call.1} parent=55 // pred_check_branch
          %483 = sbr.rel (%p481) target = $region64
        $region63: #{tpu_custom_call.1} parent=55 // pred_region
          %s484 = sand.u32 %s278, 1
          %s485 = scalar_lea.sflag [#allocation21], %s484
          %s486 = sand.u32 %s278, 1
          %s487 = smul.addr %s486, 8
          %s488 = scalar_lea.vmem [#allocation20], %s487
          %s490 = ssub.s32 128, 128
          %491 = vsyncadd %s485, %s490
          %s492 = smul.addr %s32, 128
          %s493 = scalar_lea.hbm %s11, %s492
          %s495 = sshll.u32 %s488, 4
          %s496 = int_to_ptr.vmem [resolvable:$true] %s495
          %498 = dma.hbm_to_vmem [thread:$0]  %s493, 128, %s496, %s485
        $region64: #{tpu_custom_call.1} parent=55 // pred_fallthru
          _
      $region56: #{tpu_custom_call.1} parent=5 // pred_fallthru
        _
      %p499 = scmp.le.s32.totalorder 1, %s32
      %p500 = scmp.lt.s32.totalorder %s32, 3
      %p501 = pnand %p499, %p500
      %p502 = pneg %p501
      // Predicated region
      $region65: #{tpu_custom_call.1} parent=5 // pred_check
        _
      $region66: #{tpu_custom_call.1} parent=5 // pred_check_branch
        %504 = sbr.rel (%p501) target = $region68
      $region67: #{tpu_custom_call.1} parent=5 // pred_region
        %s505 = ssub.s32 %s32, 1
        %s506 = sand.u32 %s45, 1
        %s507 = scalar_lea.sflag [#allocation3], %s506
        %s508 = sand.u32 %s45, 1
        %s509 = smul.addr %s508, 8
        %s510 = scalar_lea.vmem [#allocation2], %s509
        // Predicated region
        $region69: #{tpu_custom_call.1} parent=67 // pred_check
          %p511 = pneg %p58
        $region70: #{tpu_custom_call.1} parent=67 // pred_check_branch
          %513 = sbr.rel (%p511) target = $region72
        $region71: #{tpu_custom_call.1} parent=67 // pred_region
          %514 = dma.done %s507, 128
        $region72: #{tpu_custom_call.1} parent=67 // pred_fallthru
          _
        // Predicated region
        $region73: #{tpu_custom_call.1} parent=67 // pred_check
          %p515 = pneg %p79
        $region74: #{tpu_custom_call.1} parent=67 // pred_check_branch
          %517 = sbr.rel (%p515) target = $region76
        $region75: #{tpu_custom_call.1} parent=67 // pred_region
          %518 = dma.done [#allocation6], 16
        $region76: #{tpu_custom_call.1} parent=67 // pred_fallthru
          _
        // Predicated region
        $region77: #{tpu_custom_call.1} parent=67 // pred_check
          %p519 = pneg %p100
        $region78: #{tpu_custom_call.1} parent=67 // pred_check_branch
          %521 = sbr.rel (%p519) target = $region80
        $region79: #{tpu_custom_call.1} parent=67 // pred_region
          %522 = dma.done [#allocation6], 16
        $region80: #{tpu_custom_call.1} parent=67 // pred_fallthru
          _
        // Predicated region
        $region81: #{tpu_custom_call.1} parent=67 // pred_check
          %p523 = pneg %p121
        $region82: #{tpu_custom_call.1} parent=67 // pred_check_branch
          %525 = sbr.rel (%p523) target = $region84
        $region83: #{tpu_custom_call.1} parent=67 // pred_region
          %526 = dma.done [#allocation9], 2048
        $region84: #{tpu_custom_call.1} parent=67 // pred_fallthru
          _
        // Predicated region
        $region85: #{tpu_custom_call.1} parent=67 // pred_check
          %p527 = pneg %p142
        $region86: #{tpu_custom_call.1} parent=67 // pred_check_branch
          %529 = sbr.rel (%p527) target = $region88
        $region87: #{tpu_custom_call.1} parent=67 // pred_region
          %530 = dma.done [#allocation9], 64
        $region88: #{tpu_custom_call.1} parent=67 // pred_fallthru
          _
        // Predicated region
        $region89: #{tpu_custom_call.1} parent=67 // pred_check
          %p531 = pneg %p163
        $region90: #{tpu_custom_call.1} parent=67 // pred_check_branch
          %533 = sbr.rel (%p531) target = $region92
        $region91: #{tpu_custom_call.1} parent=67 // pred_region
          %534 = dma.done [#allocation12], 2048
        $region92: #{tpu_custom_call.1} parent=67 // pred_fallthru
          _
        // Predicated region
        $region93: #{tpu_custom_call.1} parent=67 // pred_check
          %p535 = pneg %p184
        $region94: #{tpu_custom_call.1} parent=67 // pred_check_branch
          %537 = sbr.rel (%p535) target = $region96
        $region95: #{tpu_custom_call.1} parent=67 // pred_region
          %538 = dma.done [#allocation12], 64
        $region96: #{tpu_custom_call.1} parent=67 // pred_fallthru
          _
        // Predicated region
        $region97: #{tpu_custom_call.1} parent=67 // pred_check
          %p539 = pneg %p205
        $region98: #{tpu_custom_call.1} parent=67 // pred_check_branch
          %541 = sbr.rel (%p539) target = $region100
        $region99: #{tpu_custom_call.1} parent=67 // pred_region
          %542 = dma.done [#allocation15], 2048
        $region100: #{tpu_custom_call.1} parent=67 // pred_fallthru
          _
        // Predicated region
        $region101: #{tpu_custom_call.1} parent=67 // pred_check
          %p543 = pneg %p226
        $region102: #{tpu_custom_call.1} parent=67 // pred_check_branch
          %545 = sbr.rel (%p543) target = $region104
        $region103: #{tpu_custom_call.1} parent=67 // pred_region
          %546 = dma.done [#allocation15], 64
        $region104: #{tpu_custom_call.1} parent=67 // pred_fallthru
          _
        // Predicated region
        $region105: #{tpu_custom_call.1} parent=67 // pred_check
          %p547 = pneg %p247
        $region106: #{tpu_custom_call.1} parent=67 // pred_check_branch
          %549 = sbr.rel (%p547) target = $region108
        $region107: #{tpu_custom_call.1} parent=67 // pred_region
          %550 = dma.done [#allocation18], 512
        $region108: #{tpu_custom_call.1} parent=67 // pred_fallthru
          _
        // Predicated region
        $region109: #{tpu_custom_call.1} parent=67 // pred_check
          %p551 = pneg %p268
        $region110: #{tpu_custom_call.1} parent=67 // pred_check_branch
          %553 = sbr.rel (%p551) target = $region112
        $region111: #{tpu_custom_call.1} parent=67 // pred_region
          %554 = dma.done [#allocation18], 16
        $region112: #{tpu_custom_call.1} parent=67 // pred_fallthru
          _
        %s555 = sand.u32 %s281, 1
        %s556 = scalar_lea.sflag [#allocation21], %s555
        %s557 = sand.u32 %s281, 1
        %s558 = smul.addr %s557, 8
        %s559 = scalar_lea.vmem [#allocation20], %s558
        // Predicated region
        $region113: #{tpu_custom_call.1} parent=67 // pred_check
          %p560 = pneg %p294
        $region114: #{tpu_custom_call.1} parent=67 // pred_check_branch
          %562 = sbr.rel (%p560) target = $region116
        $region115: #{tpu_custom_call.1} parent=67 // pred_region
          %563 = dma.done %s556, 128
        $region116: #{tpu_custom_call.1} parent=67 // pred_fallthru
          _
        %s564 = sand.u32 %s45, 1
        %s565 = scalar_lea.sflag [#allocation3], %s564
        %s566 = sand.u32 %s45, 1
        %s567 = smul.addr %s566, 8
        %s568 = scalar_lea.vmem [#allocation2], %s567
        %p569 = pneg %p58
        %p570 = pneg %p55
        %p571 = pneg %p79
        %p572 = pneg %p76
        %p573 = pneg %p100
        %p574 = pneg %p97
        %p575 = pneg %p121
        %p576 = pneg %p118
        %p577 = pneg %p142
        %p578 = pneg %p139
        %p579 = pneg %p163
        %p580 = pneg %p160
        %p581 = pneg %p184
        %p582 = pneg %p181
        %p583 = pneg %p205
        %p584 = pneg %p202
        %p585 = pneg %p226
        %p586 = pneg %p223
        %p587 = pneg %p247
        %p588 = pneg %p244
        %p589 = pneg %p268
        %p590 = pneg %p265
        %s591 = sand.u32 %s281, 1
        %s592 = scalar_lea.sflag [#allocation21], %s591
        %s593 = sand.u32 %s281, 1
        %s594 = smul.addr %s593, 8
        %s595 = scalar_lea.vmem [#allocation20], %s594
        %p596 = pneg %p294
        %p597 = pneg %p291
        %p598 = pneg %p320
        %p599 = pneg %p317
        %s600 = sand.u32 %s307, 1
        %s601 = scalar_lea.sflag [#allocation4], %s600
        %s602 = sand.u32 %s307, 1
        %s603 = smul.addr %s602, 8
        %s604 = scalar_lea.vmem [#allocation22], %s603
        %v605 = vld [vmem:[%s510] sm:$0xff]
        %v606 = vld [vmem:[#allocation5] sm:$0x1]
        %v607 = vld [vmem:[#allocation7] sm:$0x1]
        %vm608 = vcmask 261120
        %v609 = vsel %vm608, %v605, 0.0
        %610 = vadd.xlane.f32.xlu0 %v609
        %v611 = vpop.xlane.xlu0 %610
        %v612 = vrcp.pop 32.0
        %v613 = vmul.f32 %v611, %v612
        %v614 = vsub.f32 %v605, %v613
        %v615 = vmul.f32 %v614, %v614
        %v616 = vsel %vm608, %v615, 0.0
        %617 = vadd.xlane.f32.xlu0 %v616
        %v618 = vpop.xlane.xlu0 %617
        %v619 = vmul.f32 %v618, %v612
        %v620 = vadd.f32 %v619, 1e-06
        %v621 = vrsqrt.pop %v620
        %v622 = vmul.f32 %v614, %v621
        %v624 = vlaneseq
        %v625 = vshrl.u32 %v624, 7
        %v626 = vsub.s32 0, %v625
        %v627 = vrot.slane %v606, %v626
        %v629 = vmul.f32 %v622, %v627
        %v631 = vlaneseq
        %v632 = vshrl.u32 %v631, 7
        %v633 = vsub.s32 0, %v632
        %v634 = vrot.slane %v607, %v633
        %v636 = vadd.f32 %v629, %v634
        %v637 = vld [vmem:[%s559] sm:$0xff]
        %vm638 = vcmp.ne.s32.totalorder %v637, 0
        %v639 = vld [vmem:[#allocation8] sm:$0xff]
        %v640 = vld [vmem:[#allocation8 + $0x8] sm:$0xff]
        %v641 = vld [vmem:[#allocation8 + $0x10] sm:$0xff]
        %v642 = vld [vmem:[#allocation8 + $0x18] sm:$0xff]
        %v643 = vld [vmem:[#allocation10] sm:$0x1]
        %v645 = vlaneseq
        %v646 = vshrl.u32 %v645, 7
        %v647 = vsub.s32 0, %v646
        %v648 = vrot.slane %v643, %v647
        %v651 = vsel %vm608, %v636, 0
        %653 = vmatprep.subr.mxu0 0.0
        %654 = vmatpush1.msra.mxu0 %v639
        %655 = vmatprep.subr.mxu0 0.0
        %656 = vmatpush1.msra.mxu0 %v640
        %657 = vmatprep.subr.mxu0 0.0
        %658 = vmatpush1.msra.mxu0 %v641
        %659 = vmatprep.subr.mxu0 0.0
        %660 = vmatpush1.msra.mxu0 %v642
        %661 = vmatprep.subr.mxu0 0.0
        %662 = vmatpush1.msra.mxu0 0.0
        %663 = vmatprep.subr.mxu0 0.0
        %664 = vmatpush1.msra.mxu0 0.0
        %665 = vmatprep.subr.mxu0 0.0
        %666 = vmatpush1.msra.mxu0 0.0
        %667 = vmatprep.subr.mxu0 0.0
        %668 = vmatpush1.msra.mxu0 0.0
        %669 = vmatprep.subr.mxu0 0.0
        %670 = vmatpush1.msra.mxu0 0.0
        %671 = vmatprep.subr.mxu0 0.0
        %672 = vmatpush1.msra.mxu0 0.0
        %673 = vmatprep.subr.mxu0 0.0
        %674 = vmatpush1.msra.mxu0 0.0
        %675 = vmatprep.subr.mxu0 0.0
        %676 = vmatpush1.msra.mxu0 0.0
        %677 = vmatprep.subr.mxu0 0.0
        %678 = vmatpush1.msra.mxu0 0.0
        %679 = vmatprep.subr.mxu0 0.0
        %680 = vmatpush1.msra.mxu0 0.0
        %681 = vmatprep.subr.mxu0 0.0
        %682 = vmatpush1.msra.mxu0 0.0
        %683 = vmatprep.subr.mxu0 0.0
        %684 = vmatpush1.msra.mxu0 0.0
        %685 = vmatprep.subr.mxu0 0.0
        %686 = vmatpush1.msra.mxu0 0.0
        %687 = vmatprep.subr.mxu0 0.0
        %688 = vmatpush1.msra.mxu0 0.0
        %689 = vmatprep.subr.mxu0 0.0
        %690 = vmatpush1.msra.mxu0 0.0
        %691 = vmatprep.subr.mxu0 0.0
        %692 = vmatpush1.msra.mxu0 0.0
        %693 = vmatprep.subr.mxu0 0.0
        %694 = vmatpush1.msra.mxu0 0.0
        %695 = vmatprep.subr.mxu0 0.0
        %696 = vmatpush1.msra.mxu0 0.0
        %697 = vmatprep.subr.mxu0 0.0
        %698 = vmatpush1.msra.mxu0 0.0
        %699 = vmatprep.subr.mxu0 0.0
        %700 = vmatpush1.msra.mxu0 0.0
        %701 = vmatprep.subr.mxu0 0.0
        %702 = vmatpush1.msra.mxu0 0.0
        %703 = vmatprep.subr.mxu0 0.0
        %704 = vmatpush1.msra.mxu0 0.0
        %705 = vmatprep.subr.mxu0 0.0
        %706 = vmatpush1.msra.mxu0 0.0
        %707 = vmatprep.subr.mxu0 0.0
        %708 = vmatpush1.msra.mxu0 0.0
        %709 = vmatprep.subr.mxu0 0.0
        %710 = vmatpush1.msra.mxu0 0.0
        %711 = vmatprep.subr.mxu0 0.0
        %712 = vmatpush1.msra.mxu0 0.0
        %713 = vmatprep.subr.mxu0 0.0
        %714 = vmatpush1.msra.mxu0 0.0
        %715 = vmatprep.subr.mxu0 0.0
        %716 = vmatpush1.msra.mxu0 0.0
        %717 = vmatprep.mubr.f32.mxu0 0.0
        %718 = vmatmul.mubr.f32.gmra.mrb[0].mxu0 %v651
        %v719 = vpop.f32.mrb[0].mxu0
        %v720 = vadd.f32 %v648, %v719
        %v721 = vpop.f32.mrb[0].mxu0
        %722 = vdwg.mxu0
        %v723 = vld [vmem:[#allocation11] sm:$0xff]
        %v724 = vld [vmem:[#allocation11 + $0x8] sm:$0xff]
        %v725 = vld [vmem:[#allocation11 + $0x10] sm:$0xff]
        %v726 = vld [vmem:[#allocation11 + $0x18] sm:$0xff]
        %v727 = vld [vmem:[#allocation13] sm:$0x1]
        %v729 = vlaneseq
        %v730 = vshrl.u32 %v729, 7
        %v731 = vsub.s32 0, %v730
        %v732 = vrot.slane %v727, %v731
        %734 = vmatprep.subr.mxu0 0.0
        %735 = vmatpush1.msra.mxu0 %v723
        %736 = vmatprep.subr.mxu0 0.0
        %737 = vmatpush1.msra.mxu0 %v724
        %738 = vmatprep.subr.mxu0 0.0
        %739 = vmatpush1.msra.mxu0 %v725
        %740 = vmatprep.subr.mxu0 0.0
        %741 = vmatpush1.msra.mxu0 %v726
        %742 = vmatprep.subr.mxu0 0.0
        %743 = vmatpush1.msra.mxu0 0.0
        %744 = vmatprep.subr.mxu0 0.0
        %745 = vmatpush1.msra.mxu0 0.0
        %746 = vmatprep.subr.mxu0 0.0
        %747 = vmatpush1.msra.mxu0 0.0
        %748 = vmatprep.subr.mxu0 0.0
        %749 = vmatpush1.msra.mxu0 0.0
        %750 = vmatprep.subr.mxu0 0.0
        %751 = vmatpush1.msra.mxu0 0.0
        %752 = vmatprep.subr.mxu0 0.0
        %753 = vmatpush1.msra.mxu0 0.0
        %754 = vmatprep.subr.mxu0 0.0
        %755 = vmatpush1.msra.mxu0 0.0
        %756 = vmatprep.subr.mxu0 0.0
        %757 = vmatpush1.msra.mxu0 0.0
        %758 = vmatprep.subr.mxu0 0.0
        %759 = vmatpush1.msra.mxu0 0.0
        %760 = vmatprep.subr.mxu0 0.0
        %761 = vmatpush1.msra.mxu0 0.0
        %762 = vmatprep.subr.mxu0 0.0
        %763 = vmatpush1.msra.mxu0 0.0
        %764 = vmatprep.subr.mxu0 0.0
        %765 = vmatpush1.msra.mxu0 0.0
        %766 = vmatprep.subr.mxu0 0.0
        %767 = vmatpush1.msra.mxu0 0.0
        %768 = vmatprep.subr.mxu0 0.0
        %769 = vmatpush1.msra.mxu0 0.0
        %770 = vmatprep.subr.mxu0 0.0
        %771 = vmatpush1.msra.mxu0 0.0
        %772 = vmatprep.subr.mxu0 0.0
        %773 = vmatpush1.msra.mxu0 0.0
        %774 = vmatprep.subr.mxu0 0.0
        %775 = vmatpush1.msra.mxu0 0.0
        %776 = vmatprep.subr.mxu0 0.0
        %777 = vmatpush1.msra.mxu0 0.0
        %778 = vmatprep.subr.mxu0 0.0
        %779 = vmatpush1.msra.mxu0 0.0
        %780 = vmatprep.subr.mxu0 0.0
        %781 = vmatpush1.msra.mxu0 0.0
        %782 = vmatprep.subr.mxu0 0.0
        %783 = vmatpush1.msra.mxu0 0.0
        %784 = vmatprep.subr.mxu0 0.0
        %785 = vmatpush1.msra.mxu0 0.0
        %786 = vmatprep.subr.mxu0 0.0
        %787 = vmatpush1.msra.mxu0 0.0
        %788 = vmatprep.subr.mxu0 0.0
        %789 = vmatpush1.msra.mxu0 0.0
        %790 = vmatprep.subr.mxu0 0.0
        %791 = vmatpush1.msra.mxu0 0.0
        %792 = vmatprep.subr.mxu0 0.0
        %793 = vmatpush1.msra.mxu0 0.0
        %794 = vmatprep.subr.mxu0 0.0
        %795 = vmatpush1.msra.mxu0 0.0
        %796 = vmatprep.subr.mxu0 0.0
        %797 = vmatpush1.msra.mxu0 0.0
        %798 = vmatprep.mubr.f32.mxu0 0.0
        %799 = vmatmul.mubr.f32.gmra.mrb[0].mxu0 %v651
        %v800 = vpop.f32.mrb[0].mxu0
        %v801 = vadd.f32 %v732, %v800
        %v802 = vpop.f32.mrb[0].mxu0
        %803 = vdwg.mxu0
        %v804 = vld [vmem:[#allocation14] sm:$0xff]
        %v805 = vld [vmem:[#allocation14 + $0x8] sm:$0xff]
        %v806 = vld [vmem:[#allocation14 + $0x10] sm:$0xff]
        %v807 = vld [vmem:[#allocation14 + $0x18] sm:$0xff]
        %v808 = vld [vmem:[#allocation16] sm:$0x1]
        %v810 = vlaneseq
        %v811 = vshrl.u32 %v810, 7
        %v812 = vsub.s32 0, %v811
        %v813 = vrot.slane %v808, %v812
        %815 = vmatprep.subr.mxu0 0.0
        %816 = vmatpush1.msra.mxu0 %v804
        %817 = vmatprep.subr.mxu0 0.0
        %818 = vmatpush1.msra.mxu0 %v805
        %819 = vmatprep.subr.mxu0 0.0
        %820 = vmatpush1.msra.mxu0 %v806
        %821 = vmatprep.subr.mxu0 0.0
        %822 = vmatpush1.msra.mxu0 %v807
        %823 = vmatprep.subr.mxu0 0.0
        %824 = vmatpush1.msra.mxu0 0.0
        %825 = vmatprep.subr.mxu0 0.0
        %826 = vmatpush1.msra.mxu0 0.0
        %827 = vmatprep.subr.mxu0 0.0
        %828 = vmatpush1.msra.mxu0 0.0
        %829 = vmatprep.subr.mxu0 0.0
        %830 = vmatpush1.msra.mxu0 0.0
        %831 = vmatprep.subr.mxu0 0.0
        %832 = vmatpush1.msra.mxu0 0.0
        %833 = vmatprep.subr.mxu0 0.0
        %834 = vmatpush1.msra.mxu0 0.0
        %835 = vmatprep.subr.mxu0 0.0
        %836 = vmatpush1.msra.mxu0 0.0
        %837 = vmatprep.subr.mxu0 0.0
        %838 = vmatpush1.msra.mxu0 0.0
        %839 = vmatprep.subr.mxu0 0.0
        %840 = vmatpush1.msra.mxu0 0.0
        %841 = vmatprep.subr.mxu0 0.0
        %842 = vmatpush1.msra.mxu0 0.0
        %843 = vmatprep.subr.mxu0 0.0
        %844 = vmatpush1.msra.mxu0 0.0
        %845 = vmatprep.subr.mxu0 0.0
        %846 = vmatpush1.msra.mxu0 0.0
        %847 = vmatprep.subr.mxu0 0.0
        %848 = vmatpush1.msra.mxu0 0.0
        %849 = vmatprep.subr.mxu0 0.0
        %850 = vmatpush1.msra.mxu0 0.0
        %851 = vmatprep.subr.mxu0 0.0
        %852 = vmatpush1.msra.mxu0 0.0
        %853 = vmatprep.subr.mxu0 0.0
        %854 = vmatpush1.msra.mxu0 0.0
        %855 = vmatprep.subr.mxu0 0.0
        %856 = vmatpush1.msra.mxu0 0.0
        %857 = vmatprep.subr.mxu0 0.0
        %858 = vmatpush1.msra.mxu0 0.0
        %859 = vmatprep.subr.mxu0 0.0
        %860 = vmatpush1.msra.mxu0 0.0
        %861 = vmatprep.subr.mxu0 0.0
        %862 = vmatpush1.msra.mxu0 0.0
        %863 = vmatprep.subr.mxu0 0.0
        %864 = vmatpush1.msra.mxu0 0.0
        %865 = vmatprep.subr.mxu0 0.0
        %866 = vmatpush1.msra.mxu0 0.0
        %867 = vmatprep.subr.mxu0 0.0
        %868 = vmatpush1.msra.mxu0 0.0
        %869 = vmatprep.subr.mxu0 0.0
        %870 = vmatpush1.msra.mxu0 0.0
        %871 = vmatprep.subr.mxu0 0.0
        %872 = vmatpush1.msra.mxu0 0.0
        %873 = vmatprep.subr.mxu0 0.0
        %874 = vmatpush1.msra.mxu0 0.0
        %875 = vmatprep.subr.mxu0 0.0
        %876 = vmatpush1.msra.mxu0 0.0
        %877 = vmatprep.subr.mxu0 0.0
        %878 = vmatpush1.msra.mxu0 0.0
        %879 = vmatprep.mubr.f32.mxu0 0.0
        %880 = vmatmul.mubr.f32.gmra.mrb[0].mxu0 %v651
        %v881 = vpop.f32.mrb[0].mxu0
        %v882 = vadd.f32 %v813, %v881
        %v883 = vpop.f32.mrb[0].mxu0
        %884 = vdwg.mxu0
        %vm885 = vcmask 64512
        %v887 = vsel %vm885, %v720, 0
        %v890 = vsel %vm885, %v801, 0
        %892 = vmatprep.subr.mxu0 0.0
        %893 = vmatpush1.xpose.msra.mxu0 %v890
        %894 = vmatprep.subr.mxu0 0.0
        %895 = vmatpush1.xpose.msra.mxu0 0.0
        %896 = vmatprep.subr.mxu0 0.0
        %897 = vmatpush1.xpose.msra.mxu0 0.0
        %898 = vmatprep.subr.mxu0 0.0
        %899 = vmatpush1.xpose.msra.mxu0 0.0
        %900 = vmatprep.subr.mxu0 0.0
        %901 = vmatpush1.xpose.msra.mxu0 0.0
        %902 = vmatprep.subr.mxu0 0.0
        %903 = vmatpush1.xpose.msra.mxu0 0.0
        %904 = vmatprep.subr.mxu0 0.0
        %905 = vmatpush1.xpose.msra.mxu0 0.0
        %906 = vmatprep.subr.mxu0 0.0
        %907 = vmatpush1.xpose.msra.mxu0 0.0
        %908 = vmatprep.subr.mxu0 0.0
        %909 = vmatpush1.xpose.msra.mxu0 0.0
        %910 = vmatprep.subr.mxu0 0.0
        %911 = vmatpush1.xpose.msra.mxu0 0.0
        %912 = vmatprep.subr.mxu0 0.0
        %913 = vmatpush1.xpose.msra.mxu0 0.0
        %914 = vmatprep.subr.mxu0 0.0
        %915 = vmatpush1.xpose.msra.mxu0 0.0
        %916 = vmatprep.subr.mxu0 0.0
        %917 = vmatpush1.xpose.msra.mxu0 0.0
        %918 = vmatprep.subr.mxu0 0.0
        %919 = vmatpush1.xpose.msra.mxu0 0.0
        %920 = vmatprep.subr.mxu0 0.0
        %921 = vmatpush1.xpose.msra.mxu0 0.0
        %922 = vmatprep.subr.mxu0 0.0
        %923 = vmatpush1.xpose.msra.mxu0 0.0
        %924 = vmatprep.subr.mxu0 0.0
        %925 = vmatpush1.xpose.msra.mxu0 0.0
        %926 = vmatprep.subr.mxu0 0.0
        %927 = vmatpush1.xpose.msra.mxu0 0.0
        %928 = vmatprep.subr.mxu0 0.0
        %929 = vmatpush1.xpose.msra.mxu0 0.0
        %930 = vmatprep.subr.mxu0 0.0
        %931 = vmatpush1.xpose.msra.mxu0 0.0
        %932 = vmatprep.subr.mxu0 0.0
        %933 = vmatpush1.xpose.msra.mxu0 0.0
        %934 = vmatprep.subr.mxu0 0.0
        %935 = vmatpush1.xpose.msra.mxu0 0.0
        %936 = vmatprep.subr.mxu0 0.0
        %937 = vmatpush1.xpose.msra.mxu0 0.0
        %938 = vmatprep.subr.mxu0 0.0
        %939 = vmatpush1.xpose.msra.mxu0 0.0
        %940 = vmatprep.subr.mxu0 0.0
        %941 = vmatpush1.xpose.msra.mxu0 0.0
        %942 = vmatprep.subr.mxu0 0.0
        %943 = vmatpush1.xpose.msra.mxu0 0.0
        %944 = vmatprep.subr.mxu0 0.0
        %945 = vmatpush1.xpose.msra.mxu0 0.0
        %946 = vmatprep.subr.mxu0 0.0
        %947 = vmatpush1.xpose.msra.mxu0 0.0
        %948 = vmatprep.subr.mxu0 0.0
        %949 = vmatpush1.xpose.msra.mxu0 0.0
        %950 = vmatprep.subr.mxu0 0.0
        %951 = vmatpush1.xpose.msra.mxu0 0.0
        %952 = vmatprep.subr.mxu0 0.0
        %953 = vmatpush1.xpose.msra.mxu0 0.0
        %954 = vmatprep.subr.mxu0 0.0
        %955 = vmatpush1.xpose.msra.mxu0 0.0
        %956 = vmatprep.mubr.f32.mxu0 0.0
        %957 = vmatmul.mubr.f32.gmra.mrb[0].mxu0 %v887
        %v958 = vpop.f32.mrb[0].mxu0
        %v959 = vadd.f32 0.0, %v958
        %v960 = vpop.f32.mrb[0].mxu0
        %961 = vdwg.mxu0
        %v962 = vmul.f32 %v959, 0.35355338
        %v963 = vsel %vm638, -1e+30, %v962
        %v964 = vsel %vm885, %v963, -inf
        %965 = vmax.xlane.f32.xlu0 %v964
        %v966 = vpop.xlane.xlu0 %965
        %v967 = vsub.f32 %v963, %v966
        %v968 = vmul.f32 %v967, 1.442695
        %v969 = vpow.pop %v968
        %v970 = vsel %vm885, %v969, 0.0
        %971 = vadd.xlane.f32.xlu0 %v970
        %v972 = vpop.xlane.xlu0 %971
        %v973 = vrcp.pop %v972
        %v974 = vmul.f32 %v969, %v973
        %v976 = vsel %vm885, %v974, 0
        %978 = vmatprep.subr.mxu0 0.0
        %979 = vmatpush1.msra.mxu0 %v882
        %980 = vmatprep.subr.mxu0 0.0
        %981 = vmatpush1.msra.mxu0 0.0
        %982 = vmatprep.subr.mxu0 0.0
        %983 = vmatpush1.msra.mxu0 0.0
        %984 = vmatprep.subr.mxu0 0.0
        %985 = vmatpush1.msra.mxu0 0.0
        %986 = vmatprep.subr.mxu0 0.0
        %987 = vmatpush1.msra.mxu0 0.0
        %988 = vmatprep.subr.mxu0 0.0
        %989 = vmatpush1.msra.mxu0 0.0
        %990 = vmatprep.subr.mxu0 0.0
        %991 = vmatpush1.msra.mxu0 0.0
        %992 = vmatprep.subr.mxu0 0.0
        %993 = vmatpush1.msra.mxu0 0.0
        %994 = vmatprep.subr.mxu0 0.0
        %995 = vmatpush1.msra.mxu0 0.0
        %996 = vmatprep.subr.mxu0 0.0
        %997 = vmatpush1.msra.mxu0 0.0
        %998 = vmatprep.subr.mxu0 0.0
        %999 = vmatpush1.msra.mxu0 0.0
        %1000 = vmatprep.subr.mxu0 0.0
        %1001 = vmatpush1.msra.mxu0 0.0
        %1002 = vmatprep.subr.mxu0 0.0
        %1003 = vmatpush1.msra.mxu0 0.0
        %1004 = vmatprep.subr.mxu0 0.0
        %1005 = vmatpush1.msra.mxu0 0.0
        %1006 = vmatprep.subr.mxu0 0.0
        %1007 = vmatpush1.msra.mxu0 0.0
        %1008 = vmatprep.subr.mxu0 0.0
        %1009 = vmatpush1.msra.mxu0 0.0
        %1010 = vmatprep.subr.mxu0 0.0
        %1011 = vmatpush1.msra.mxu0 0.0
        %1012 = vmatprep.subr.mxu0 0.0
        %1013 = vmatpush1.msra.mxu0 0.0
        %1014 = vmatprep.subr.mxu0 0.0
        %1015 = vmatpush1.msra.mxu0 0.0
        %1016 = vmatprep.subr.mxu0 0.0
        %1017 = vmatpush1.msra.mxu0 0.0
        %1018 = vmatprep.subr.mxu0 0.0
        %1019 = vmatpush1.msra.mxu0 0.0
        %1020 = vmatprep.subr.mxu0 0.0
        %1021 = vmatpush1.msra.mxu0 0.0
        %1022 = vmatprep.subr.mxu0 0.0
        %1023 = vmatpush1.msra.mxu0 0.0
        %1024 = vmatprep.subr.mxu0 0.0
        %1025 = vmatpush1.msra.mxu0 0.0
        %1026 = vmatprep.subr.mxu0 0.0
        %1027 = vmatpush1.msra.mxu0 0.0
        %1028 = vmatprep.subr.mxu0 0.0
        %1029 = vmatpush1.msra.mxu0 0.0
        %1030 = vmatprep.subr.mxu0 0.0
        %1031 = vmatpush1.msra.mxu0 0.0
        %1032 = vmatprep.subr.mxu0 0.0
        %1033 = vmatpush1.msra.mxu0 0.0
        %1034 = vmatprep.subr.mxu0 0.0
        %1035 = vmatpush1.msra.mxu0 0.0
        %1036 = vmatprep.subr.mxu0 0.0
        %1037 = vmatpush1.msra.mxu0 0.0
        %1038 = vmatprep.subr.mxu0 0.0
        %1039 = vmatpush1.msra.mxu0 0.0
        %1040 = vmatprep.subr.mxu0 0.0
        %1041 = vmatpush1.msra.mxu0 0.0
        %1042 = vmatprep.mubr.f32.mxu0 0.0
        %1043 = vmatmul.mubr.f32.gmra.mrb[0].mxu0 %v976
        %v1044 = vpop.f32.mrb[0].mxu0
        %v1045 = vadd.f32 0.0, %v1044
        %v1046 = vpop.f32.mrb[0].mxu0
        %1047 = vdwg.mxu0
        %v1048 = vld [vmem:[#allocation17] sm:$0xff]
        %s1049 = scalar_lea.vmem [#allocation8], 32
        %v1050 = vld [vmem:[%s1049] sm:$0xff]
        %v1051 = vld [vmem:[%s1049 + $0x8] sm:$0xff]
        %v1052 = vld [vmem:[%s1049 + $0x10] sm:$0xff]
        %v1053 = vld [vmem:[%s1049 + $0x18] sm:$0xff]
        %s1054 = scalar_lea.vmem [#allocation10], 1
        %v1055 = vld [vmem:[%s1054] sm:$0x1]
        %v1057 = vlaneseq
        %v1058 = vshrl.u32 %v1057, 7
        %v1059 = vsub.s32 0, %v1058
        %v1060 = vrot.slane %v1055, %v1059
        %1062 = vmatprep.subr.mxu0 0.0
        %1063 = vmatpush1.msra.mxu0 %v1050
        %1064 = vmatprep.subr.mxu0 0.0
        %1065 = vmatpush1.msra.mxu0 %v1051
        %1066 = vmatprep.subr.mxu0 0.0
        %1067 = vmatpush1.msra.mxu0 %v1052
        %1068 = vmatprep.subr.mxu0 0.0
        %1069 = vmatpush1.msra.mxu0 %v1053
        %1070 = vmatprep.subr.mxu0 0.0
        %1071 = vmatpush1.msra.mxu0 0.0
        %1072 = vmatprep.subr.mxu0 0.0
        %1073 = vmatpush1.msra.mxu0 0.0
        %1074 = vmatprep.subr.mxu0 0.0
        %1075 = vmatpush1.msra.mxu0 0.0
        %1076 = vmatprep.subr.mxu0 0.0
        %1077 = vmatpush1.msra.mxu0 0.0
        %1078 = vmatprep.subr.mxu0 0.0
        %1079 = vmatpush1.msra.mxu0 0.0
        %1080 = vmatprep.subr.mxu0 0.0
        %1081 = vmatpush1.msra.mxu0 0.0
        %1082 = vmatprep.subr.mxu0 0.0
        %1083 = vmatpush1.msra.mxu0 0.0
        %1084 = vmatprep.subr.mxu0 0.0
        %1085 = vmatpush1.msra.mxu0 0.0
        %1086 = vmatprep.subr.mxu0 0.0
        %1087 = vmatpush1.msra.mxu0 0.0
        %1088 = vmatprep.subr.mxu0 0.0
        %1089 = vmatpush1.msra.mxu0 0.0
        %1090 = vmatprep.subr.mxu0 0.0
        %1091 = vmatpush1.msra.mxu0 0.0
        %1092 = vmatprep.subr.mxu0 0.0
        %1093 = vmatpush1.msra.mxu0 0.0
        %1094 = vmatprep.subr.mxu0 0.0
        %1095 = vmatpush1.msra.mxu0 0.0
        %1096 = vmatprep.subr.mxu0 0.0
        %1097 = vmatpush1.msra.mxu0 0.0
        %1098 = vmatprep.subr.mxu0 0.0
        %1099 = vmatpush1.msra.mxu0 0.0
        %1100 = vmatprep.subr.mxu0 0.0
        %1101 = vmatpush1.msra.mxu0 0.0
        %1102 = vmatprep.subr.mxu0 0.0
        %1103 = vmatpush1.msra.mxu0 0.0
        %1104 = vmatprep.subr.mxu0 0.0
        %1105 = vmatpush1.msra.mxu0 0.0
        %1106 = vmatprep.subr.mxu0 0.0
        %1107 = vmatpush1.msra.mxu0 0.0
        %1108 = vmatprep.subr.mxu0 0.0
        %1109 = vmatpush1.msra.mxu0 0.0
        %1110 = vmatprep.subr.mxu0 0.0
        %1111 = vmatpush1.msra.mxu0 0.0
        %1112 = vmatprep.subr.mxu0 0.0
        %1113 = vmatpush1.msra.mxu0 0.0
        %1114 = vmatprep.subr.mxu0 0.0
        %1115 = vmatpush1.msra.mxu0 0.0
        %1116 = vmatprep.subr.mxu0 0.0
        %1117 = vmatpush1.msra.mxu0 0.0
        %1118 = vmatprep.subr.mxu0 0.0
        %1119 = vmatpush1.msra.mxu0 0.0
        %1120 = vmatprep.subr.mxu0 0.0
        %1121 = vmatpush1.msra.mxu0 0.0
        %1122 = vmatprep.subr.mxu0 0.0
        %1123 = vmatpush1.msra.mxu0 0.0
        %1124 = vmatprep.subr.mxu0 0.0
        %1125 = vmatpush1.msra.mxu0 0.0
        %1126 = vmatprep.mubr.f32.mxu0 0.0
        %1127 = vmatmul.mubr.f32.gmra.mrb[0].mxu0 %v651
        %v1128 = vpop.f32.mrb[0].mxu0
        %v1129 = vadd.f32 %v1060, %v1128
        %v1130 = vpop.f32.mrb[0].mxu0
        %1131 = vdwg.mxu0
        %s1132 = scalar_lea.vmem [#allocation11], 32
        %v1133 = vld [vmem:[%s1132] sm:$0xff]
        %v1134 = vld [vmem:[%s1132 + $0x8] sm:$0xff]
        %v1135 = vld [vmem:[%s1132 + $0x10] sm:$0xff]
        %v1136 = vld [vmem:[%s1132 + $0x18] sm:$0xff]
        %s1137 = scalar_lea.vmem [#allocation13], 1
        %v1138 = vld [vmem:[%s1137] sm:$0x1]
        %v1140 = vlaneseq
        %v1141 = vshrl.u32 %v1140, 7
        %v1142 = vsub.s32 0, %v1141
        %v1143 = vrot.slane %v1138, %v1142
        %1145 = vmatprep.subr.mxu0 0.0
        %1146 = vmatpush1.msra.mxu0 %v1133
        %1147 = vmatprep.subr.mxu0 0.0
        %1148 = vmatpush1.msra.mxu0 %v1134
        %1149 = vmatprep.subr.mxu0 0.0
        %1150 = vmatpush1.msra.mxu0 %v1135
        %1151 = vmatprep.subr.mxu0 0.0
        %1152 = vmatpush1.msra.mxu0 %v1136
        %1153 = vmatprep.subr.mxu0 0.0
        %1154 = vmatpush1.msra.mxu0 0.0
        %1155 = vmatprep.subr.mxu0 0.0
        %1156 = vmatpush1.msra.mxu0 0.0
        %1157 = vmatprep.subr.mxu0 0.0
        %1158 = vmatpush1.msra.mxu0 0.0
        %1159 = vmatprep.subr.mxu0 0.0
        %1160 = vmatpush1.msra.mxu0 0.0
        %1161 = vmatprep.subr.mxu0 0.0
        %1162 = vmatpush1.msra.mxu0 0.0
        %1163 = vmatprep.subr.mxu0 0.0
        %1164 = vmatpush1.msra.mxu0 0.0
        %1165 = vmatprep.subr.mxu0 0.0
        %1166 = vmatpush1.msra.mxu0 0.0
        %1167 = vmatprep.subr.mxu0 0.0
        %1168 = vmatpush1.msra.mxu0 0.0
        %1169 = vmatprep.subr.mxu0 0.0
        %1170 = vmatpush1.msra.mxu0 0.0
        %1171 = vmatprep.subr.mxu0 0.0
        %1172 = vmatpush1.msra.mxu0 0.0
        %1173 = vmatprep.subr.mxu0 0.0
        %1174 = vmatpush1.msra.mxu0 0.0
        %1175 = vmatprep.subr.mxu0 0.0
        %1176 = vmatpush1.msra.mxu0 0.0
        %1177 = vmatprep.subr.mxu0 0.0
        %1178 = vmatpush1.msra.mxu0 0.0
        %1179 = vmatprep.subr.mxu0 0.0
        %1180 = vmatpush1.msra.mxu0 0.0
        %1181 = vmatprep.subr.mxu0 0.0
        %1182 = vmatpush1.msra.mxu0 0.0
        %1183 = vmatprep.subr.mxu0 0.0
        %1184 = vmatpush1.msra.mxu0 0.0
        %1185 = vmatprep.subr.mxu0 0.0
        %1186 = vmatpush1.msra.mxu0 0.0
        %1187 = vmatprep.subr.mxu0 0.0
        %1188 = vmatpush1.msra.mxu0 0.0
        %1189 = vmatprep.subr.mxu0 0.0
        %1190 = vmatpush1.msra.mxu0 0.0
        %1191 = vmatprep.subr.mxu0 0.0
        %1192 = vmatpush1.msra.mxu0 0.0
        %1193 = vmatprep.subr.mxu0 0.0
        %1194 = vmatpush1.msra.mxu0 0.0
        %1195 = vmatprep.subr.mxu0 0.0
        %1196 = vmatpush1.msra.mxu0 0.0
        %1197 = vmatprep.subr.mxu0 0.0
        %1198 = vmatpush1.msra.mxu0 0.0
        %1199 = vmatprep.subr.mxu0 0.0
        %1200 = vmatpush1.msra.mxu0 0.0
        %1201 = vmatprep.subr.mxu0 0.0
        %1202 = vmatpush1.msra.mxu0 0.0
        %1203 = vmatprep.subr.mxu0 0.0
        %1204 = vmatpush1.msra.mxu0 0.0
        %1205 = vmatprep.subr.mxu0 0.0
        %1206 = vmatpush1.msra.mxu0 0.0
        %1207 = vmatprep.subr.mxu0 0.0
        %1208 = vmatpush1.msra.mxu0 0.0
        %1209 = vmatprep.mubr.f32.mxu0 0.0
        %1210 = vmatmul.mubr.f32.gmra.mrb[0].mxu0 %v651
        %v1211 = vpop.f32.mrb[0].mxu0
        %v1212 = vadd.f32 %v1143, %v1211
        %v1213 = vpop.f32.mrb[0].mxu0
        %1214 = vdwg.mxu0
        %s1215 = scalar_lea.vmem [#allocation14], 32
        %v1216 = vld [vmem:[%s1215] sm:$0xff]
        %v1217 = vld [vmem:[%s1215 + $0x8] sm:$0xff]
        %v1218 = vld [vmem:[%s1215 + $0x10] sm:$0xff]
        %v1219 = vld [vmem:[%s1215 + $0x18] sm:$0xff]
        %s1220 = scalar_lea.vmem [#allocation16], 1
        %v1221 = vld [vmem:[%s1220] sm:$0x1]
        %v1223 = vlaneseq
        %v1224 = vshrl.u32 %v1223, 7
        %v1225 = vsub.s32 0, %v1224
        %v1226 = vrot.slane %v1221, %v1225
        %1228 = vmatprep.subr.mxu0 0.0
        %1229 = vmatpush1.msra.mxu0 %v1216
        %1230 = vmatprep.subr.mxu0 0.0
        %1231 = vmatpush1.msra.mxu0 %v1217
        %1232 = vmatprep.subr.mxu0 0.0
        %1233 = vmatpush1.msra.mxu0 %v1218
        %1234 = vmatprep.subr.mxu0 0.0
        %1235 = vmatpush1.msra.mxu0 %v1219
        %1236 = vmatprep.subr.mxu0 0.0
        %1237 = vmatpush1.msra.mxu0 0.0
        %1238 = vmatprep.subr.mxu0 0.0
        %1239 = vmatpush1.msra.mxu0 0.0
        %1240 = vmatprep.subr.mxu0 0.0
        %1241 = vmatpush1.msra.mxu0 0.0
        %1242 = vmatprep.subr.mxu0 0.0
        %1243 = vmatpush1.msra.mxu0 0.0
        %1244 = vmatprep.subr.mxu0 0.0
        %1245 = vmatpush1.msra.mxu0 0.0
        %1246 = vmatprep.subr.mxu0 0.0
        %1247 = vmatpush1.msra.mxu0 0.0
        %1248 = vmatprep.subr.mxu0 0.0
        %1249 = vmatpush1.msra.mxu0 0.0
        %1250 = vmatprep.subr.mxu0 0.0
        %1251 = vmatpush1.msra.mxu0 0.0
        %1252 = vmatprep.subr.mxu0 0.0
        %1253 = vmatpush1.msra.mxu0 0.0
        %1254 = vmatprep.subr.mxu0 0.0
        %1255 = vmatpush1.msra.mxu0 0.0
        %1256 = vmatprep.subr.mxu0 0.0
        %1257 = vmatpush1.msra.mxu0 0.0
        %1258 = vmatprep.subr.mxu0 0.0
        %1259 = vmatpush1.msra.mxu0 0.0
        %1260 = vmatprep.subr.mxu0 0.0
        %1261 = vmatpush1.msra.mxu0 0.0
        %1262 = vmatprep.subr.mxu0 0.0
        %1263 = vmatpush1.msra.mxu0 0.0
        %1264 = vmatprep.subr.mxu0 0.0
        %1265 = vmatpush1.msra.mxu0 0.0
        %1266 = vmatprep.subr.mxu0 0.0
        %1267 = vmatpush1.msra.mxu0 0.0
        %1268 = vmatprep.subr.mxu0 0.0
        %1269 = vmatpush1.msra.mxu0 0.0
        %1270 = vmatprep.subr.mxu0 0.0
        %1271 = vmatpush1.msra.mxu0 0.0
        %1272 = vmatprep.subr.mxu0 0.0
        %1273 = vmatpush1.msra.mxu0 0.0
        %1274 = vmatprep.subr.mxu0 0.0
        %1275 = vmatpush1.msra.mxu0 0.0
        %1276 = vmatprep.subr.mxu0 0.0
        %1277 = vmatpush1.msra.mxu0 0.0
        %1278 = vmatprep.subr.mxu0 0.0
        %1279 = vmatpush1.msra.mxu0 0.0
        %1280 = vmatprep.subr.mxu0 0.0
        %1281 = vmatpush1.msra.mxu0 0.0
        %1282 = vmatprep.subr.mxu0 0.0
        %1283 = vmatpush1.msra.mxu0 0.0
        %1284 = vmatprep.subr.mxu0 0.0
        %1285 = vmatpush1.msra.mxu0 0.0
        %1286 = vmatprep.subr.mxu0 0.0
        %1287 = vmatpush1.msra.mxu0 0.0
        %1288 = vmatprep.subr.mxu0 0.0
        %1289 = vmatpush1.msra.mxu0 0.0
        %1290 = vmatprep.subr.mxu0 0.0
        %1291 = vmatpush1.msra.mxu0 0.0
        %1292 = vmatprep.mubr.f32.mxu0 0.0
        %1293 = vmatmul.mubr.f32.gmra.mrb[0].mxu0 %v651
        %v1294 = vpop.f32.mrb[0].mxu0
        %v1295 = vadd.f32 %v1226, %v1294
        %v1296 = vpop.f32.mrb[0].mxu0
        %1297 = vdwg.mxu0
        %v1299 = vsel %vm885, %v1129, 0
        %v1302 = vsel %vm885, %v1212, 0
        %1304 = vmatprep.subr.mxu0 0.0
        %1305 = vmatpush1.xpose.msra.mxu0 %v1302
        %1306 = vmatprep.subr.mxu0 0.0
        %1307 = vmatpush1.xpose.msra.mxu0 0.0
        %1308 = vmatprep.subr.mxu0 0.0
        %1309 = vmatpush1.xpose.msra.mxu0 0.0
        %1310 = vmatprep.subr.mxu0 0.0
        %1311 = vmatpush1.xpose.msra.mxu0 0.0
        %1312 = vmatprep.subr.mxu0 0.0
        %1313 = vmatpush1.xpose.msra.mxu0 0.0
        %1314 = vmatprep.subr.mxu0 0.0
        %1315 = vmatpush1.xpose.msra.mxu0 0.0
        %1316 = vmatprep.subr.mxu0 0.0
        %1317 = vmatpush1.xpose.msra.mxu0 0.0
        %1318 = vmatprep.subr.mxu0 0.0
        %1319 = vmatpush1.xpose.msra.mxu0 0.0
        %1320 = vmatprep.subr.mxu0 0.0
        %1321 = vmatpush1.xpose.msra.mxu0 0.0
        %1322 = vmatprep.subr.mxu0 0.0
        %1323 = vmatpush1.xpose.msra.mxu0 0.0
        %1324 = vmatprep.subr.mxu0 0.0
        %1325 = vmatpush1.xpose.msra.mxu0 0.0
        %1326 = vmatprep.subr.mxu0 0.0
        %1327 = vmatpush1.xpose.msra.mxu0 0.0
        %1328 = vmatprep.subr.mxu0 0.0
        %1329 = vmatpush1.xpose.msra.mxu0 0.0
        %1330 = vmatprep.subr.mxu0 0.0
        %1331 = vmatpush1.xpose.msra.mxu0 0.0
        %1332 = vmatprep.subr.mxu0 0.0
        %1333 = vmatpush1.xpose.msra.mxu0 0.0
        %1334 = vmatprep.subr.mxu0 0.0
        %1335 = vmatpush1.xpose.msra.mxu0 0.0
        %1336 = vmatprep.subr.mxu0 0.0
        %1337 = vmatpush1.xpose.msra.mxu0 0.0
        %1338 = vmatprep.subr.mxu0 0.0
        %1339 = vmatpush1.xpose.msra.mxu0 0.0
        %1340 = vmatprep.subr.mxu0 0.0
        %1341 = vmatpush1.xpose.msra.mxu0 0.0
        %1342 = vmatprep.subr.mxu0 0.0
        %1343 = vmatpush1.xpose.msra.mxu0 0.0
        %1344 = vmatprep.subr.mxu0 0.0
        %1345 = vmatpush1.xpose.msra.mxu0 0.0
        %1346 = vmatprep.subr.mxu0 0.0
        %1347 = vmatpush1.xpose.msra.mxu0 0.0
        %1348 = vmatprep.subr.mxu0 0.0
        %1349 = vmatpush1.xpose.msra.mxu0 0.0
        %1350 = vmatprep.subr.mxu0 0.0
        %1351 = vmatpush1.xpose.msra.mxu0 0.0
        %1352 = vmatprep.subr.mxu0 0.0
        %1353 = vmatpush1.xpose.msra.mxu0 0.0
        %1354 = vmatprep.subr.mxu0 0.0
        %1355 = vmatpush1.xpose.msra.mxu0 0.0
        %1356 = vmatprep.subr.mxu0 0.0
        %1357 = vmatpush1.xpose.msra.mxu0 0.0
        %1358 = vmatprep.subr.mxu0 0.0
        %1359 = vmatpush1.xpose.msra.mxu0 0.0
        %1360 = vmatprep.subr.mxu0 0.0
        %1361 = vmatpush1.xpose.msra.mxu0 0.0
        %1362 = vmatprep.subr.mxu0 0.0
        %1363 = vmatpush1.xpose.msra.mxu0 0.0
        %1364 = vmatprep.subr.mxu0 0.0
        %1365 = vmatpush1.xpose.msra.mxu0 0.0
        %1366 = vmatprep.subr.mxu0 0.0
        %1367 = vmatpush1.xpose.msra.mxu0 0.0
        %1368 = vmatprep.mubr.f32.mxu0 0.0
        %1369 = vmatmul.mubr.f32.gmra.mrb[0].mxu0 %v1299
        %v1370 = vpop.f32.mrb[0].mxu0
        %v1371 = vadd.f32 0.0, %v1370
        %v1372 = vpop.f32.mrb[0].mxu0
        %1373 = vdwg.mxu0
        %v1374 = vmul.f32 %v1371, 0.35355338
        %v1375 = vsel %vm638, -1e+30, %v1374
        %v1376 = vsel %vm885, %v1375, -inf
        %1377 = vmax.xlane.f32.xlu0 %v1376
        %v1378 = vpop.xlane.xlu0 %1377
        %v1379 = vsub.f32 %v1375, %v1378
        %v1380 = vmul.f32 %v1379, 1.442695
        %v1381 = vpow.pop %v1380
        %v1382 = vsel %vm885, %v1381, 0.0
        %1383 = vadd.xlane.f32.xlu0 %v1382
        %v1384 = vpop.xlane.xlu0 %1383
        %v1385 = vrcp.pop %v1384
        %v1386 = vmul.f32 %v1381, %v1385
        %v1388 = vsel %vm885, %v1386, 0
        %1390 = vmatprep.subr.mxu0 0.0
        %1391 = vmatpush1.msra.mxu0 %v1295
        %1392 = vmatprep.subr.mxu0 0.0
        %1393 = vmatpush1.msra.mxu0 0.0
        %1394 = vmatprep.subr.mxu0 0.0
        %1395 = vmatpush1.msra.mxu0 0.0
        %1396 = vmatprep.subr.mxu0 0.0
        %1397 = vmatpush1.msra.mxu0 0.0
        %1398 = vmatprep.subr.mxu0 0.0
        %1399 = vmatpush1.msra.mxu0 0.0
        %1400 = vmatprep.subr.mxu0 0.0
        %1401 = vmatpush1.msra.mxu0 0.0
        %1402 = vmatprep.subr.mxu0 0.0
        %1403 = vmatpush1.msra.mxu0 0.0
        %1404 = vmatprep.subr.mxu0 0.0
        %1405 = vmatpush1.msra.mxu0 0.0
        %1406 = vmatprep.subr.mxu0 0.0
        %1407 = vmatpush1.msra.mxu0 0.0
        %1408 = vmatprep.subr.mxu0 0.0
        %1409 = vmatpush1.msra.mxu0 0.0
        %1410 = vmatprep.subr.mxu0 0.0
        %1411 = vmatpush1.msra.mxu0 0.0
        %1412 = vmatprep.subr.mxu0 0.0
        %1413 = vmatpush1.msra.mxu0 0.0
        %1414 = vmatprep.subr.mxu0 0.0
        %1415 = vmatpush1.msra.mxu0 0.0
        %1416 = vmatprep.subr.mxu0 0.0
        %1417 = vmatpush1.msra.mxu0 0.0
        %1418 = vmatprep.subr.mxu0 0.0
        %1419 = vmatpush1.msra.mxu0 0.0
        %1420 = vmatprep.subr.mxu0 0.0
        %1421 = vmatpush1.msra.mxu0 0.0
        %1422 = vmatprep.subr.mxu0 0.0
        %1423 = vmatpush1.msra.mxu0 0.0
        %1424 = vmatprep.subr.mxu0 0.0
        %1425 = vmatpush1.msra.mxu0 0.0
        %1426 = vmatprep.subr.mxu0 0.0
        %1427 = vmatpush1.msra.mxu0 0.0
        %1428 = vmatprep.subr.mxu0 0.0
        %1429 = vmatpush1.msra.mxu0 0.0
        %1430 = vmatprep.subr.mxu0 0.0
        %1431 = vmatpush1.msra.mxu0 0.0
        %1432 = vmatprep.subr.mxu0 0.0
        %1433 = vmatpush1.msra.mxu0 0.0
        %1434 = vmatprep.subr.mxu0 0.0
        %1435 = vmatpush1.msra.mxu0 0.0
        %1436 = vmatprep.subr.mxu0 0.0
        %1437 = vmatpush1.msra.mxu0 0.0
        %1438 = vmatprep.subr.mxu0 0.0
        %1439 = vmatpush1.msra.mxu0 0.0
        %1440 = vmatprep.subr.mxu0 0.0
        %1441 = vmatpush1.msra.mxu0 0.0
        %1442 = vmatprep.subr.mxu0 0.0
        %1443 = vmatpush1.msra.mxu0 0.0
        %1444 = vmatprep.subr.mxu0 0.0
        %1445 = vmatpush1.msra.mxu0 0.0
        %1446 = vmatprep.subr.mxu0 0.0
        %1447 = vmatpush1.msra.mxu0 0.0
        %1448 = vmatprep.subr.mxu0 0.0
        %1449 = vmatpush1.msra.mxu0 0.0
        %1450 = vmatprep.subr.mxu0 0.0
        %1451 = vmatpush1.msra.mxu0 0.0
        %1452 = vmatprep.subr.mxu0 0.0
        %1453 = vmatpush1.msra.mxu0 0.0
        %1454 = vmatprep.mubr.f32.mxu0 0.0
        %1455 = vmatmul.mubr.f32.gmra.mrb[0].mxu0 %v1388
        %v1456 = vpop.f32.mrb[0].mxu0
        %v1457 = vadd.f32 0.0, %v1456
        %v1458 = vpop.f32.mrb[0].mxu0
        %1459 = vdwg.mxu0
        %s1460 = scalar_lea.vmem [#allocation17], 8
        %v1461 = vld [vmem:[%s1460] sm:$0xff]
        %v1463 = vsel %vm885, %v1457, 0
        %1465 = vmatprep.subr.mxu0 0.0
        %1466 = vmatpush1.msra.mxu0 %v1461
        %1467 = vmatprep.subr.mxu0 0.0
        %1468 = vmatpush1.msra.mxu0 0.0
        %1469 = vmatprep.subr.mxu0 0.0
        %1470 = vmatpush1.msra.mxu0 0.0
        %1471 = vmatprep.subr.mxu0 0.0
        %1472 = vmatpush1.msra.mxu0 0.0
        %1473 = vmatprep.subr.mxu0 0.0
        %1474 = vmatpush1.msra.mxu0 0.0
        %1475 = vmatprep.subr.mxu0 0.0
        %1476 = vmatpush1.msra.mxu0 0.0
        %1477 = vmatprep.subr.mxu0 0.0
        %1478 = vmatpush1.msra.mxu0 0.0
        %1479 = vmatprep.subr.mxu0 0.0
        %1480 = vmatpush1.msra.mxu0 0.0
        %1481 = vmatprep.subr.mxu0 0.0
        %1482 = vmatpush1.msra.mxu0 0.0
        %1483 = vmatprep.subr.mxu0 0.0
        %1484 = vmatpush1.msra.mxu0 0.0
        %1485 = vmatprep.subr.mxu0 0.0
        %1486 = vmatpush1.msra.mxu0 0.0
        %1487 = vmatprep.subr.mxu0 0.0
        %1488 = vmatpush1.msra.mxu0 0.0
        %1489 = vmatprep.subr.mxu0 0.0
        %1490 = vmatpush1.msra.mxu0 0.0
        %1491 = vmatprep.subr.mxu0 0.0
        %1492 = vmatpush1.msra.mxu0 0.0
        %1493 = vmatprep.subr.mxu0 0.0
        %1494 = vmatpush1.msra.mxu0 0.0
        %1495 = vmatprep.subr.mxu0 0.0
        %1496 = vmatpush1.msra.mxu0 0.0
        %1497 = vmatprep.subr.mxu0 0.0
        %1498 = vmatpush1.msra.mxu0 0.0
        %1499 = vmatprep.subr.mxu0 0.0
        %1500 = vmatpush1.msra.mxu0 0.0
        %1501 = vmatprep.subr.mxu0 0.0
        %1502 = vmatpush1.msra.mxu0 0.0
        %1503 = vmatprep.subr.mxu0 0.0
        %1504 = vmatpush1.msra.mxu0 0.0
        %1505 = vmatprep.subr.mxu0 0.0
        %1506 = vmatpush1.msra.mxu0 0.0
        %1507 = vmatprep.subr.mxu0 0.0
        %1508 = vmatpush1.msra.mxu0 0.0
        %1509 = vmatprep.subr.mxu0 0.0
        %1510 = vmatpush1.msra.mxu0 0.0
        %1511 = vmatprep.subr.mxu0 0.0
        %1512 = vmatpush1.msra.mxu0 0.0
        %1513 = vmatprep.subr.mxu0 0.0
        %1514 = vmatpush1.msra.mxu0 0.0
        %1515 = vmatprep.subr.mxu0 0.0
        %1516 = vmatpush1.msra.mxu0 0.0
        %1517 = vmatprep.subr.mxu0 0.0
        %1518 = vmatpush1.msra.mxu0 0.0
        %1519 = vmatprep.subr.mxu0 0.0
        %1520 = vmatpush1.msra.mxu0 0.0
        %1521 = vmatprep.subr.mxu0 0.0
        %1522 = vmatpush1.msra.mxu0 0.0
        %1523 = vmatprep.subr.mxu0 0.0
        %1524 = vmatpush1.msra.mxu0 0.0
        %1525 = vmatprep.subr.mxu0 0.0
        %1526 = vmatpush1.msra.mxu0 0.0
        %1527 = vmatprep.subr.mxu0 0.0
        %1528 = vmatpush1.msra.mxu0 0.0
        %1529 = vmatprep.mubr.f32.mxu0 0.0
        %1530 = vmatmul.mubr.f32.gmra.mrb[0].mxu0 %v1463
        %v1531 = vpop.f32.mrb[0].mxu0
        %v1532 = vadd.f32 0.0, %v1531
        %v1533 = vpop.f32.mrb[0].mxu0
        %1534 = vdwg.mxu0
        %v1536 = vsel %vm885, %v1045, 0
        %1538 = vmatprep.subr.mxu0 0.0
        %1539 = vmatpush1.msra.mxu0 %v1048
        %1540 = vmatprep.subr.mxu0 0.0
        %1541 = vmatpush1.msra.mxu0 0.0
        %1542 = vmatprep.subr.mxu0 0.0
        %1543 = vmatpush1.msra.mxu0 0.0
        %1544 = vmatprep.subr.mxu0 0.0
        %1545 = vmatpush1.msra.mxu0 0.0
        %1546 = vmatprep.subr.mxu0 0.0
        %1547 = vmatpush1.msra.mxu0 0.0
        %1548 = vmatprep.subr.mxu0 0.0
        %1549 = vmatpush1.msra.mxu0 0.0
        %1550 = vmatprep.subr.mxu0 0.0
        %1551 = vmatpush1.msra.mxu0 0.0
        %1552 = vmatprep.subr.mxu0 0.0
        %1553 = vmatpush1.msra.mxu0 0.0
        %1554 = vmatprep.subr.mxu0 0.0
        %1555 = vmatpush1.msra.mxu0 0.0
        %1556 = vmatprep.subr.mxu0 0.0
        %1557 = vmatpush1.msra.mxu0 0.0
        %1558 = vmatprep.subr.mxu0 0.0
        %1559 = vmatpush1.msra.mxu0 0.0
        %1560 = vmatprep.subr.mxu0 0.0
        %1561 = vmatpush1.msra.mxu0 0.0
        %1562 = vmatprep.subr.mxu0 0.0
        %1563 = vmatpush1.msra.mxu0 0.0
        %1564 = vmatprep.subr.mxu0 0.0
        %1565 = vmatpush1.msra.mxu0 0.0
        %1566 = vmatprep.subr.mxu0 0.0
        %1567 = vmatpush1.msra.mxu0 0.0
        %1568 = vmatprep.subr.mxu0 0.0
        %1569 = vmatpush1.msra.mxu0 0.0
        %1570 = vmatprep.subr.mxu0 0.0
        %1571 = vmatpush1.msra.mxu0 0.0
        %1572 = vmatprep.subr.mxu0 0.0
        %1573 = vmatpush1.msra.mxu0 0.0
        %1574 = vmatprep.subr.mxu0 0.0
        %1575 = vmatpush1.msra.mxu0 0.0
        %1576 = vmatprep.subr.mxu0 0.0
        %1577 = vmatpush1.msra.mxu0 0.0
        %1578 = vmatprep.subr.mxu0 0.0
        %1579 = vmatpush1.msra.mxu0 0.0
        %1580 = vmatprep.subr.mxu0 0.0
        %1581 = vmatpush1.msra.mxu0 0.0
        %1582 = vmatprep.subr.mxu0 0.0
        %1583 = vmatpush1.msra.mxu0 0.0
        %1584 = vmatprep.subr.mxu0 0.0
        %1585 = vmatpush1.msra.mxu0 0.0
        %1586 = vmatprep.subr.mxu0 0.0
        %1587 = vmatpush1.msra.mxu0 0.0
        %1588 = vmatprep.subr.mxu0 0.0
        %1589 = vmatpush1.msra.mxu0 0.0
        %1590 = vmatprep.subr.mxu0 0.0
        %1591 = vmatpush1.msra.mxu0 0.0
        %1592 = vmatprep.subr.mxu0 0.0
        %1593 = vmatpush1.msra.mxu0 0.0
        %1594 = vmatprep.subr.mxu0 0.0
        %1595 = vmatpush1.msra.mxu0 0.0
        %1596 = vmatprep.subr.mxu0 0.0
        %1597 = vmatpush1.msra.mxu0 0.0
        %1598 = vmatprep.subr.mxu0 0.0
        %1599 = vmatpush1.msra.mxu0 0.0
        %1600 = vmatprep.subr.mxu0 0.0
        %1601 = vmatpush1.msra.mxu0 0.0
        %1602 = vmatprep.mubr.f32.mxu0 0.0
        %1603 = vmatmul.mubr.f32.gmra.mrb[0].mxu0 %v1536
        %v1604 = vpop.f32.mrb[0].mxu0
        %v1605 = vadd.f32 %v1532, %v1604
        %v1606 = vpop.f32.mrb[0].mxu0
        %1607 = vdwg.mxu0
        %s1608 = scalar_lea.vmem [#allocation8], 64
        %v1609 = vld [vmem:[%s1608] sm:$0xff]
        %v1610 = vld [vmem:[%s1608 + $0x8] sm:$0xff]
        %v1611 = vld [vmem:[%s1608 + $0x10] sm:$0xff]
        %v1612 = vld [vmem:[%s1608 + $0x18] sm:$0xff]
        %s1613 = scalar_lea.vmem [#allocation10], 2
        %v1614 = vld [vmem:[%s1613] sm:$0x1]
        %v1616 = vlaneseq
        %v1617 = vshrl.u32 %v1616, 7
        %v1618 = vsub.s32 0, %v1617
        %v1619 = vrot.slane %v1614, %v1618
        %1621 = vmatprep.subr.mxu0 0.0
        %1622 = vmatpush1.msra.mxu0 %v1609
        %1623 = vmatprep.subr.mxu0 0.0
        %1624 = vmatpush1.msra.mxu0 %v1610
        %1625 = vmatprep.subr.mxu0 0.0
        %1626 = vmatpush1.msra.mxu0 %v1611
        %1627 = vmatprep.subr.mxu0 0.0
        %1628 = vmatpush1.msra.mxu0 %v1612
        %1629 = vmatprep.subr.mxu0 0.0
        %1630 = vmatpush1.msra.mxu0 0.0
        %1631 = vmatprep.subr.mxu0 0.0
        %1632 = vmatpush1.msra.mxu0 0.0
        %1633 = vmatprep.subr.mxu0 0.0
        %1634 = vmatpush1.msra.mxu0 0.0
        %1635 = vmatprep.subr.mxu0 0.0
        %1636 = vmatpush1.msra.mxu0 0.0
        %1637 = vmatprep.subr.mxu0 0.0
        %1638 = vmatpush1.msra.mxu0 0.0
        %1639 = vmatprep.subr.mxu0 0.0
        %1640 = vmatpush1.msra.mxu0 0.0
        %1641 = vmatprep.subr.mxu0 0.0
        %1642 = vmatpush1.msra.mxu0 0.0
        %1643 = vmatprep.subr.mxu0 0.0
        %1644 = vmatpush1.msra.mxu0 0.0
        %1645 = vmatprep.subr.mxu0 0.0
        %1646 = vmatpush1.msra.mxu0 0.0
        %1647 = vmatprep.subr.mxu0 0.0
        %1648 = vmatpush1.msra.mxu0 0.0
        %1649 = vmatprep.subr.mxu0 0.0
        %1650 = vmatpush1.msra.mxu0 0.0
        %1651 = vmatprep.subr.mxu0 0.0
        %1652 = vmatpush1.msra.mxu0 0.0
        %1653 = vmatprep.subr.mxu0 0.0
        %1654 = vmatpush1.msra.mxu0 0.0
        %1655 = vmatprep.subr.mxu0 0.0
        %1656 = vmatpush1.msra.mxu0 0.0
        %1657 = vmatprep.subr.mxu0 0.0
        %1658 = vmatpush1.msra.mxu0 0.0
        %1659 = vmatprep.subr.mxu0 0.0
        %1660 = vmatpush1.msra.mxu0 0.0
        %1661 = vmatprep.subr.mxu0 0.0
        %1662 = vmatpush1.msra.mxu0 0.0
        %1663 = vmatprep.subr.mxu0 0.0
        %1664 = vmatpush1.msra.mxu0 0.0
        %1665 = vmatprep.subr.mxu0 0.0
        %1666 = vmatpush1.msra.mxu0 0.0
        %1667 = vmatprep.subr.mxu0 0.0
        %1668 = vmatpush1.msra.mxu0 0.0
        %1669 = vmatprep.subr.mxu0 0.0
        %1670 = vmatpush1.msra.mxu0 0.0
        %1671 = vmatprep.subr.mxu0 0.0
        %1672 = vmatpush1.msra.mxu0 0.0
        %1673 = vmatprep.subr.mxu0 0.0
        %1674 = vmatpush1.msra.mxu0 0.0
        %1675 = vmatprep.subr.mxu0 0.0
        %1676 = vmatpush1.msra.mxu0 0.0
        %1677 = vmatprep.subr.mxu0 0.0
        %1678 = vmatpush1.msra.mxu0 0.0
        %1679 = vmatprep.subr.mxu0 0.0
        %1680 = vmatpush1.msra.mxu0 0.0
        %1681 = vmatprep.subr.mxu0 0.0
        %1682 = vmatpush1.msra.mxu0 0.0
        %1683 = vmatprep.subr.mxu0 0.0
        %1684 = vmatpush1.msra.mxu0 0.0
        %1685 = vmatprep.mubr.f32.mxu0 0.0
        %1686 = vmatmul.mubr.f32.gmra.mrb[0].mxu0 %v651
        %v1687 = vpop.f32.mrb[0].mxu0
        %v1688 = vadd.f32 %v1619, %v1687
        %v1689 = vpop.f32.mrb[0].mxu0
        %1690 = vdwg.mxu0
        %s1691 = scalar_lea.vmem [#allocation11], 64
        %v1692 = vld [vmem:[%s1691] sm:$0xff]
        %v1693 = vld [vmem:[%s1691 + $0x8] sm:$0xff]
        %v1694 = vld [vmem:[%s1691 + $0x10] sm:$0xff]
        %v1695 = vld [vmem:[%s1691 + $0x18] sm:$0xff]
        %s1696 = scalar_lea.vmem [#allocation13], 2
        %v1697 = vld [vmem:[%s1696] sm:$0x1]
        %v1699 = vlaneseq
        %v1700 = vshrl.u32 %v1699, 7
        %v1701 = vsub.s32 0, %v1700
        %v1702 = vrot.slane %v1697, %v1701
        %1704 = vmatprep.subr.mxu0 0.0
        %1705 = vmatpush1.msra.mxu0 %v1692
        %1706 = vmatprep.subr.mxu0 0.0
        %1707 = vmatpush1.msra.mxu0 %v1693
        %1708 = vmatprep.subr.mxu0 0.0
        %1709 = vmatpush1.msra.mxu0 %v1694
        %1710 = vmatprep.subr.mxu0 0.0
        %1711 = vmatpush1.msra.mxu0 %v1695
        %1712 = vmatprep.subr.mxu0 0.0
        %1713 = vmatpush1.msra.mxu0 0.0
        %1714 = vmatprep.subr.mxu0 0.0
        %1715 = vmatpush1.msra.mxu0 0.0
        %1716 = vmatprep.subr.mxu0 0.0
        %1717 = vmatpush1.msra.mxu0 0.0
        %1718 = vmatprep.subr.mxu0 0.0
        %1719 = vmatpush1.msra.mxu0 0.0
        %1720 = vmatprep.subr.mxu0 0.0
        %1721 = vmatpush1.msra.mxu0 0.0
        %1722 = vmatprep.subr.mxu0 0.0
        %1723 = vmatpush1.msra.mxu0 0.0
        %1724 = vmatprep.subr.mxu0 0.0
        %1725 = vmatpush1.msra.mxu0 0.0
        %1726 = vmatprep.subr.mxu0 0.0
        %1727 = vmatpush1.msra.mxu0 0.0
        %1728 = vmatprep.subr.mxu0 0.0
        %1729 = vmatpush1.msra.mxu0 0.0
        %1730 = vmatprep.subr.mxu0 0.0
        %1731 = vmatpush1.msra.mxu0 0.0
        %1732 = vmatprep.subr.mxu0 0.0
        %1733 = vmatpush1.msra.mxu0 0.0
        %1734 = vmatprep.subr.mxu0 0.0
        %1735 = vmatpush1.msra.mxu0 0.0
        %1736 = vmatprep.subr.mxu0 0.0
        %1737 = vmatpush1.msra.mxu0 0.0
        %1738 = vmatprep.subr.mxu0 0.0
        %1739 = vmatpush1.msra.mxu0 0.0
        %1740 = vmatprep.subr.mxu0 0.0
        %1741 = vmatpush1.msra.mxu0 0.0
        %1742 = vmatprep.subr.mxu0 0.0
        %1743 = vmatpush1.msra.mxu0 0.0
        %1744 = vmatprep.subr.mxu0 0.0
        %1745 = vmatpush1.msra.mxu0 0.0
        %1746 = vmatprep.subr.mxu0 0.0
        %1747 = vmatpush1.msra.mxu0 0.0
        %1748 = vmatprep.subr.mxu0 0.0
        %1749 = vmatpush1.msra.mxu0 0.0
        %1750 = vmatprep.subr.mxu0 0.0
        %1751 = vmatpush1.msra.mxu0 0.0
        %1752 = vmatprep.subr.mxu0 0.0
        %1753 = vmatpush1.msra.mxu0 0.0
        %1754 = vmatprep.subr.mxu0 0.0
        %1755 = vmatpush1.msra.mxu0 0.0
        %1756 = vmatprep.subr.mxu0 0.0
        %1757 = vmatpush1.msra.mxu0 0.0
        %1758 = vmatprep.subr.mxu0 0.0
        %1759 = vmatpush1.msra.mxu0 0.0
        %1760 = vmatprep.subr.mxu0 0.0
        %1761 = vmatpush1.msra.mxu0 0.0
        %1762 = vmatprep.subr.mxu0 0.0
        %1763 = vmatpush1.msra.mxu0 0.0
        %1764 = vmatprep.subr.mxu0 0.0
        %1765 = vmatpush1.msra.mxu0 0.0
        %1766 = vmatprep.subr.mxu0 0.0
        %1767 = vmatpush1.msra.mxu0 0.0
        %1768 = vmatprep.mubr.f32.mxu0 0.0
        %1769 = vmatmul.mubr.f32.gmra.mrb[0].mxu0 %v651
        %v1770 = vpop.f32.mrb[0].mxu0
        %v1771 = vadd.f32 %v1702, %v1770
        %v1772 = vpop.f32.mrb[0].mxu0
        %1773 = vdwg.mxu0
        %s1774 = scalar_lea.vmem [#allocation14], 64
        %v1775 = vld [vmem:[%s1774] sm:$0xff]
        %v1776 = vld [vmem:[%s1774 + $0x8] sm:$0xff]
        %v1777 = vld [vmem:[%s1774 + $0x10] sm:$0xff]
        %v1778 = vld [vmem:[%s1774 + $0x18] sm:$0xff]
        %s1779 = scalar_lea.vmem [#allocation16], 2
        %v1780 = vld [vmem:[%s1779] sm:$0x1]
        %v1782 = vlaneseq
        %v1783 = vshrl.u32 %v1782, 7
        %v1784 = vsub.s32 0, %v1783
        %v1785 = vrot.slane %v1780, %v1784
        %1787 = vmatprep.subr.mxu0 0.0
        %1788 = vmatpush1.msra.mxu0 %v1775
        %1789 = vmatprep.subr.mxu0 0.0
        %1790 = vmatpush1.msra.mxu0 %v1776
        %1791 = vmatprep.subr.mxu0 0.0
        %1792 = vmatpush1.msra.mxu0 %v1777
        %1793 = vmatprep.subr.mxu0 0.0
        %1794 = vmatpush1.msra.mxu0 %v1778
        %1795 = vmatprep.subr.mxu0 0.0
        %1796 = vmatpush1.msra.mxu0 0.0
        %1797 = vmatprep.subr.mxu0 0.0
        %1798 = vmatpush1.msra.mxu0 0.0
        %1799 = vmatprep.subr.mxu0 0.0
        %1800 = vmatpush1.msra.mxu0 0.0
        %1801 = vmatprep.subr.mxu0 0.0
        %1802 = vmatpush1.msra.mxu0 0.0
        %1803 = vmatprep.subr.mxu0 0.0
        %1804 = vmatpush1.msra.mxu0 0.0
        %1805 = vmatprep.subr.mxu0 0.0
        %1806 = vmatpush1.msra.mxu0 0.0
        %1807 = vmatprep.subr.mxu0 0.0
        %1808 = vmatpush1.msra.mxu0 0.0
        %1809 = vmatprep.subr.mxu0 0.0
        %1810 = vmatpush1.msra.mxu0 0.0
        %1811 = vmatprep.subr.mxu0 0.0
        %1812 = vmatpush1.msra.mxu0 0.0
        %1813 = vmatprep.subr.mxu0 0.0
        %1814 = vmatpush1.msra.mxu0 0.0
        %1815 = vmatprep.subr.mxu0 0.0
        %1816 = vmatpush1.msra.mxu0 0.0
        %1817 = vmatprep.subr.mxu0 0.0
        %1818 = vmatpush1.msra.mxu0 0.0
        %1819 = vmatprep.subr.mxu0 0.0
        %1820 = vmatpush1.msra.mxu0 0.0
        %1821 = vmatprep.subr.mxu0 0.0
        %1822 = vmatpush1.msra.mxu0 0.0
        %1823 = vmatprep.subr.mxu0 0.0
        %1824 = vmatpush1.msra.mxu0 0.0
        %1825 = vmatprep.subr.mxu0 0.0
        %1826 = vmatpush1.msra.mxu0 0.0
        %1827 = vmatprep.subr.mxu0 0.0
        %1828 = vmatpush1.msra.mxu0 0.0
        %1829 = vmatprep.subr.mxu0 0.0
        %1830 = vmatpush1.msra.mxu0 0.0
        %1831 = vmatprep.subr.mxu0 0.0
        %1832 = vmatpush1.msra.mxu0 0.0
        %1833 = vmatprep.subr.mxu0 0.0
        %1834 = vmatpush1.msra.mxu0 0.0
        %1835 = vmatprep.subr.mxu0 0.0
        %1836 = vmatpush1.msra.mxu0 0.0
        %1837 = vmatprep.subr.mxu0 0.0
        %1838 = vmatpush1.msra.mxu0 0.0
        %1839 = vmatprep.subr.mxu0 0.0
        %1840 = vmatpush1.msra.mxu0 0.0
        %1841 = vmatprep.subr.mxu0 0.0
        %1842 = vmatpush1.msra.mxu0 0.0
        %1843 = vmatprep.subr.mxu0 0.0
        %1844 = vmatpush1.msra.mxu0 0.0
        %1845 = vmatprep.subr.mxu0 0.0
        %1846 = vmatpush1.msra.mxu0 0.0
        %1847 = vmatprep.subr.mxu0 0.0
        %1848 = vmatpush1.msra.mxu0 0.0
        %1849 = vmatprep.subr.mxu0 0.0
        %1850 = vmatpush1.msra.mxu0 0.0
        %1851 = vmatprep.mubr.f32.mxu0 0.0
        %1852 = vmatmul.mubr.f32.gmra.mrb[0].mxu0 %v651
        %v1853 = vpop.f32.mrb[0].mxu0
        %v1854 = vadd.f32 %v1785, %v1853
        %v1855 = vpop.f32.mrb[0].mxu0
        %1856 = vdwg.mxu0
        %v1858 = vsel %vm885, %v1688, 0
        %v1861 = vsel %vm885, %v1771, 0
        %1863 = vmatprep.subr.mxu0 0.0
        %1864 = vmatpush1.xpose.msra.mxu0 %v1861
        %1865 = vmatprep.subr.mxu0 0.0
        %1866 = vmatpush1.xpose.msra.mxu0 0.0
        %1867 = vmatprep.subr.mxu0 0.0
        %1868 = vmatpush1.xpose.msra.mxu0 0.0
        %1869 = vmatprep.subr.mxu0 0.0
        %1870 = vmatpush1.xpose.msra.mxu0 0.0
        %1871 = vmatprep.subr.mxu0 0.0
        %1872 = vmatpush1.xpose.msra.mxu0 0.0
        %1873 = vmatprep.subr.mxu0 0.0
        %1874 = vmatpush1.xpose.msra.mxu0 0.0
        %1875 = vmatprep.subr.mxu0 0.0
        %1876 = vmatpush1.xpose.msra.mxu0 0.0
        %1877 = vmatprep.subr.mxu0 0.0
        %1878 = vmatpush1.xpose.msra.mxu0 0.0
        %1879 = vmatprep.subr.mxu0 0.0
        %1880 = vmatpush1.xpose.msra.mxu0 0.0
        %1881 = vmatprep.subr.mxu0 0.0
        %1882 = vmatpush1.xpose.msra.mxu0 0.0
        %1883 = vmatprep.subr.mxu0 0.0
        %1884 = vmatpush1.xpose.msra.mxu0 0.0
        %1885 = vmatprep.subr.mxu0 0.0
        %1886 = vmatpush1.xpose.msra.mxu0 0.0
        %1887 = vmatprep.subr.mxu0 0.0
        %1888 = vmatpush1.xpose.msra.mxu0 0.0
        %1889 = vmatprep.subr.mxu0 0.0
        %1890 = vmatpush1.xpose.msra.mxu0 0.0
        %1891 = vmatprep.subr.mxu0 0.0
        %1892 = vmatpush1.xpose.msra.mxu0 0.0
        %1893 = vmatprep.subr.mxu0 0.0
        %1894 = vmatpush1.xpose.msra.mxu0 0.0
        %1895 = vmatprep.subr.mxu0 0.0
        %1896 = vmatpush1.xpose.msra.mxu0 0.0
        %1897 = vmatprep.subr.mxu0 0.0
        %1898 = vmatpush1.xpose.msra.mxu0 0.0
        %1899 = vmatprep.subr.mxu0 0.0
        %1900 = vmatpush1.xpose.msra.mxu0 0.0
        %1901 = vmatprep.subr.mxu0 0.0
        %1902 = vmatpush1.xpose.msra.mxu0 0.0
        %1903 = vmatprep.subr.mxu0 0.0
        %1904 = vmatpush1.xpose.msra.mxu0 0.0
        %1905 = vmatprep.subr.mxu0 0.0
        %1906 = vmatpush1.xpose.msra.mxu0 0.0
        %1907 = vmatprep.subr.mxu0 0.0
        %1908 = vmatpush1.xpose.msra.mxu0 0.0
        %1909 = vmatprep.subr.mxu0 0.0
        %1910 = vmatpush1.xpose.msra.mxu0 0.0
        %1911 = vmatprep.subr.mxu0 0.0
        %1912 = vmatpush1.xpose.msra.mxu0 0.0
        %1913 = vmatprep.subr.mxu0 0.0
        %1914 = vmatpush1.xpose.msra.mxu0 0.0
        %1915 = vmatprep.subr.mxu0 0.0
        %1916 = vmatpush1.xpose.msra.mxu0 0.0
        %1917 = vmatprep.subr.mxu0 0.0
        %1918 = vmatpush1.xpose.msra.mxu0 0.0
        %1919 = vmatprep.subr.mxu0 0.0
        %1920 = vmatpush1.xpose.msra.mxu0 0.0
        %1921 = vmatprep.subr.mxu0 0.0
        %1922 = vmatpush1.xpose.msra.mxu0 0.0
        %1923 = vmatprep.subr.mxu0 0.0
        %1924 = vmatpush1.xpose.msra.mxu0 0.0
        %1925 = vmatprep.subr.mxu0 0.0
        %1926 = vmatpush1.xpose.msra.mxu0 0.0
        %1927 = vmatprep.mubr.f32.mxu0 0.0
        %1928 = vmatmul.mubr.f32.gmra.mrb[0].mxu0 %v1858
        %v1929 = vpop.f32.mrb[0].mxu0
        %v1930 = vadd.f32 0.0, %v1929
        %v1931 = vpop.f32.mrb[0].mxu0
        %1932 = vdwg.mxu0
        %v1933 = vmul.f32 %v1930, 0.35355338
        %v1934 = vsel %vm638, -1e+30, %v1933
        %v1935 = vsel %vm885, %v1934, -inf
        %1936 = vmax.xlane.f32.xlu0 %v1935
        %v1937 = vpop.xlane.xlu0 %1936
        %v1938 = vsub.f32 %v1934, %v1937
        %v1939 = vmul.f32 %v1938, 1.442695
        %v1940 = vpow.pop %v1939
        %v1941 = vsel %vm885, %v1940, 0.0
        %1942 = vadd.xlane.f32.xlu0 %v1941
        %v1943 = vpop.xlane.xlu0 %1942
        %v1944 = vrcp.pop %v1943
        %v1945 = vmul.f32 %v1940, %v1944
        %v1947 = vsel %vm885, %v1945, 0
        %1949 = vmatprep.subr.mxu0 0.0
        %1950 = vmatpush1.msra.mxu0 %v1854
        %1951 = vmatprep.subr.mxu0 0.0
        %1952 = vmatpush1.msra.mxu0 0.0
        %1953 = vmatprep.subr.mxu0 0.0
        %1954 = vmatpush1.msra.mxu0 0.0
        %1955 = vmatprep.subr.mxu0 0.0
        %1956 = vmatpush1.msra.mxu0 0.0
        %1957 = vmatprep.subr.mxu0 0.0
        %1958 = vmatpush1.msra.mxu0 0.0
        %1959 = vmatprep.subr.mxu0 0.0
        %1960 = vmatpush1.msra.mxu0 0.0
        %1961 = vmatprep.subr.mxu0 0.0
        %1962 = vmatpush1.msra.mxu0 0.0
        %1963 = vmatprep.subr.mxu0 0.0
        %1964 = vmatpush1.msra.mxu0 0.0
        %1965 = vmatprep.subr.mxu0 0.0
        %1966 = vmatpush1.msra.mxu0 0.0
        %1967 = vmatprep.subr.mxu0 0.0
        %1968 = vmatpush1.msra.mxu0 0.0
        %1969 = vmatprep.subr.mxu0 0.0
        %1970 = vmatpush1.msra.mxu0 0.0
        %1971 = vmatprep.subr.mxu0 0.0
        %1972 = vmatpush1.msra.mxu0 0.0
        %1973 = vmatprep.subr.mxu0 0.0
        %1974 = vmatpush1.msra.mxu0 0.0
        %1975 = vmatprep.subr.mxu0 0.0
        %1976 = vmatpush1.msra.mxu0 0.0
        %1977 = vmatprep.subr.mxu0 0.0
        %1978 = vmatpush1.msra.mxu0 0.0
        %1979 = vmatprep.subr.mxu0 0.0
        %1980 = vmatpush1.msra.mxu0 0.0
        %1981 = vmatprep.subr.mxu0 0.0
        %1982 = vmatpush1.msra.mxu0 0.0
        %1983 = vmatprep.subr.mxu0 0.0
        %1984 = vmatpush1.msra.mxu0 0.0
        %1985 = vmatprep.subr.mxu0 0.0
        %1986 = vmatpush1.msra.mxu0 0.0
        %1987 = vmatprep.subr.mxu0 0.0
        %1988 = vmatpush1.msra.mxu0 0.0
        %1989 = vmatprep.subr.mxu0 0.0
        %1990 = vmatpush1.msra.mxu0 0.0
        %1991 = vmatprep.subr.mxu0 0.0
        %1992 = vmatpush1.msra.mxu0 0.0
        %1993 = vmatprep.subr.mxu0 0.0
        %1994 = vmatpush1.msra.mxu0 0.0
        %1995 = vmatprep.subr.mxu0 0.0
        %1996 = vmatpush1.msra.mxu0 0.0
        %1997 = vmatprep.subr.mxu0 0.0
        %1998 = vmatpush1.msra.mxu0 0.0
        %1999 = vmatprep.subr.mxu0 0.0
        %2000 = vmatpush1.msra.mxu0 0.0
        %2001 = vmatprep.subr.mxu0 0.0
        %2002 = vmatpush1.msra.mxu0 0.0
        %2003 = vmatprep.subr.mxu0 0.0
        %2004 = vmatpush1.msra.mxu0 0.0
        %2005 = vmatprep.subr.mxu0 0.0
        %2006 = vmatpush1.msra.mxu0 0.0
        %2007 = vmatprep.subr.mxu0 0.0
        %2008 = vmatpush1.msra.mxu0 0.0
        %2009 = vmatprep.subr.mxu0 0.0
        %2010 = vmatpush1.msra.mxu0 0.0
        %2011 = vmatprep.subr.mxu0 0.0
        %2012 = vmatpush1.msra.mxu0 0.0
        %2013 = vmatprep.mubr.f32.mxu0 0.0
        %2014 = vmatmul.mubr.f32.gmra.mrb[0].mxu0 %v1947
        %v2015 = vpop.f32.mrb[0].mxu0
        %v2016 = vadd.f32 0.0, %v2015
        %v2017 = vpop.f32.mrb[0].mxu0
        %2018 = vdwg.mxu0
        %s2019 = scalar_lea.vmem [#allocation17], 16
        %v2020 = vld [vmem:[%s2019] sm:$0xff]
        %v2022 = vsel %vm885, %v2016, 0
        %2024 = vmatprep.subr.mxu0 0.0
        %2025 = vmatpush1.msra.mxu0 %v2020
        %2026 = vmatprep.subr.mxu0 0.0
        %2027 = vmatpush1.msra.mxu0 0.0
        %2028 = vmatprep.subr.mxu0 0.0
        %2029 = vmatpush1.msra.mxu0 0.0
        %2030 = vmatprep.subr.mxu0 0.0
        %2031 = vmatpush1.msra.mxu0 0.0
        %2032 = vmatprep.subr.mxu0 0.0
        %2033 = vmatpush1.msra.mxu0 0.0
        %2034 = vmatprep.subr.mxu0 0.0
        %2035 = vmatpush1.msra.mxu0 0.0
        %2036 = vmatprep.subr.mxu0 0.0
        %2037 = vmatpush1.msra.mxu0 0.0
        %2038 = vmatprep.subr.mxu0 0.0
        %2039 = vmatpush1.msra.mxu0 0.0
        %2040 = vmatprep.subr.mxu0 0.0
        %2041 = vmatpush1.msra.mxu0 0.0
        %2042 = vmatprep.subr.mxu0 0.0
        %2043 = vmatpush1.msra.mxu0 0.0
        %2044 = vmatprep.subr.mxu0 0.0
        %2045 = vmatpush1.msra.mxu0 0.0
        %2046 = vmatprep.subr.mxu0 0.0
        %2047 = vmatpush1.msra.mxu0 0.0
        %2048 = vmatprep.subr.mxu0 0.0
        %2049 = vmatpush1.msra.mxu0 0.0
        %2050 = vmatprep.subr.mxu0 0.0
        %2051 = vmatpush1.msra.mxu0 0.0
        %2052 = vmatprep.subr.mxu0 0.0
        %2053 = vmatpush1.msra.mxu0 0.0
        %2054 = vmatprep.subr.mxu0 0.0
        %2055 = vmatpush1.msra.mxu0 0.0
        %2056 = vmatprep.subr.mxu0 0.0
        %2057 = vmatpush1.msra.mxu0 0.0
        %2058 = vmatprep.subr.mxu0 0.0
        %2059 = vmatpush1.msra.mxu0 0.0
        %2060 = vmatprep.subr.mxu0 0.0
        %2061 = vmatpush1.msra.mxu0 0.0
        %2062 = vmatprep.subr.mxu0 0.0
        %2063 = vmatpush1.msra.mxu0 0.0
        %2064 = vmatprep.subr.mxu0 0.0
        %2065 = vmatpush1.msra.mxu0 0.0
        %2066 = vmatprep.subr.mxu0 0.0
        %2067 = vmatpush1.msra.mxu0 0.0
        %2068 = vmatprep.subr.mxu0 0.0
        %2069 = vmatpush1.msra.mxu0 0.0
        %2070 = vmatprep.subr.mxu0 0.0
        %2071 = vmatpush1.msra.mxu0 0.0
        %2072 = vmatprep.subr.mxu0 0.0
        %2073 = vmatpush1.msra.mxu0 0.0
        %2074 = vmatprep.subr.mxu0 0.0
        %2075 = vmatpush1.msra.mxu0 0.0
        %2076 = vmatprep.subr.mxu0 0.0
        %2077 = vmatpush1.msra.mxu0 0.0
        %2078 = vmatprep.subr.mxu0 0.0
        %2079 = vmatpush1.msra.mxu0 0.0
        %2080 = vmatprep.subr.mxu0 0.0
        %2081 = vmatpush1.msra.mxu0 0.0
        %2082 = vmatprep.subr.mxu0 0.0
        %2083 = vmatpush1.msra.mxu0 0.0
        %2084 = vmatprep.subr.mxu0 0.0
        %2085 = vmatpush1.msra.mxu0 0.0
        %2086 = vmatprep.subr.mxu0 0.0
        %2087 = vmatpush1.msra.mxu0 0.0
        %2088 = vmatprep.mubr.f32.mxu0 0.0
        %2089 = vmatmul.mubr.f32.gmra.mrb[0].mxu0 %v2022
        %v2090 = vpop.f32.mrb[0].mxu0
        %v2091 = vadd.f32 0.0, %v2090
        %v2092 = vpop.f32.mrb[0].mxu0
        %2093 = vdwg.mxu0
        %v2094 = vadd.f32 %v1605, %v2091
        %s2095 = scalar_lea.vmem [#allocation8], 96
        %v2096 = vld [vmem:[%s2095] sm:$0xff]
        %v2097 = vld [vmem:[%s2095 + $0x8] sm:$0xff]
        %v2098 = vld [vmem:[%s2095 + $0x10] sm:$0xff]
        %v2099 = vld [vmem:[%s2095 + $0x18] sm:$0xff]
        %s2100 = scalar_lea.vmem [#allocation10], 3
        %v2101 = vld [vmem:[%s2100] sm:$0x1]
        %v2103 = vlaneseq
        %v2104 = vshrl.u32 %v2103, 7
        %v2105 = vsub.s32 0, %v2104
        %v2106 = vrot.slane %v2101, %v2105
        %2108 = vmatprep.subr.mxu0 0.0
        %2109 = vmatpush1.msra.mxu0 %v2096
        %2110 = vmatprep.subr.mxu0 0.0
        %2111 = vmatpush1.msra.mxu0 %v2097
        %2112 = vmatprep.subr.mxu0 0.0
        %2113 = vmatpush1.msra.mxu0 %v2098
        %2114 = vmatprep.subr.mxu0 0.0
        %2115 = vmatpush1.msra.mxu0 %v2099
        %2116 = vmatprep.subr.mxu0 0.0
        %2117 = vmatpush1.msra.mxu0 0.0
        %2118 = vmatprep.subr.mxu0 0.0
        %2119 = vmatpush1.msra.mxu0 0.0
        %2120 = vmatprep.subr.mxu0 0.0
        %2121 = vmatpush1.msra.mxu0 0.0
        %2122 = vmatprep.subr.mxu0 0.0
        %2123 = vmatpush1.msra.mxu0 0.0
        %2124 = vmatprep.subr.mxu0 0.0
        %2125 = vmatpush1.msra.mxu0 0.0
        %2126 = vmatprep.subr.mxu0 0.0
        %2127 = vmatpush1.msra.mxu0 0.0
        %2128 = vmatprep.subr.mxu0 0.0
        %2129 = vmatpush1.msra.mxu0 0.0
        %2130 = vmatprep.subr.mxu0 0.0
        %2131 = vmatpush1.msra.mxu0 0.0
        %2132 = vmatprep.subr.mxu0 0.0
        %2133 = vmatpush1.msra.mxu0 0.0
        %2134 = vmatprep.subr.mxu0 0.0
        %2135 = vmatpush1.msra.mxu0 0.0
        %2136 = vmatprep.subr.mxu0 0.0
        %2137 = vmatpush1.msra.mxu0 0.0
        %2138 = vmatprep.subr.mxu0 0.0
        %2139 = vmatpush1.msra.mxu0 0.0
        %2140 = vmatprep.subr.mxu0 0.0
        %2141 = vmatpush1.msra.mxu0 0.0
        %2142 = vmatprep.subr.mxu0 0.0
        %2143 = vmatpush1.msra.mxu0 0.0
        %2144 = vmatprep.subr.mxu0 0.0
        %2145 = vmatpush1.msra.mxu0 0.0
        %2146 = vmatprep.subr.mxu0 0.0
        %2147 = vmatpush1.msra.mxu0 0.0
        %2148 = vmatprep.subr.mxu0 0.0
        %2149 = vmatpush1.msra.mxu0 0.0
        %2150 = vmatprep.subr.mxu0 0.0
        %2151 = vmatpush1.msra.mxu0 0.0
        %2152 = vmatprep.subr.mxu0 0.0
        %2153 = vmatpush1.msra.mxu0 0.0
        %2154 = vmatprep.subr.mxu0 0.0
        %2155 = vmatpush1.msra.mxu0 0.0
        %2156 = vmatprep.subr.mxu0 0.0
        %2157 = vmatpush1.msra.mxu0 0.0
        %2158 = vmatprep.subr.mxu0 0.0
        %2159 = vmatpush1.msra.mxu0 0.0
        %2160 = vmatprep.subr.mxu0 0.0
        %2161 = vmatpush1.msra.mxu0 0.0
        %2162 = vmatprep.subr.mxu0 0.0
        %2163 = vmatpush1.msra.mxu0 0.0
        %2164 = vmatprep.subr.mxu0 0.0
        %2165 = vmatpush1.msra.mxu0 0.0
        %2166 = vmatprep.subr.mxu0 0.0
        %2167 = vmatpush1.msra.mxu0 0.0
        %2168 = vmatprep.subr.mxu0 0.0
        %2169 = vmatpush1.msra.mxu0 0.0
        %2170 = vmatprep.subr.mxu0 0.0
        %2171 = vmatpush1.msra.mxu0 0.0
        %2172 = vmatprep.mubr.f32.mxu0 0.0
        %2173 = vmatmul.mubr.f32.gmra.mrb[0].mxu0 %v651
        %v2174 = vpop.f32.mrb[0].mxu0
        %v2175 = vadd.f32 %v2106, %v2174
        %v2176 = vpop.f32.mrb[0].mxu0
        %2177 = vdwg.mxu0
        %s2178 = scalar_lea.vmem [#allocation11], 96
        %v2179 = vld [vmem:[%s2178] sm:$0xff]
        %v2180 = vld [vmem:[%s2178 + $0x8] sm:$0xff]
        %v2181 = vld [vmem:[%s2178 + $0x10] sm:$0xff]
        %v2182 = vld [vmem:[%s2178 + $0x18] sm:$0xff]
        %s2183 = scalar_lea.vmem [#allocation13], 3
        %v2184 = vld [vmem:[%s2183] sm:$0x1]
        %v2186 = vlaneseq
        %v2187 = vshrl.u32 %v2186, 7
        %v2188 = vsub.s32 0, %v2187
        %v2189 = vrot.slane %v2184, %v2188
        %2191 = vmatprep.subr.mxu0 0.0
        %2192 = vmatpush1.msra.mxu0 %v2179
        %2193 = vmatprep.subr.mxu0 0.0
        %2194 = vmatpush1.msra.mxu0 %v2180
        %2195 = vmatprep.subr.mxu0 0.0
        %2196 = vmatpush1.msra.mxu0 %v2181
        %2197 = vmatprep.subr.mxu0 0.0
        %2198 = vmatpush1.msra.mxu0 %v2182
        %2199 = vmatprep.subr.mxu0 0.0
        %2200 = vmatpush1.msra.mxu0 0.0
        %2201 = vmatprep.subr.mxu0 0.0
        %2202 = vmatpush1.msra.mxu0 0.0
        %2203 = vmatprep.subr.mxu0 0.0
        %2204 = vmatpush1.msra.mxu0 0.0
        %2205 = vmatprep.subr.mxu0 0.0
        %2206 = vmatpush1.msra.mxu0 0.0
        %2207 = vmatprep.subr.mxu0 0.0
        %2208 = vmatpush1.msra.mxu0 0.0
        %2209 = vmatprep.subr.mxu0 0.0
        %2210 = vmatpush1.msra.mxu0 0.0
        %2211 = vmatprep.subr.mxu0 0.0
        %2212 = vmatpush1.msra.mxu0 0.0
        %2213 = vmatprep.subr.mxu0 0.0
        %2214 = vmatpush1.msra.mxu0 0.0
        %2215 = vmatprep.subr.mxu0 0.0
        %2216 = vmatpush1.msra.mxu0 0.0
        %2217 = vmatprep.subr.mxu0 0.0
        %2218 = vmatpush1.msra.mxu0 0.0
        %2219 = vmatprep.subr.mxu0 0.0
        %2220 = vmatpush1.msra.mxu0 0.0
        %2221 = vmatprep.subr.mxu0 0.0
        %2222 = vmatpush1.msra.mxu0 0.0
        %2223 = vmatprep.subr.mxu0 0.0
        %2224 = vmatpush1.msra.mxu0 0.0
        %2225 = vmatprep.subr.mxu0 0.0
        %2226 = vmatpush1.msra.mxu0 0.0
        %2227 = vmatprep.subr.mxu0 0.0
        %2228 = vmatpush1.msra.mxu0 0.0
        %2229 = vmatprep.subr.mxu0 0.0
        %2230 = vmatpush1.msra.mxu0 0.0
        %2231 = vmatprep.subr.mxu0 0.0
        %2232 = vmatpush1.msra.mxu0 0.0
        %2233 = vmatprep.subr.mxu0 0.0
        %2234 = vmatpush1.msra.mxu0 0.0
        %2235 = vmatprep.subr.mxu0 0.0
        %2236 = vmatpush1.msra.mxu0 0.0
        %2237 = vmatprep.subr.mxu0 0.0
        %2238 = vmatpush1.msra.mxu0 0.0
        %2239 = vmatprep.subr.mxu0 0.0
        %2240 = vmatpush1.msra.mxu0 0.0
        %2241 = vmatprep.subr.mxu0 0.0
        %2242 = vmatpush1.msra.mxu0 0.0
        %2243 = vmatprep.subr.mxu0 0.0
        %2244 = vmatpush1.msra.mxu0 0.0
        %2245 = vmatprep.subr.mxu0 0.0
        %2246 = vmatpush1.msra.mxu0 0.0
        %2247 = vmatprep.subr.mxu0 0.0
        %2248 = vmatpush1.msra.mxu0 0.0
        %2249 = vmatprep.subr.mxu0 0.0
        %2250 = vmatpush1.msra.mxu0 0.0
        %2251 = vmatprep.subr.mxu0 0.0
        %2252 = vmatpush1.msra.mxu0 0.0
        %2253 = vmatprep.subr.mxu0 0.0
        %2254 = vmatpush1.msra.mxu0 0.0
        %2255 = vmatprep.mubr.f32.mxu0 0.0
        %2256 = vmatmul.mubr.f32.gmra.mrb[0].mxu0 %v651
        %v2257 = vpop.f32.mrb[0].mxu0
        %v2258 = vadd.f32 %v2189, %v2257
        %v2259 = vpop.f32.mrb[0].mxu0
        %2260 = vdwg.mxu0
        %s2261 = scalar_lea.vmem [#allocation14], 96
        %v2262 = vld [vmem:[%s2261] sm:$0xff]
        %v2263 = vld [vmem:[%s2261 + $0x8] sm:$0xff]
        %v2264 = vld [vmem:[%s2261 + $0x10] sm:$0xff]
        %v2265 = vld [vmem:[%s2261 + $0x18] sm:$0xff]
        %s2266 = scalar_lea.vmem [#allocation16], 3
        %v2267 = vld [vmem:[%s2266] sm:$0x1]
        %v2269 = vlaneseq
        %v2270 = vshrl.u32 %v2269, 7
        %v2271 = vsub.s32 0, %v2270
        %v2272 = vrot.slane %v2267, %v2271
        %2274 = vmatprep.subr.mxu0 0.0
        %2275 = vmatpush1.msra.mxu0 %v2262
        %2276 = vmatprep.subr.mxu0 0.0
        %2277 = vmatpush1.msra.mxu0 %v2263
        %2278 = vmatprep.subr.mxu0 0.0
        %2279 = vmatpush1.msra.mxu0 %v2264
        %2280 = vmatprep.subr.mxu0 0.0
        %2281 = vmatpush1.msra.mxu0 %v2265
        %2282 = vmatprep.subr.mxu0 0.0
        %2283 = vmatpush1.msra.mxu0 0.0
        %2284 = vmatprep.subr.mxu0 0.0
        %2285 = vmatpush1.msra.mxu0 0.0
        %2286 = vmatprep.subr.mxu0 0.0
        %2287 = vmatpush1.msra.mxu0 0.0
        %2288 = vmatprep.subr.mxu0 0.0
        %2289 = vmatpush1.msra.mxu0 0.0
        %2290 = vmatprep.subr.mxu0 0.0
        %2291 = vmatpush1.msra.mxu0 0.0
        %2292 = vmatprep.subr.mxu0 0.0
        %2293 = vmatpush1.msra.mxu0 0.0
        %2294 = vmatprep.subr.mxu0 0.0
        %2295 = vmatpush1.msra.mxu0 0.0
        %2296 = vmatprep.subr.mxu0 0.0
        %2297 = vmatpush1.msra.mxu0 0.0
        %2298 = vmatprep.subr.mxu0 0.0
        %2299 = vmatpush1.msra.mxu0 0.0
        %2300 = vmatprep.subr.mxu0 0.0
        %2301 = vmatpush1.msra.mxu0 0.0
        %2302 = vmatprep.subr.mxu0 0.0
        %2303 = vmatpush1.msra.mxu0 0.0
        %2304 = vmatprep.subr.mxu0 0.0
        %2305 = vmatpush1.msra.mxu0 0.0
        %2306 = vmatprep.subr.mxu0 0.0
        %2307 = vmatpush1.msra.mxu0 0.0
        %2308 = vmatprep.subr.mxu0 0.0
        %2309 = vmatpush1.msra.mxu0 0.0
        %2310 = vmatprep.subr.mxu0 0.0
        %2311 = vmatpush1.msra.mxu0 0.0
        %2312 = vmatprep.subr.mxu0 0.0
        %2313 = vmatpush1.msra.mxu0 0.0
        %2314 = vmatprep.subr.mxu0 0.0
        %2315 = vmatpush1.msra.mxu0 0.0
        %2316 = vmatprep.subr.mxu0 0.0
        %2317 = vmatpush1.msra.mxu0 0.0
        %2318 = vmatprep.subr.mxu0 0.0
        %2319 = vmatpush1.msra.mxu0 0.0
        %2320 = vmatprep.subr.mxu0 0.0
        %2321 = vmatpush1.msra.mxu0 0.0
        %2322 = vmatprep.subr.mxu0 0.0
        %2323 = vmatpush1.msra.mxu0 0.0
        %2324 = vmatprep.subr.mxu0 0.0
        %2325 = vmatpush1.msra.mxu0 0.0
        %2326 = vmatprep.subr.mxu0 0.0
        %2327 = vmatpush1.msra.mxu0 0.0
        %2328 = vmatprep.subr.mxu0 0.0
        %2329 = vmatpush1.msra.mxu0 0.0
        %2330 = vmatprep.subr.mxu0 0.0
        %2331 = vmatpush1.msra.mxu0 0.0
        %2332 = vmatprep.subr.mxu0 0.0
        %2333 = vmatpush1.msra.mxu0 0.0
        %2334 = vmatprep.subr.mxu0 0.0
        %2335 = vmatpush1.msra.mxu0 0.0
        %2336 = vmatprep.subr.mxu0 0.0
        %2337 = vmatpush1.msra.mxu0 0.0
        %2338 = vmatprep.mubr.f32.mxu0 0.0
        %2339 = vmatmul.mubr.f32.gmra.mrb[0].mxu0 %v651
        %v2340 = vpop.f32.mrb[0].mxu0
        %v2341 = vadd.f32 %v2272, %v2340
        %v2342 = vpop.f32.mrb[0].mxu0
        %2343 = vdwg.mxu0
        %v2345 = vsel %vm885, %v2175, 0
        %v2348 = vsel %vm885, %v2258, 0
        %2350 = vmatprep.subr.mxu0 0.0
        %2351 = vmatpush1.xpose.msra.mxu0 %v2348
        %2352 = vmatprep.subr.mxu0 0.0
        %2353 = vmatpush1.xpose.msra.mxu0 0.0
        %2354 = vmatprep.subr.mxu0 0.0
        %2355 = vmatpush1.xpose.msra.mxu0 0.0
        %2356 = vmatprep.subr.mxu0 0.0
        %2357 = vmatpush1.xpose.msra.mxu0 0.0
        %2358 = vmatprep.subr.mxu0 0.0
        %2359 = vmatpush1.xpose.msra.mxu0 0.0
        %2360 = vmatprep.subr.mxu0 0.0
        %2361 = vmatpush1.xpose.msra.mxu0 0.0
        %2362 = vmatprep.subr.mxu0 0.0
        %2363 = vmatpush1.xpose.msra.mxu0 0.0
        %2364 = vmatprep.subr.mxu0 0.0
        %2365 = vmatpush1.xpose.msra.mxu0 0.0
        %2366 = vmatprep.subr.mxu0 0.0
        %2367 = vmatpush1.xpose.msra.mxu0 0.0
        %2368 = vmatprep.subr.mxu0 0.0
        %2369 = vmatpush1.xpose.msra.mxu0 0.0
        %2370 = vmatprep.subr.mxu0 0.0
        %2371 = vmatpush1.xpose.msra.mxu0 0.0
        %2372 = vmatprep.subr.mxu0 0.0
        %2373 = vmatpush1.xpose.msra.mxu0 0.0
        %2374 = vmatprep.subr.mxu0 0.0
        %2375 = vmatpush1.xpose.msra.mxu0 0.0
        %2376 = vmatprep.subr.mxu0 0.0
        %2377 = vmatpush1.xpose.msra.mxu0 0.0
        %2378 = vmatprep.subr.mxu0 0.0
        %2379 = vmatpush1.xpose.msra.mxu0 0.0
        %2380 = vmatprep.subr.mxu0 0.0
        %2381 = vmatpush1.xpose.msra.mxu0 0.0
        %2382 = vmatprep.subr.mxu0 0.0
        %2383 = vmatpush1.xpose.msra.mxu0 0.0
        %2384 = vmatprep.subr.mxu0 0.0
        %2385 = vmatpush1.xpose.msra.mxu0 0.0
        %2386 = vmatprep.subr.mxu0 0.0
        %2387 = vmatpush1.xpose.msra.mxu0 0.0
        %2388 = vmatprep.subr.mxu0 0.0
        %2389 = vmatpush1.xpose.msra.mxu0 0.0
        %2390 = vmatprep.subr.mxu0 0.0
        %2391 = vmatpush1.xpose.msra.mxu0 0.0
        %2392 = vmatprep.subr.mxu0 0.0
        %2393 = vmatpush1.xpose.msra.mxu0 0.0
        %2394 = vmatprep.subr.mxu0 0.0
        %2395 = vmatpush1.xpose.msra.mxu0 0.0
        %2396 = vmatprep.subr.mxu0 0.0
        %2397 = vmatpush1.xpose.msra.mxu0 0.0
        %2398 = vmatprep.subr.mxu0 0.0
        %2399 = vmatpush1.xpose.msra.mxu0 0.0
        %2400 = vmatprep.subr.mxu0 0.0
        %2401 = vmatpush1.xpose.msra.mxu0 0.0
        %2402 = vmatprep.subr.mxu0 0.0
        %2403 = vmatpush1.xpose.msra.mxu0 0.0
        %2404 = vmatprep.subr.mxu0 0.0
        %2405 = vmatpush1.xpose.msra.mxu0 0.0
        %2406 = vmatprep.subr.mxu0 0.0
        %2407 = vmatpush1.xpose.msra.mxu0 0.0
        %2408 = vmatprep.subr.mxu0 0.0
        %2409 = vmatpush1.xpose.msra.mxu0 0.0
        %2410 = vmatprep.subr.mxu0 0.0
        %2411 = vmatpush1.xpose.msra.mxu0 0.0
        %2412 = vmatprep.subr.mxu0 0.0
        %2413 = vmatpush1.xpose.msra.mxu0 0.0
        %2414 = vmatprep.mubr.f32.mxu0 0.0
        %2415 = vmatmul.mubr.f32.gmra.mrb[0].mxu0 %v2345
        %v2416 = vpop.f32.mrb[0].mxu0
        %v2417 = vadd.f32 0.0, %v2416
        %v2418 = vpop.f32.mrb[0].mxu0
        %2419 = vdwg.mxu0
        %v2420 = vmul.f32 %v2417, 0.35355338
        %v2421 = vsel %vm638, -1e+30, %v2420
        %v2422 = vsel %vm885, %v2421, -inf
        %2423 = vmax.xlane.f32.xlu0 %v2422
        %v2424 = vpop.xlane.xlu0 %2423
        %v2425 = vsub.f32 %v2421, %v2424
        %v2426 = vmul.f32 %v2425, 1.442695
        %v2427 = vpow.pop %v2426
        %v2428 = vsel %vm885, %v2427, 0.0
        %2429 = vadd.xlane.f32.xlu0 %v2428
        %v2430 = vpop.xlane.xlu0 %2429
        %v2431 = vrcp.pop %v2430
        %v2432 = vmul.f32 %v2427, %v2431
        %v2434 = vsel %vm885, %v2432, 0
        %2436 = vmatprep.subr.mxu0 0.0
        %2437 = vmatpush1.msra.mxu0 %v2341
        %2438 = vmatprep.subr.mxu0 0.0
        %2439 = vmatpush1.msra.mxu0 0.0
        %2440 = vmatprep.subr.mxu0 0.0
        %2441 = vmatpush1.msra.mxu0 0.0
        %2442 = vmatprep.subr.mxu0 0.0
        %2443 = vmatpush1.msra.mxu0 0.0
        %2444 = vmatprep.subr.mxu0 0.0
        %2445 = vmatpush1.msra.mxu0 0.0
        %2446 = vmatprep.subr.mxu0 0.0
        %2447 = vmatpush1.msra.mxu0 0.0
        %2448 = vmatprep.subr.mxu0 0.0
        %2449 = vmatpush1.msra.mxu0 0.0
        %2450 = vmatprep.subr.mxu0 0.0
        %2451 = vmatpush1.msra.mxu0 0.0
        %2452 = vmatprep.subr.mxu0 0.0
        %2453 = vmatpush1.msra.mxu0 0.0
        %2454 = vmatprep.subr.mxu0 0.0
        %2455 = vmatpush1.msra.mxu0 0.0
        %2456 = vmatprep.subr.mxu0 0.0
        %2457 = vmatpush1.msra.mxu0 0.0
        %2458 = vmatprep.subr.mxu0 0.0
        %2459 = vmatpush1.msra.mxu0 0.0
        %2460 = vmatprep.subr.mxu0 0.0
        %2461 = vmatpush1.msra.mxu0 0.0
        %2462 = vmatprep.subr.mxu0 0.0
        %2463 = vmatpush1.msra.mxu0 0.0
        %2464 = vmatprep.subr.mxu0 0.0
        %2465 = vmatpush1.msra.mxu0 0.0
        %2466 = vmatprep.subr.mxu0 0.0
        %2467 = vmatpush1.msra.mxu0 0.0
        %2468 = vmatprep.subr.mxu0 0.0
        %2469 = vmatpush1.msra.mxu0 0.0
        %2470 = vmatprep.subr.mxu0 0.0
        %2471 = vmatpush1.msra.mxu0 0.0
        %2472 = vmatprep.subr.mxu0 0.0
        %2473 = vmatpush1.msra.mxu0 0.0
        %2474 = vmatprep.subr.mxu0 0.0
        %2475 = vmatpush1.msra.mxu0 0.0
        %2476 = vmatprep.subr.mxu0 0.0
        %2477 = vmatpush1.msra.mxu0 0.0
        %2478 = vmatprep.subr.mxu0 0.0
        %2479 = vmatpush1.msra.mxu0 0.0
        %2480 = vmatprep.subr.mxu0 0.0
        %2481 = vmatpush1.msra.mxu0 0.0
        %2482 = vmatprep.subr.mxu0 0.0
        %2483 = vmatpush1.msra.mxu0 0.0
        %2484 = vmatprep.subr.mxu0 0.0
        %2485 = vmatpush1.msra.mxu0 0.0
        %2486 = vmatprep.subr.mxu0 0.0
        %2487 = vmatpush1.msra.mxu0 0.0
        %2488 = vmatprep.subr.mxu0 0.0
        %2489 = vmatpush1.msra.mxu0 0.0
        %2490 = vmatprep.subr.mxu0 0.0
        %2491 = vmatpush1.msra.mxu0 0.0
        %2492 = vmatprep.subr.mxu0 0.0
        %2493 = vmatpush1.msra.mxu0 0.0
        %2494 = vmatprep.subr.mxu0 0.0
        %2495 = vmatpush1.msra.mxu0 0.0
        %2496 = vmatprep.subr.mxu0 0.0
        %2497 = vmatpush1.msra.mxu0 0.0
        %2498 = vmatprep.subr.mxu0 0.0
        %2499 = vmatpush1.msra.mxu0 0.0
        %2500 = vmatprep.mubr.f32.mxu0 0.0
        %2501 = vmatmul.mubr.f32.gmra.mrb[0].mxu0 %v2434
        %v2502 = vpop.f32.mrb[0].mxu0
        %v2503 = vadd.f32 0.0, %v2502
        %v2504 = vpop.f32.mrb[0].mxu0
        %2505 = vdwg.mxu0
        %s2506 = scalar_lea.vmem [#allocation17], 24
        %v2507 = vld [vmem:[%s2506] sm:$0xff]
        %v2509 = vsel %vm885, %v2503, 0
        %2511 = vmatprep.subr.mxu0 0.0
        %2512 = vmatpush1.msra.mxu0 %v2507
        %2513 = vmatprep.subr.mxu0 0.0
        %2514 = vmatpush1.msra.mxu0 0.0
        %2515 = vmatprep.subr.mxu0 0.0
        %2516 = vmatpush1.msra.mxu0 0.0
        %2517 = vmatprep.subr.mxu0 0.0
        %2518 = vmatpush1.msra.mxu0 0.0
        %2519 = vmatprep.subr.mxu0 0.0
        %2520 = vmatpush1.msra.mxu0 0.0
        %2521 = vmatprep.subr.mxu0 0.0
        %2522 = vmatpush1.msra.mxu0 0.0
        %2523 = vmatprep.subr.mxu0 0.0
        %2524 = vmatpush1.msra.mxu0 0.0
        %2525 = vmatprep.subr.mxu0 0.0
        %2526 = vmatpush1.msra.mxu0 0.0
        %2527 = vmatprep.subr.mxu0 0.0
        %2528 = vmatpush1.msra.mxu0 0.0
        %2529 = vmatprep.subr.mxu0 0.0
        %2530 = vmatpush1.msra.mxu0 0.0
        %2531 = vmatprep.subr.mxu0 0.0
        %2532 = vmatpush1.msra.mxu0 0.0
        %2533 = vmatprep.subr.mxu0 0.0
        %2534 = vmatpush1.msra.mxu0 0.0
        %2535 = vmatprep.subr.mxu0 0.0
        %2536 = vmatpush1.msra.mxu0 0.0
        %2537 = vmatprep.subr.mxu0 0.0
        %2538 = vmatpush1.msra.mxu0 0.0
        %2539 = vmatprep.subr.mxu0 0.0
        %2540 = vmatpush1.msra.mxu0 0.0
        %2541 = vmatprep.subr.mxu0 0.0
        %2542 = vmatpush1.msra.mxu0 0.0
        %2543 = vmatprep.subr.mxu0 0.0
        %2544 = vmatpush1.msra.mxu0 0.0
        %2545 = vmatprep.subr.mxu0 0.0
        %2546 = vmatpush1.msra.mxu0 0.0
        %2547 = vmatprep.subr.mxu0 0.0
        %2548 = vmatpush1.msra.mxu0 0.0
        %2549 = vmatprep.subr.mxu0 0.0
        %2550 = vmatpush1.msra.mxu0 0.0
        %2551 = vmatprep.subr.mxu0 0.0
        %2552 = vmatpush1.msra.mxu0 0.0
        %2553 = vmatprep.subr.mxu0 0.0
        %2554 = vmatpush1.msra.mxu0 0.0
        %2555 = vmatprep.subr.mxu0 0.0
        %2556 = vmatpush1.msra.mxu0 0.0
        %2557 = vmatprep.subr.mxu0 0.0
        %2558 = vmatpush1.msra.mxu0 0.0
        %2559 = vmatprep.subr.mxu0 0.0
        %2560 = vmatpush1.msra.mxu0 0.0
        %2561 = vmatprep.subr.mxu0 0.0
        %2562 = vmatpush1.msra.mxu0 0.0
        %2563 = vmatprep.subr.mxu0 0.0
        %2564 = vmatpush1.msra.mxu0 0.0
        %2565 = vmatprep.subr.mxu0 0.0
        %2566 = vmatpush1.msra.mxu0 0.0
        %2567 = vmatprep.subr.mxu0 0.0
        %2568 = vmatpush1.msra.mxu0 0.0
        %2569 = vmatprep.subr.mxu0 0.0
        %2570 = vmatpush1.msra.mxu0 0.0
        %2571 = vmatprep.subr.mxu0 0.0
        %2572 = vmatpush1.msra.mxu0 0.0
        %2573 = vmatprep.subr.mxu0 0.0
        %2574 = vmatpush1.msra.mxu0 0.0
        %2575 = vmatprep.mubr.f32.mxu0 0.0
        %2576 = vmatmul.mubr.f32.gmra.mrb[0].mxu0 %v2509
        %v2577 = vpop.f32.mrb[0].mxu0
        %v2578 = vadd.f32 0.0, %v2577
        %v2579 = vpop.f32.mrb[0].mxu0
        %2580 = vdwg.mxu0
        %v2581 = vadd.f32 %v2094, %v2578
        %v2582 = vadd.f32 %v605, %v2581
        %v2583 = vld [vmem:[#allocation19] sm:$0x1]
        %v2585 = vlaneseq
        %v2586 = vshrl.u32 %v2585, 7
        %v2587 = vsub.s32 0, %v2586
        %v2588 = vrot.slane %v2583, %v2587
        %v2590 = vadd.f32 %v2582, %v2588
        %2591 = vst.msk [vmem:[%s604] sm:$0xff] %vm608, %v2590
        %s2592 = sand.u32 %s307, 1
        %s2593 = scalar_lea.sflag [#allocation4], %s2592
        %s2594 = sand.u32 %s307, 1
        %s2595 = smul.addr %s2594, 8
        %s2596 = scalar_lea.vmem [#allocation22], %s2595
        // Predicated region
        $region117: #{tpu_custom_call.1} parent=67 // pred_check
          %p2597 = pneg %p317
        $region118: #{tpu_custom_call.1} parent=67 // pred_check_branch
          %2599 = sbr.rel (%p2597) target = $region120
        $region119: #{tpu_custom_call.1} parent=67 // pred_region
          %s2601 = ssub.s32 128, 128
          %2602 = vsyncadd %s2593, %s2601
          %s2603 = smul.addr %s37, 128
          %s2604 = scalar_lea.hbm %s12, %s2603
          %s2606 = sshll.u32 %s2596, 4
          %s2607 = int_to_ptr.vmem [resolvable:$true] %s2606
          %2609 = dma.vmem_to_hbm [thread:$0]  %s2607, 128, %s2604, %s2593
        $region120: #{tpu_custom_call.1} parent=67 // pred_fallthru
          _
      $region68: #{tpu_custom_call.1} parent=5 // pred_fallthru
        _
      %p2610 = scmp.le.s32.totalorder 2, %s32
      // Predicated region
      $region121: #{tpu_custom_call.1} parent=5 // pred_check
        %p2611 = pneg %p2610
      $region122: #{tpu_custom_call.1} parent=5 // pred_check_branch
        %2613 = sbr.rel (%p2611) target = $region124
      $region123: #{tpu_custom_call.1} parent=5 // pred_region
        %s2614 = ssub.s32 %s32, 2
        // Predicated region
        $region125: #{tpu_custom_call.1} parent=123 // pred_check
          %p2615 = pneg %p323
        $region126: #{tpu_custom_call.1} parent=123 // pred_check_branch
          %2617 = sbr.rel (%p2615) target = $region128
        $region127: #{tpu_custom_call.1} parent=123 // pred_region
          %s2618 = sand.u32 %s308, 1
          %s2619 = scalar_lea.sflag [#allocation4], %s2618
          %s2620 = sand.u32 %s308, 1
          %s2621 = smul.addr %s2620, 8
          %s2622 = scalar_lea.vmem [#allocation22], %s2621
          %2623 = dma.done %s2619, 128
        $region128: #{tpu_custom_call.1} parent=123 // pred_fallthru
          _
      $region124: #{tpu_custom_call.1} parent=5 // pred_fallthru
        _
    $region6: #{tpu_custom_call.1} parent=1 // loop_footer
      %s36 = sadd.s32 1, %s32
    $region7: #{tpu_custom_call.1} parent=1 // loop_footer_branch
      %31 = sbr.rel target = $region3
    $region8: #{tpu_custom_call.1} parent=1 // loop_exit
      _
    %2624 = vsyncpa [#allocation3], 1
    %s2625 = scalar_lea.sflag [#allocation3], 1
    %2626 = vsyncpa %s2625, 1
    %2627 = vsyncpa [#allocation6], 1
    %2628 = vsyncpa [#allocation9], 1
    %2629 = vsyncpa [#allocation12], 1
    %2630 = vsyncpa [#allocation15], 1
    %2631 = vsyncpa [#allocation18], 1
    %2632 = vsyncpa [#allocation21], 1
    %s2633 = scalar_lea.sflag [#allocation21], 1
    %2634 = vsyncpa %s2633, 1
    %2635 = vsyncpa [#allocation4], 1
    %s2636 = scalar_lea.sflag [#allocation4], 1
    %2637 = vsyncpa %s2636, 1

</llo_original>
